<compile_context>
chip_gen: v5e
topology: v5e:2x2
jax: 0.10.0
libtpu: 0.0.40
codegen_flags: <defaults>
</compile_context>

<pallas_src>
import functools

import numpy as np
import jax
import jax.numpy as jnp
from jax import lax
from jax.experimental import pallas as pl
from jax.experimental.pallas import tpu as pltpu

BN_EPS = 1e-5
# Operand dtype for every MXU matmul (accumulation is always f32).
_MATMUL_DTYPE = jnp.bfloat16


# ----------------------------------------------------------------------------
# Layer geometry of the torch module (spatial path is fixed: 1 -> 2 -> ... -> 64)
# ----------------------------------------------------------------------------
def _layer_configs(image_size, z_dim, conv_dim, channels):
    repeat_num = int(np.log2(image_size)) - 3
    mult = 2 ** repeat_num
    c1 = conv_dim * mult * 2
    dims = [c1, c1 // 2, c1 // 4, c1 // 8, c1 // 16]
    # (C_in, C_out, k, stride, pad, H_in, H_out, has_bn)
    cfgs = [(z_dim, dims[0], 2, 1, 0, 1, 2, True)]
    h = 2
    for li in range(4):
        cfgs.append((dims[li], dims[li + 1], 4, 2, 1, h, 2 * h, True))
        h *= 2
    cfgs.append((dims[4], channels, 4, 2, 1, h, 2 * h, False))
    return cfgs


# ----------------------------------------------------------------------------
# The single fused Pallas kernel (whole generator forward, VMEM resident)
# ----------------------------------------------------------------------------
def _fused_generator_kernel(*refs, cfgs, batch):
    """refs = (z, C_all x6, A_cat x6, P x5, gamma x5, beta x5, out).

    Activation layout: (H, B*W*C); row = image row, column = b*(W*C) + w*C + c.
    At B=2 / channels=1 every intermediate is exactly 128 lanes wide.
    """
    n_layers = len(cfgs)
    n_bn = sum(1 for c in cfgs if c[7])

    z_ref = refs[0]
    c_refs = refs[1:1 + n_layers]
    a_refs = refs[1 + n_layers:1 + 2 * n_layers]
    p_refs = refs[1 + 2 * n_layers:1 + 2 * n_layers + n_bn]
    g_refs = refs[1 + 2 * n_layers + n_bn:1 + 2 * n_layers + 2 * n_bn]
    b_refs = refs[1 + 2 * n_layers + 2 * n_bn:1 + 2 * n_layers + 3 * n_bn]
    o_ref = refs[-1]

    x = z_ref[...].astype(_MATMUL_DTYPE)          # (1, B*z_dim) NHWC-flat latent
    bn_idx = 0
    for li, (c_in, c_out, k, s, p, h_in, h_out, has_bn) in enumerate(cfgs):
        n_cols = batch * h_out * c_out

        # (1) All k kernel-row taps (kernel-column taps + channel contraction,
        #     block-diagonal over batch) in ONE wide bf16 matmul, f32 accumulate.
        #     Columns of t_all are [ky=0 block | ky=1 block | ... ].
        t_all = jnp.dot(x, c_refs[li][...],
                        preferred_element_type=jnp.float32)        # (Hin, k*N)

        # (2) Scatter input rows -> output rows for every kernel-row tap.
        if h_in % 8 == 0:
            # Big layers: restack the lane-aligned ky blocks onto the sublane
            # axis (whole (8,128)-tile copies, off the MXU chain) and apply all
            # taps with ONE bf16 scatter matmul.
            t_stack = jnp.concatenate(
                [t_all[:, ky * n_cols:(ky + 1) * n_cols] for ky in range(k)],
                axis=0).astype(_MATMUL_DTYPE)                      # (k*Hin, N)
            acc = jnp.dot(a_refs[li][...], t_stack,
                          preferred_element_type=jnp.float32)      # (Hout, N)
        else:
            # Tiny early layers (Hin < 8): k small bf16 scatter dots; their
            # work is negligible and this avoids sub-tile sublane restacks.
            a_full = a_refs[li][...]
            acc = None
            for ky in range(k):
                part = jnp.dot(
                    a_full[:, ky * h_in:(ky + 1) * h_in],
                    t_all[:, ky * n_cols:(ky + 1) * n_cols].astype(_MATMUL_DTYPE),
                    preferred_element_type=jnp.float32)
                acc = part if acc is None else acc + part

        if has_bn:
            # BatchNorm2d training-mode biased stats over (batch, H, W), fused
            # one-pass: stack sum(x) / sum(x^2) as a (2, N) LHS and reduce over
            # (batch, W) per channel with a single bf16 dot against P.
            inv_cnt = 1.0 / float(batch * h_out * h_out)
            s1 = jnp.sum(acc, axis=0, keepdims=True)               # (1, N)
            s2 = jnp.sum(acc * acc, axis=0, keepdims=True)         # (1, N)
            row0 = lax.broadcasted_iota(jnp.int32, (2, n_cols), 0) == 0
            stats = jnp.where(row0,
                              jnp.broadcast_to(s1, (2, n_cols)),
                              jnp.broadcast_to(s2, (2, n_cols))
                              ).astype(_MATMUL_DTYPE)              # (2, N)
            red = jnp.dot(stats, p_refs[bn_idx][...],
                          preferred_element_type=jnp.float32) * inv_cnt
            mean_b = red[0:1, :]
            var_b = jnp.maximum(red[1:2, :] - mean_b * mean_b, 0.0)
            x_hat = (acc - mean_b) * lax.rsqrt(var_b + BN_EPS)
            # Emit the next layer's bf16 MXU operand directly from the ReLU.
            x = jnp.maximum(x_hat * g_refs[bn_idx][...] + b_refs[bn_idx][...],
                            0.0).astype(_MATMUL_DTYPE)
            bn_idx += 1
        else:
            # Final layer: Tanh, single lane-dense (64, B*64*C) f32 store.
            o_ref[...] = jnp.tanh(acc)


# ----------------------------------------------------------------------------
# One-time (amortized) packing of torch-layout weights into kernel constants
# ----------------------------------------------------------------------------
def _row_select_matrix(k, s, p, h_in, h_out):
    """A_cat[y, ky*Hin + i] = 1 iff y == s*i - p + ky (batch-free, bf16-exact)."""
    a = np.zeros((h_out, k * h_in), np.float32)
    for ky in range(k):
        for i in range(h_in):
            y = s * i - p + ky
            if 0 <= y < h_out:
                a[y, ky * h_in + i] = 1.0
    return jnp.asarray(a, dtype=_MATMUL_DTYPE)


def _col_weight_matrix(w, k, s, p, w_in, w_out, batch):
    """C_all[(b,j,ci), ky*N + (b',x,co)] =
           [b==b'] * sum_kx [x == s*j - p + kx] * w[ci, co, ky, kx]

    w: (C_in, C_out, k, k), torch ConvTranspose2d layout.  Per-tap blocks are
    block-diagonal over batch (batch lives on the lane axis) and hstacked over
    ky so a whole layer's column/channel contraction is one matmul.
    """
    w_np = np.asarray(w, dtype=np.float32)
    c_in, c_out = int(w_np.shape[0]), int(w_np.shape[1])
    sel = np.zeros((k, w_in, w_out), np.float32)
    for kx in range(k):
        for j in range(w_in):
            x = s * j - p + kx
            if 0 <= x < w_out:
                sel[kx, j, x] = 1.0
    cb = np.einsum("qjx,ioyq->yjixo", sel, w_np).reshape(
        k, w_in * c_in, w_out * c_out)
    eye_b = np.eye(batch, dtype=np.float32)
    c_all = np.concatenate([np.kron(eye_b, cb[ky]) for ky in range(k)], axis=1)
    return jnp.asarray(c_all, dtype=_MATMUL_DTYPE)


def build_generator_forward(params, *, batch, image_size=16, z_dim=16,
                            conv_dim=8, channels=1):
    """Packs parameters once and returns a jitted forward (z, feat) -> NCHW image
    whose hot path is a single fused Pallas kernel."""
    cfgs = _layer_configs(image_size, z_dim, conv_dim, channels)

    c_mats, a_mats, p_mats, g_bcast, b_bcast = [], [], [], [], []
    for li, (c_in, c_out, k, s, p, h_in, h_out, has_bn) in enumerate(cfgs):
        w = params[f"w{li + 1}"] if has_bn else params["w_last"]
        c_mats.append(_col_weight_matrix(w, k, s, p, h_in, h_out, batch))
        a_mats.append(_row_select_matrix(k, s, p, h_in, h_out))
        if has_bn:
            # P[(b,w,c), (b',w',c')] = [c == c'] : per-channel sum over batch+W.
            p_mats.append(jnp.asarray(
                np.kron(np.ones((batch * h_out, batch * h_out), np.float32),
                        np.eye(c_out, dtype=np.float32)),
                dtype=_MATMUL_DTYPE))
            g_bcast.append(jnp.asarray(
                np.tile(np.asarray(params[f"g{li + 1}"], np.float32),
                        batch * h_out))[None, :])
            b_bcast.append(jnp.asarray(
                np.tile(np.asarray(params[f"b{li + 1}"], np.float32),
                        batch * h_out))[None, :])

    const_inputs = (tuple(c_mats) + tuple(a_mats) + tuple(p_mats)
                    + tuple(g_bcast) + tuple(b_bcast))
    h_last = cfgs[-1][6]
    # Output slab (H, B*W*C) = (64, 128): lane-dense store, no masked vst.
    out_rows, out_cols = h_last, batch * h_last * channels

    def _full_spec(shape):
        nd = len(shape)
        return pl.BlockSpec(tuple(shape), lambda i, _nd=nd: (0,) * _nd)

    in_shapes = ([(1, batch * z_dim)]
                 + [tuple(map(int, x.shape)) for x in const_inputs])

    kernel = functools.partial(_fused_generator_kernel, cfgs=cfgs, batch=batch)
    # Resident footprint < 2 MiB (constants ~0.9 MiB bf16), far below the
    # scoped-VMEM default on v5e/v6e/v7x, so no vmem_limit override or tiling.
    fused_call = pl.pallas_call(
        kernel,
        out_shape=jax.ShapeDtypeStruct((out_rows, out_cols), jnp.float32),
        grid=(1,),
        in_specs=[_full_spec(sh) for sh in in_shapes],
        out_specs=_full_spec((out_rows, out_cols)),
        compiler_params=pltpu.CompilerParams(dimension_semantics=("arbitrary",)),
    )

    def forward(z, feat):
        # torch.matmul(z, feat[5]): broadcast matmul over the trailing two dims.
        mix_z = jnp.matmul(z, feat[5])
        z2d = mix_z.reshape(1, batch * z_dim)        # (H=1, B*W*C) latent slab
        out2d = fused_call(z2d, *const_inputs)       # (64, B*64*channels)
        out = out2d.reshape(h_last, batch, h_last, channels).transpose(1, 3, 0, 2)
        return out

    return jax.jit(forward)


# ----------------------------------------------------------------------------
# Parameter construction (torch layout) and a pure-JAX f32 reference
# ----------------------------------------------------------------------------
def init_generator_params(key, image_size=16, z_dim=16, conv_dim=8, channels=1):
    repeat_num = int(np.log2(image_size)) - 3
    mult = 2 ** repeat_num
    c1 = conv_dim * mult * 2
    dims = [c1]
    for _ in range(4):
        dims.append(dims[-1] // 2)

    keys = jax.random.split(key, 16)
    params = {}
    params["w1"] = jax.random.normal(keys[0], (z_dim, dims[0], 2, 2), jnp.float32) * 0.05
    params["g1"] = 1.0 + 0.1 * jax.random.normal(keys[1], (dims[0],), jnp.float32)
    params["b1"] = 0.1 * jax.random.normal(keys[2], (dims[0],), jnp.float32)
    for li in range(2, 6):
        cin, cout = dims[li - 2], dims[li - 1]
        params[f"w{li}"] = jax.random.normal(
            keys[3 * li - 3], (cin, cout, 4, 4), jnp.float32) * 0.05
        params[f"g{li}"] = 1.0 + 0.1 * jax.random.normal(
            keys[3 * li - 2], (cout,), jnp.float32)
        params[f"b{li}"] = 0.1 * jax.random.normal(keys[3 * li - 1], (cout,), jnp.float32)
    params["w_last"] = jax.random.normal(
        keys[15], (dims[4], channels, 4, 4), jnp.float32) * 0.05
    return params


def _conv_transpose_ref(x, w, stride, padding):
    """Reference ConvTranspose2d (bias=False), NCHW, torch weight layout."""
    b, c_in, h, w_sp = x.shape
    k = w.shape[2]
    if stride > 1:
        up = jnp.zeros((b, c_in, (h - 1) * stride + 1, (w_sp - 1) * stride + 1), x.dtype)
        up = up.at[:, :, ::stride, ::stride].set(x)
    else:
        up = x
    pad = k - 1 - padding
    up = jnp.pad(up, ((0, 0), (0, 0), (pad, pad), (pad, pad)))
    h_out = (h - 1) * stride - 2 * padding + k
    w_out = (w_sp - 1) * stride - 2 * padding + k
    w_flip = jnp.flip(w, axis=(2, 3))
    out = jnp.zeros((b, w.shape[1], h_out, w_out), jnp.float32)
    for ky in range(k):
        for kx in range(k):
            patch = up[:, :, ky:ky + h_out, kx:kx + w_out]
            out = out + jnp.einsum("bchw,cd->bdhw", patch, w_flip[:, :, ky, kx])
    return out


def _bn_relu_ref(y, gamma, beta):
    mean = jnp.mean(y, axis=(0, 2, 3), keepdims=True)
    var = jnp.mean(jnp.square(y - mean), axis=(0, 2, 3), keepdims=True)
    y_hat = (y - mean) * lax.rsqrt(var + BN_EPS)
    return jnp.maximum(y_hat * gamma[None, :, None, None] + beta[None, :, None, None], 0.0)


def generator_reference(params, z, feat):
    """Pure-JAX f32 reference with the same semantics as the torch module."""
    mix_z = jnp.matmul(z, feat[5])
    out = _bn_relu_ref(_conv_transpose_ref(mix_z, params["w1"], 1, 0),
                       params["g1"], params["b1"])
    for li in range(2, 6):
        out = _bn_relu_ref(_conv_transpose_ref(out, params[f"w{li}"], 2, 1),
                           params[f"g{li}"], params[f"b{li}"])
    return jnp.tanh(_conv_transpose_ref(out, params["w_last"], 2, 1))


# ----------------------------------------------------------------------------
if __name__ == "__main__":
    # image_size=16 -> repeat_num=1 -> channel path 32->16->8->4->2->1; the
    # spatial path of the module is fixed (1 -> 2 -> 4 -> ... -> 64).
    B, Z_DIM, CONV_DIM, IMAGE_SIZE, CHANNELS = 2, 16, 8, 16, 1

    key = jax.random.PRNGKey(0)
    k_params, k_z, k_feat = jax.random.split(key, 3)

    params = init_generator_params(k_params, image_size=IMAGE_SIZE, z_dim=Z_DIM,
                                   conv_dim=CONV_DIM, channels=CHANNELS)
    z = jax.random.normal(k_z, (B, Z_DIM, 1, 1), jnp.float32)
    feat_keys = jax.random.split(k_feat, 6)
    feat = [jax.random.normal(fk, (1, 1), jnp.float32) for fk in feat_keys]

    forward = build_generator_forward(params, batch=B, image_size=IMAGE_SIZE,
                                      z_dim=Z_DIM, conv_dim=CONV_DIM,
                                      channels=CHANNELS)
    out = jax.block_until_ready(forward(z, feat))

    assert out.shape == (B, CHANNELS, 64, 64), out.shape
    assert bool(jnp.all(jnp.isfinite(out)))

    # Cross-check the fused bf16-operand kernel against an independent f32 path.
    ref = jax.block_until_ready(generator_reference(params, z, feat))
    max_err = float(jnp.max(jnp.abs(out - ref)))
    assert max_err < 5e-2, f"max abs err vs reference: {max_err}"

    print("KERNEL_OK")
</pallas_src>

<mosaic_0001>
module attributes {stable_mosaic.version = 11 : i64} {
  func.func @_fused_generator_kernel(%arg0: i32, %arg1: memref<1x32xf32, #tpu.memory_space<vmem>>, %arg2: memref<32x256xbf16, #tpu.memory_space<vmem>>, %arg3: memref<128x512xbf16, #tpu.memory_space<vmem>>, %arg4: memref<128x512xbf16, #tpu.memory_space<vmem>>, %arg5: memref<128x512xbf16, #tpu.memory_space<vmem>>, %arg6: memref<128x512xbf16, #tpu.memory_space<vmem>>, %arg7: memref<128x512xbf16, #tpu.memory_space<vmem>>, %arg8: memref<2x2xbf16, #tpu.memory_space<vmem>>, %arg9: memref<4x8xbf16, #tpu.memory_space<vmem>>, %arg10: memref<8x16xbf16, #tpu.memory_space<vmem>>, %arg11: memref<16x32xbf16, #tpu.memory_space<vmem>>, %arg12: memref<32x64xbf16, #tpu.memory_space<vmem>>, %arg13: memref<64x128xbf16, #tpu.memory_space<vmem>>, %arg14: memref<128x128xbf16, #tpu.memory_space<vmem>>, %arg15: memref<128x128xbf16, #tpu.memory_space<vmem>>, %arg16: memref<128x128xbf16, #tpu.memory_space<vmem>>, %arg17: memref<128x128xbf16, #tpu.memory_space<vmem>>, %arg18: memref<128x128xbf16, #tpu.memory_space<vmem>>, %arg19: memref<1x128xf32, #tpu.memory_space<vmem>>, %arg20: memref<1x128xf32, #tpu.memory_space<vmem>>, %arg21: memref<1x128xf32, #tpu.memory_space<vmem>>, %arg22: memref<1x128xf32, #tpu.memory_space<vmem>>, %arg23: memref<1x128xf32, #tpu.memory_space<vmem>>, %arg24: memref<1x128xf32, #tpu.memory_space<vmem>>, %arg25: memref<1x128xf32, #tpu.memory_space<vmem>>, %arg26: memref<1x128xf32, #tpu.memory_space<vmem>>, %arg27: memref<1x128xf32, #tpu.memory_space<vmem>>, %arg28: memref<1x128xf32, #tpu.memory_space<vmem>>, %arg29: memref<64x128xf32, #tpu.memory_space<vmem>>) attributes {dimension_semantics = [#tpu.dimension_semantics<arbitrary>], iteration_bounds = array<i64: 1>, scalar_prefetch = 0 : i64, scratch_operands = 0 : i64, tpu.core_type = #tpu.core_type<tc>, window_params = [{pipeline_mode = #tpu.pipeline_mode<synchronous>, transform_indices = @transform_0, window_bounds = array<i64: 1, 32>}, {pipeline_mode = #tpu.pipeline_mode<synchronous>, transform_indices = @transform_1, window_bounds = array<i64: 32, 256>}, {pipeline_mode = #tpu.pipeline_mode<synchronous>, transform_indices = @transform_2, window_bounds = array<i64: 128, 512>}, {pipeline_mode = #tpu.pipeline_mode<synchronous>, transform_indices = @transform_3, window_bounds = array<i64: 128, 512>}, {pipeline_mode = #tpu.pipeline_mode<synchronous>, transform_indices = @transform_4, window_bounds = array<i64: 128, 512>}, {pipeline_mode = #tpu.pipeline_mode<synchronous>, transform_indices = @transform_5, window_bounds = array<i64: 128, 512>}, {pipeline_mode = #tpu.pipeline_mode<synchronous>, transform_indices = @transform_6, window_bounds = array<i64: 128, 512>}, {pipeline_mode = #tpu.pipeline_mode<synchronous>, transform_indices = @transform_7, window_bounds = array<i64: 2, 2>}, {pipeline_mode = #tpu.pipeline_mode<synchronous>, transform_indices = @transform_8, window_bounds = array<i64: 4, 8>}, {pipeline_mode = #tpu.pipeline_mode<synchronous>, transform_indices = @transform_9, window_bounds = array<i64: 8, 16>}, {pipeline_mode = #tpu.pipeline_mode<synchronous>, transform_indices = @transform_10, window_bounds = array<i64: 16, 32>}, {pipeline_mode = #tpu.pipeline_mode<synchronous>, transform_indices = @transform_11, window_bounds = array<i64: 32, 64>}, {pipeline_mode = #tpu.pipeline_mode<synchronous>, transform_indices = @transform_12, window_bounds = array<i64: 64, 128>}, {pipeline_mode = #tpu.pipeline_mode<synchronous>, transform_indices = @transform_13, window_bounds = array<i64: 128, 128>}, {pipeline_mode = #tpu.pipeline_mode<synchronous>, transform_indices = @transform_14, window_bounds = array<i64: 128, 128>}, {pipeline_mode = #tpu.pipeline_mode<synchronous>, transform_indices = @transform_15, window_bounds = array<i64: 128, 128>}, {pipeline_mode = #tpu.pipeline_mode<synchronous>, transform_indices = @transform_16, window_bounds = array<i64: 128, 128>}, {pipeline_mode = #tpu.pipeline_mode<synchronous>, transform_indices = @transform_17, window_bounds = array<i64: 128, 128>}, {pipeline_mode = #tpu.pipeline_mode<synchronous>, transform_indices = @transform_18, window_bounds = array<i64: 1, 128>}, {pipeline_mode = #tpu.pipeline_mode<synchronous>, transform_indices = @transform_19, window_bounds = array<i64: 1, 128>}, {pipeline_mode = #tpu.pipeline_mode<synchronous>, transform_indices = @transform_20, window_bounds = array<i64: 1, 128>}, {pipeline_mode = #tpu.pipeline_mode<synchronous>, transform_indices = @transform_21, window_bounds = array<i64: 1, 128>}, {pipeline_mode = #tpu.pipeline_mode<synchronous>, transform_indices = @transform_22, window_bounds = array<i64: 1, 128>}, {pipeline_mode = #tpu.pipeline_mode<synchronous>, transform_indices = @transform_23, window_bounds = array<i64: 1, 128>}, {pipeline_mode = #tpu.pipeline_mode<synchronous>, transform_indices = @transform_24, window_bounds = array<i64: 1, 128>}, {pipeline_mode = #tpu.pipeline_mode<synchronous>, transform_indices = @transform_25, window_bounds = array<i64: 1, 128>}, {pipeline_mode = #tpu.pipeline_mode<synchronous>, transform_indices = @transform_26, window_bounds = array<i64: 1, 128>}, {pipeline_mode = #tpu.pipeline_mode<synchronous>, transform_indices = @transform_27, window_bounds = array<i64: 1, 128>}, {pipeline_mode = #tpu.pipeline_mode<synchronous>, transform_indices = @transform_28, window_bounds = array<i64: 64, 128>}]} {
    %c0 = arith.constant 0 : index
    %c0_0 = arith.constant 0 : index
    %0 = vector.load %arg1[%c0, %c0_0] : memref<1x32xf32, #tpu.memory_space<vmem>>, vector<1x32xf32>
    %1 = arith.truncf %0 : vector<1x32xf32> to vector<1x32xbf16>
    %c0_1 = arith.constant 0 : index
    %c0_2 = arith.constant 0 : index
    %2 = vector.load %arg2[%c0_1, %c0_2] : memref<32x256xbf16, #tpu.memory_space<vmem>>, vector<32x256xbf16>
    %cst = arith.constant dense<0.000000e+00> : vector<1x256xf32>
    %3 = tpu.matmul %1, %2, %cst {dimension_numbers = #tpu.dot_dimension_numbers<[1], [0], [0], [1], [0, 0, 1, 1], [], []>} : vector<1x32xbf16>, vector<32x256xbf16>, vector<1x256xf32> -> vector<1x256xf32>
    %c0_3 = arith.constant 0 : index
    %c0_4 = arith.constant 0 : index
    %4 = vector.load %arg8[%c0_3, %c0_4] : memref<2x2xbf16, #tpu.memory_space<vmem>>, vector<2x2xbf16>
    %5 = vector.extract_strided_slice %4 {offsets = [0, 0], sizes = [2, 1], strides = [1, 1]} : vector<2x2xbf16> to vector<2x1xbf16>
    %6 = vector.extract_strided_slice %3 {offsets = [0, 0], sizes = [1, 128], strides = [1, 1]} : vector<1x256xf32> to vector<1x128xf32>
    %7 = arith.truncf %6 : vector<1x128xf32> to vector<1x128xbf16>
    %cst_5 = arith.constant dense<0.000000e+00> : vector<2x128xf32>
    %8 = tpu.matmul %5, %7, %cst_5 {dimension_numbers = #tpu.dot_dimension_numbers<[1], [0], [0], [1], [0, 0, 1, 1], [], []>} : vector<2x1xbf16>, vector<1x128xbf16>, vector<2x128xf32> -> vector<2x128xf32>
    %9 = vector.extract_strided_slice %4 {offsets = [0, 1], sizes = [2, 1], strides = [1, 1]} : vector<2x2xbf16> to vector<2x1xbf16>
    %10 = vector.extract_strided_slice %3 {offsets = [0, 128], sizes = [1, 128], strides = [1, 1]} : vector<1x256xf32> to vector<1x128xf32>
    %11 = arith.truncf %10 : vector<1x128xf32> to vector<1x128xbf16>
    %cst_6 = arith.constant dense<0.000000e+00> : vector<2x128xf32>
    %12 = tpu.matmul %9, %11, %cst_6 {dimension_numbers = #tpu.dot_dimension_numbers<[1], [0], [0], [1], [0, 0, 1, 1], [], []>} : vector<2x1xbf16>, vector<1x128xbf16>, vector<2x128xf32> -> vector<2x128xf32>
    %13 = arith.addf %8, %12 : vector<2x128xf32>
    %cst_7 = arith.constant dense<0.000000e+00> : vector<128xf32>
    %14 = vector.multi_reduction <add>, %13, %cst_7 [0] : vector<2x128xf32> to vector<128xf32>
    %15 = vector.shape_cast %14 : vector<128xf32> to vector<1x128xf32>
    %16 = arith.mulf %13, %13 : vector<2x128xf32>
    %cst_8 = arith.constant dense<0.000000e+00> : vector<128xf32>
    %17 = vector.multi_reduction <add>, %16, %cst_8 [0] : vector<2x128xf32> to vector<128xf32>
    %18 = vector.shape_cast %17 : vector<128xf32> to vector<1x128xf32>
    %19 = tpu.iota {dimensions = array<i32: 0>} : vector<2x128xi32>
    %c0_i32 = arith.constant 0 : i32
    %20 = vector.broadcast %c0_i32 : i32 to vector<2x128xi32>
    %21 = arith.cmpi eq, %19, %20 : vector<2x128xi32>
    %22 = vector.shape_cast %15 : vector<1x128xf32> to vector<1x128xf32>
    %23 = vector.broadcast %22 : vector<1x128xf32> to vector<2x128xf32>
    %24 = vector.shape_cast %18 : vector<1x128xf32> to vector<1x128xf32>
    %25 = vector.broadcast %24 : vector<1x128xf32> to vector<2x128xf32>
    %26 = arith.select %21, %23, %25 : vector<2x128xi1>, vector<2x128xf32>
    %27 = arith.truncf %26 : vector<2x128xf32> to vector<2x128xbf16>
    %c0_9 = arith.constant 0 : index
    %c0_10 = arith.constant 0 : index
    %28 = vector.load %arg14[%c0_9, %c0_10] : memref<128x128xbf16, #tpu.memory_space<vmem>>, vector<128x128xbf16>
    %cst_11 = arith.constant dense<0.000000e+00> : vector<2x128xf32>
    %29 = tpu.matmul %27, %28, %cst_11 {dimension_numbers = #tpu.dot_dimension_numbers<[1], [0], [0], [1], [0, 0, 1, 1], [], []>} : vector<2x128xbf16>, vector<128x128xbf16>, vector<2x128xf32> -> vector<2x128xf32>
    %cst_12 = arith.constant 1.250000e-01 : f32
    %30 = vector.broadcast %cst_12 : f32 to vector<2x128xf32>
    %31 = arith.mulf %29, %30 : vector<2x128xf32>
    %32 = vector.extract_strided_slice %31 {offsets = [0, 0], sizes = [1, 128], strides = [1, 1]} : vector<2x128xf32> to vector<1x128xf32>
    %33 = vector.extract_strided_slice %31 {offsets = [1, 0], sizes = [1, 128], strides = [1, 1]} : vector<2x128xf32> to vector<1x128xf32>
    %34 = arith.mulf %32, %32 : vector<1x128xf32>
    %35 = arith.subf %33, %34 : vector<1x128xf32>
    %cst_13 = arith.constant 0.000000e+00 : f32
    %36 = vector.broadcast %cst_13 : f32 to vector<1x128xf32>
    %37 = arith.maximumf %35, %36 : vector<1x128xf32>
    %38 = vector.broadcast %32 : vector<1x128xf32> to vector<2x128xf32>
    %39 = arith.subf %13, %38 : vector<2x128xf32>
    %cst_14 = arith.constant 9.99999974E-6 : f32
    %40 = vector.broadcast %cst_14 : f32 to vector<1x128xf32>
    %41 = arith.addf %37, %40 : vector<1x128xf32>
    %42 = math.rsqrt %41 : vector<1x128xf32>
    %43 = vector.broadcast %42 : vector<1x128xf32> to vector<2x128xf32>
    %44 = arith.mulf %39, %43 : vector<2x128xf32>
    %c0_15 = arith.constant 0 : index
    %c0_16 = arith.constant 0 : index
    %45 = vector.load %arg19[%c0_15, %c0_16] : memref<1x128xf32, #tpu.memory_space<vmem>>, vector<1x128xf32>
    %46 = vector.broadcast %45 : vector<1x128xf32> to vector<2x128xf32>
    %47 = arith.mulf %44, %46 : vector<2x128xf32>
    %c0_17 = arith.constant 0 : index
    %c0_18 = arith.constant 0 : index
    %48 = vector.load %arg24[%c0_17, %c0_18] : memref<1x128xf32, #tpu.memory_space<vmem>>, vector<1x128xf32>
    %49 = vector.broadcast %48 : vector<1x128xf32> to vector<2x128xf32>
    %50 = arith.addf %47, %49 : vector<2x128xf32>
    %cst_19 = arith.constant 0.000000e+00 : f32
    %51 = vector.broadcast %cst_19 : f32 to vector<2x128xf32>
    %52 = arith.maximumf %50, %51 : vector<2x128xf32>
    %53 = arith.truncf %52 : vector<2x128xf32> to vector<2x128xbf16>
    %c0_20 = arith.constant 0 : index
    %c0_21 = arith.constant 0 : index
    %54 = vector.load %arg3[%c0_20, %c0_21] : memref<128x512xbf16, #tpu.memory_space<vmem>>, vector<128x512xbf16>
    %cst_22 = arith.constant dense<0.000000e+00> : vector<2x512xf32>
    %55 = tpu.matmul %53, %54, %cst_22 {dimension_numbers = #tpu.dot_dimension_numbers<[1], [0], [0], [1], [0, 0, 1, 1], [], []>} : vector<2x128xbf16>, vector<128x512xbf16>, vector<2x512xf32> -> vector<2x512xf32>
    %c0_23 = arith.constant 0 : index
    %c0_24 = arith.constant 0 : index
    %56 = vector.load %arg9[%c0_23, %c0_24] : memref<4x8xbf16, #tpu.memory_space<vmem>>, vector<4x8xbf16>
    %57 = vector.extract_strided_slice %56 {offsets = [0, 0], sizes = [4, 2], strides = [1, 1]} : vector<4x8xbf16> to vector<4x2xbf16>
    %58 = vector.extract_strided_slice %55 {offsets = [0, 0], sizes = [2, 128], strides = [1, 1]} : vector<2x512xf32> to vector<2x128xf32>
    %59 = arith.truncf %58 : vector<2x128xf32> to vector<2x128xbf16>
    %cst_25 = arith.constant dense<0.000000e+00> : vector<4x128xf32>
    %60 = tpu.matmul %57, %59, %cst_25 {dimension_numbers = #tpu.dot_dimension_numbers<[1], [0], [0], [1], [0, 0, 1, 1], [], []>} : vector<4x2xbf16>, vector<2x128xbf16>, vector<4x128xf32> -> vector<4x128xf32>
    %61 = vector.extract_strided_slice %56 {offsets = [0, 2], sizes = [4, 2], strides = [1, 1]} : vector<4x8xbf16> to vector<4x2xbf16>
    %62 = vector.extract_strided_slice %55 {offsets = [0, 128], sizes = [2, 128], strides = [1, 1]} : vector<2x512xf32> to vector<2x128xf32>
    %63 = arith.truncf %62 : vector<2x128xf32> to vector<2x128xbf16>
    %cst_26 = arith.constant dense<0.000000e+00> : vector<4x128xf32>
    %64 = tpu.matmul %61, %63, %cst_26 {dimension_numbers = #tpu.dot_dimension_numbers<[1], [0], [0], [1], [0, 0, 1, 1], [], []>} : vector<4x2xbf16>, vector<2x128xbf16>, vector<4x128xf32> -> vector<4x128xf32>
    %65 = arith.addf %60, %64 : vector<4x128xf32>
    %66 = vector.extract_strided_slice %56 {offsets = [0, 4], sizes = [4, 2], strides = [1, 1]} : vector<4x8xbf16> to vector<4x2xbf16>
    %67 = vector.extract_strided_slice %55 {offsets = [0, 256], sizes = [2, 128], strides = [1, 1]} : vector<2x512xf32> to vector<2x128xf32>
    %68 = arith.truncf %67 : vector<2x128xf32> to vector<2x128xbf16>
    %cst_27 = arith.constant dense<0.000000e+00> : vector<4x128xf32>
    %69 = tpu.matmul %66, %68, %cst_27 {dimension_numbers = #tpu.dot_dimension_numbers<[1], [0], [0], [1], [0, 0, 1, 1], [], []>} : vector<4x2xbf16>, vector<2x128xbf16>, vector<4x128xf32> -> vector<4x128xf32>
    %70 = arith.addf %65, %69 : vector<4x128xf32>
    %71 = vector.extract_strided_slice %56 {offsets = [0, 6], sizes = [4, 2], strides = [1, 1]} : vector<4x8xbf16> to vector<4x2xbf16>
    %72 = vector.extract_strided_slice %55 {offsets = [0, 384], sizes = [2, 128], strides = [1, 1]} : vector<2x512xf32> to vector<2x128xf32>
    %73 = arith.truncf %72 : vector<2x128xf32> to vector<2x128xbf16>
    %cst_28 = arith.constant dense<0.000000e+00> : vector<4x128xf32>
    %74 = tpu.matmul %71, %73, %cst_28 {dimension_numbers = #tpu.dot_dimension_numbers<[1], [0], [0], [1], [0, 0, 1, 1], [], []>} : vector<4x2xbf16>, vector<2x128xbf16>, vector<4x128xf32> -> vector<4x128xf32>
    %75 = arith.addf %70, %74 : vector<4x128xf32>
    %cst_29 = arith.constant dense<0.000000e+00> : vector<128xf32>
    %76 = vector.multi_reduction <add>, %75, %cst_29 [0] : vector<4x128xf32> to vector<128xf32>
    %77 = vector.shape_cast %76 : vector<128xf32> to vector<1x128xf32>
    %78 = arith.mulf %75, %75 : vector<4x128xf32>
    %cst_30 = arith.constant dense<0.000000e+00> : vector<128xf32>
    %79 = vector.multi_reduction <add>, %78, %cst_30 [0] : vector<4x128xf32> to vector<128xf32>
    %80 = vector.shape_cast %79 : vector<128xf32> to vector<1x128xf32>
    %81 = tpu.iota {dimensions = array<i32: 0>} : vector<2x128xi32>
    %c0_i32_31 = arith.constant 0 : i32
    %82 = vector.broadcast %c0_i32_31 : i32 to vector<2x128xi32>
    %83 = arith.cmpi eq, %81, %82 : vector<2x128xi32>
    %84 = vector.shape_cast %77 : vector<1x128xf32> to vector<1x128xf32>
    %85 = vector.broadcast %84 : vector<1x128xf32> to vector<2x128xf32>
    %86 = vector.shape_cast %80 : vector<1x128xf32> to vector<1x128xf32>
    %87 = vector.broadcast %86 : vector<1x128xf32> to vector<2x128xf32>
    %88 = arith.select %83, %85, %87 : vector<2x128xi1>, vector<2x128xf32>
    %89 = arith.truncf %88 : vector<2x128xf32> to vector<2x128xbf16>
    %c0_32 = arith.constant 0 : index
    %c0_33 = arith.constant 0 : index
    %90 = vector.load %arg15[%c0_32, %c0_33] : memref<128x128xbf16, #tpu.memory_space<vmem>>, vector<128x128xbf16>
    %cst_34 = arith.constant dense<0.000000e+00> : vector<2x128xf32>
    %91 = tpu.matmul %89, %90, %cst_34 {dimension_numbers = #tpu.dot_dimension_numbers<[1], [0], [0], [1], [0, 0, 1, 1], [], []>} : vector<2x128xbf16>, vector<128x128xbf16>, vector<2x128xf32> -> vector<2x128xf32>
    %cst_35 = arith.constant 3.125000e-02 : f32
    %92 = vector.broadcast %cst_35 : f32 to vector<2x128xf32>
    %93 = arith.mulf %91, %92 : vector<2x128xf32>
    %94 = vector.extract_strided_slice %93 {offsets = [0, 0], sizes = [1, 128], strides = [1, 1]} : vector<2x128xf32> to vector<1x128xf32>
    %95 = vector.extract_strided_slice %93 {offsets = [1, 0], sizes = [1, 128], strides = [1, 1]} : vector<2x128xf32> to vector<1x128xf32>
    %96 = arith.mulf %94, %94 : vector<1x128xf32>
    %97 = arith.subf %95, %96 : vector<1x128xf32>
    %cst_36 = arith.constant 0.000000e+00 : f32
    %98 = vector.broadcast %cst_36 : f32 to vector<1x128xf32>
    %99 = arith.maximumf %97, %98 : vector<1x128xf32>
    %100 = vector.broadcast %94 : vector<1x128xf32> to vector<4x128xf32>
    %101 = arith.subf %75, %100 : vector<4x128xf32>
    %cst_37 = arith.constant 9.99999974E-6 : f32
    %102 = vector.broadcast %cst_37 : f32 to vector<1x128xf32>
    %103 = arith.addf %99, %102 : vector<1x128xf32>
    %104 = math.rsqrt %103 : vector<1x128xf32>
    %105 = vector.broadcast %104 : vector<1x128xf32> to vector<4x128xf32>
    %106 = arith.mulf %101, %105 : vector<4x128xf32>
    %c0_38 = arith.constant 0 : index
    %c0_39 = arith.constant 0 : index
    %107 = vector.load %arg20[%c0_38, %c0_39] : memref<1x128xf32, #tpu.memory_space<vmem>>, vector<1x128xf32>
    %108 = vector.broadcast %107 : vector<1x128xf32> to vector<4x128xf32>
    %109 = arith.mulf %106, %108 : vector<4x128xf32>
    %c0_40 = arith.constant 0 : index
    %c0_41 = arith.constant 0 : index
    %110 = vector.load %arg25[%c0_40, %c0_41] : memref<1x128xf32, #tpu.memory_space<vmem>>, vector<1x128xf32>
    %111 = vector.broadcast %110 : vector<1x128xf32> to vector<4x128xf32>
    %112 = arith.addf %109, %111 : vector<4x128xf32>
    %cst_42 = arith.constant 0.000000e+00 : f32
    %113 = vector.broadcast %cst_42 : f32 to vector<4x128xf32>
    %114 = arith.maximumf %112, %113 : vector<4x128xf32>
    %115 = arith.truncf %114 : vector<4x128xf32> to vector<4x128xbf16>
    %c0_43 = arith.constant 0 : index
    %c0_44 = arith.constant 0 : index
    %116 = vector.load %arg4[%c0_43, %c0_44] : memref<128x512xbf16, #tpu.memory_space<vmem>>, vector<128x512xbf16>
    %cst_45 = arith.constant dense<0.000000e+00> : vector<4x512xf32>
    %117 = tpu.matmul %115, %116, %cst_45 {dimension_numbers = #tpu.dot_dimension_numbers<[1], [0], [0], [1], [0, 0, 1, 1], [], []>} : vector<4x128xbf16>, vector<128x512xbf16>, vector<4x512xf32> -> vector<4x512xf32>
    %c0_46 = arith.constant 0 : index
    %c0_47 = arith.constant 0 : index
    %118 = vector.load %arg10[%c0_46, %c0_47] : memref<8x16xbf16, #tpu.memory_space<vmem>>, vector<8x16xbf16>
    %119 = vector.extract_strided_slice %118 {offsets = [0, 0], sizes = [8, 4], strides = [1, 1]} : vector<8x16xbf16> to vector<8x4xbf16>
    %120 = vector.extract_strided_slice %117 {offsets = [0, 0], sizes = [4, 128], strides = [1, 1]} : vector<4x512xf32> to vector<4x128xf32>
    %121 = arith.truncf %120 : vector<4x128xf32> to vector<4x128xbf16>
    %cst_48 = arith.constant dense<0.000000e+00> : vector<8x128xf32>
    %122 = tpu.matmul %119, %121, %cst_48 {dimension_numbers = #tpu.dot_dimension_numbers<[1], [0], [0], [1], [0, 0, 1, 1], [], []>} : vector<8x4xbf16>, vector<4x128xbf16>, vector<8x128xf32> -> vector<8x128xf32>
    %123 = vector.extract_strided_slice %118 {offsets = [0, 4], sizes = [8, 4], strides = [1, 1]} : vector<8x16xbf16> to vector<8x4xbf16>
    %124 = vector.extract_strided_slice %117 {offsets = [0, 128], sizes = [4, 128], strides = [1, 1]} : vector<4x512xf32> to vector<4x128xf32>
    %125 = arith.truncf %124 : vector<4x128xf32> to vector<4x128xbf16>
    %cst_49 = arith.constant dense<0.000000e+00> : vector<8x128xf32>
    %126 = tpu.matmul %123, %125, %cst_49 {dimension_numbers = #tpu.dot_dimension_numbers<[1], [0], [0], [1], [0, 0, 1, 1], [], []>} : vector<8x4xbf16>, vector<4x128xbf16>, vector<8x128xf32> -> vector<8x128xf32>
    %127 = arith.addf %122, %126 : vector<8x128xf32>
    %128 = vector.extract_strided_slice %118 {offsets = [0, 8], sizes = [8, 4], strides = [1, 1]} : vector<8x16xbf16> to vector<8x4xbf16>
    %129 = vector.extract_strided_slice %117 {offsets = [0, 256], sizes = [4, 128], strides = [1, 1]} : vector<4x512xf32> to vector<4x128xf32>
    %130 = arith.truncf %129 : vector<4x128xf32> to vector<4x128xbf16>
    %cst_50 = arith.constant dense<0.000000e+00> : vector<8x128xf32>
    %131 = tpu.matmul %128, %130, %cst_50 {dimension_numbers = #tpu.dot_dimension_numbers<[1], [0], [0], [1], [0, 0, 1, 1], [], []>} : vector<8x4xbf16>, vector<4x128xbf16>, vector<8x128xf32> -> vector<8x128xf32>
    %132 = arith.addf %127, %131 : vector<8x128xf32>
    %133 = vector.extract_strided_slice %118 {offsets = [0, 12], sizes = [8, 4], strides = [1, 1]} : vector<8x16xbf16> to vector<8x4xbf16>
    %134 = vector.extract_strided_slice %117 {offsets = [0, 384], sizes = [4, 128], strides = [1, 1]} : vector<4x512xf32> to vector<4x128xf32>
    %135 = arith.truncf %134 : vector<4x128xf32> to vector<4x128xbf16>
    %cst_51 = arith.constant dense<0.000000e+00> : vector<8x128xf32>
    %136 = tpu.matmul %133, %135, %cst_51 {dimension_numbers = #tpu.dot_dimension_numbers<[1], [0], [0], [1], [0, 0, 1, 1], [], []>} : vector<8x4xbf16>, vector<4x128xbf16>, vector<8x128xf32> -> vector<8x128xf32>
    %137 = arith.addf %132, %136 : vector<8x128xf32>
    %cst_52 = arith.constant dense<0.000000e+00> : vector<128xf32>
    %138 = vector.multi_reduction <add>, %137, %cst_52 [0] : vector<8x128xf32> to vector<128xf32>
    %139 = vector.shape_cast %138 : vector<128xf32> to vector<1x128xf32>
    %140 = arith.mulf %137, %137 : vector<8x128xf32>
    %cst_53 = arith.constant dense<0.000000e+00> : vector<128xf32>
    %141 = vector.multi_reduction <add>, %140, %cst_53 [0] : vector<8x128xf32> to vector<128xf32>
    %142 = vector.shape_cast %141 : vector<128xf32> to vector<1x128xf32>
    %143 = tpu.iota {dimensions = array<i32: 0>} : vector<2x128xi32>
    %c0_i32_54 = arith.constant 0 : i32
    %144 = vector.broadcast %c0_i32_54 : i32 to vector<2x128xi32>
    %145 = arith.cmpi eq, %143, %144 : vector<2x128xi32>
    %146 = vector.shape_cast %139 : vector<1x128xf32> to vector<1x128xf32>
    %147 = vector.broadcast %146 : vector<1x128xf32> to vector<2x128xf32>
    %148 = vector.shape_cast %142 : vector<1x128xf32> to vector<1x128xf32>
    %149 = vector.broadcast %148 : vector<1x128xf32> to vector<2x128xf32>
    %150 = arith.select %145, %147, %149 : vector<2x128xi1>, vector<2x128xf32>
    %151 = arith.truncf %150 : vector<2x128xf32> to vector<2x128xbf16>
    %c0_55 = arith.constant 0 : index
    %c0_56 = arith.constant 0 : index
    %152 = vector.load %arg16[%c0_55, %c0_56] : memref<128x128xbf16, #tpu.memory_space<vmem>>, vector<128x128xbf16>
    %cst_57 = arith.constant dense<0.000000e+00> : vector<2x128xf32>
    %153 = tpu.matmul %151, %152, %cst_57 {dimension_numbers = #tpu.dot_dimension_numbers<[1], [0], [0], [1], [0, 0, 1, 1], [], []>} : vector<2x128xbf16>, vector<128x128xbf16>, vector<2x128xf32> -> vector<2x128xf32>
    %cst_58 = arith.constant 7.812500e-03 : f32
    %154 = vector.broadcast %cst_58 : f32 to vector<2x128xf32>
    %155 = arith.mulf %153, %154 : vector<2x128xf32>
    %156 = vector.extract_strided_slice %155 {offsets = [0, 0], sizes = [1, 128], strides = [1, 1]} : vector<2x128xf32> to vector<1x128xf32>
    %157 = vector.extract_strided_slice %155 {offsets = [1, 0], sizes = [1, 128], strides = [1, 1]} : vector<2x128xf32> to vector<1x128xf32>
    %158 = arith.mulf %156, %156 : vector<1x128xf32>
    %159 = arith.subf %157, %158 : vector<1x128xf32>
    %cst_59 = arith.constant 0.000000e+00 : f32
    %160 = vector.broadcast %cst_59 : f32 to vector<1x128xf32>
    %161 = arith.maximumf %159, %160 : vector<1x128xf32>
    %162 = vector.broadcast %156 : vector<1x128xf32> to vector<8x128xf32>
    %163 = arith.subf %137, %162 : vector<8x128xf32>
    %cst_60 = arith.constant 9.99999974E-6 : f32
    %164 = vector.broadcast %cst_60 : f32 to vector<1x128xf32>
    %165 = arith.addf %161, %164 : vector<1x128xf32>
    %166 = math.rsqrt %165 : vector<1x128xf32>
    %167 = vector.broadcast %166 : vector<1x128xf32> to vector<8x128xf32>
    %168 = arith.mulf %163, %167 : vector<8x128xf32>
    %c0_61 = arith.constant 0 : index
    %c0_62 = arith.constant 0 : index
    %169 = vector.load %arg21[%c0_61, %c0_62] : memref<1x128xf32, #tpu.memory_space<vmem>>, vector<1x128xf32>
    %170 = vector.broadcast %169 : vector<1x128xf32> to vector<8x128xf32>
    %171 = arith.mulf %168, %170 : vector<8x128xf32>
    %c0_63 = arith.constant 0 : index
    %c0_64 = arith.constant 0 : index
    %172 = vector.load %arg26[%c0_63, %c0_64] : memref<1x128xf32, #tpu.memory_space<vmem>>, vector<1x128xf32>
    %173 = vector.broadcast %172 : vector<1x128xf32> to vector<8x128xf32>
    %174 = arith.addf %171, %173 : vector<8x128xf32>
    %cst_65 = arith.constant 0.000000e+00 : f32
    %175 = vector.broadcast %cst_65 : f32 to vector<8x128xf32>
    %176 = arith.maximumf %174, %175 : vector<8x128xf32>
    %177 = arith.truncf %176 : vector<8x128xf32> to vector<8x128xbf16>
    %c0_66 = arith.constant 0 : index
    %c0_67 = arith.constant 0 : index
    %178 = vector.load %arg5[%c0_66, %c0_67] : memref<128x512xbf16, #tpu.memory_space<vmem>>, vector<128x512xbf16>
    %cst_68 = arith.constant dense<0.000000e+00> : vector<8x512xf32>
    %179 = tpu.matmul %177, %178, %cst_68 {dimension_numbers = #tpu.dot_dimension_numbers<[1], [0], [0], [1], [0, 0, 1, 1], [], []>} : vector<8x128xbf16>, vector<128x512xbf16>, vector<8x512xf32> -> vector<8x512xf32>
    %180 = vector.extract_strided_slice %179 {offsets = [0, 0], sizes = [8, 128], strides = [1, 1]} : vector<8x512xf32> to vector<8x128xf32>
    %181 = vector.extract_strided_slice %179 {offsets = [0, 128], sizes = [8, 128], strides = [1, 1]} : vector<8x512xf32> to vector<8x128xf32>
    %182 = vector.extract_strided_slice %179 {offsets = [0, 256], sizes = [8, 128], strides = [1, 1]} : vector<8x512xf32> to vector<8x128xf32>
    %183 = vector.extract_strided_slice %179 {offsets = [0, 384], sizes = [8, 128], strides = [1, 1]} : vector<8x512xf32> to vector<8x128xf32>
    %184 = tpu.concatenate %180, %181, %182, %183 in 0 : vector<8x128xf32>, vector<8x128xf32>, vector<8x128xf32>, vector<8x128xf32> -> vector<32x128xf32>
    %185 = arith.truncf %184 : vector<32x128xf32> to vector<32x128xbf16>
    %c0_69 = arith.constant 0 : index
    %c0_70 = arith.constant 0 : index
    %186 = vector.load %arg11[%c0_69, %c0_70] : memref<16x32xbf16, #tpu.memory_space<vmem>>, vector<16x32xbf16>
    %cst_71 = arith.constant dense<0.000000e+00> : vector<16x128xf32>
    %187 = tpu.matmul %186, %185, %cst_71 {dimension_numbers = #tpu.dot_dimension_numbers<[1], [0], [0], [1], [0, 0, 1, 1], [], []>} : vector<16x32xbf16>, vector<32x128xbf16>, vector<16x128xf32> -> vector<16x128xf32>
    %cst_72 = arith.constant dense<0.000000e+00> : vector<128xf32>
    %188 = vector.multi_reduction <add>, %187, %cst_72 [0] : vector<16x128xf32> to vector<128xf32>
    %189 = vector.shape_cast %188 : vector<128xf32> to vector<1x128xf32>
    %190 = arith.mulf %187, %187 : vector<16x128xf32>
    %cst_73 = arith.constant dense<0.000000e+00> : vector<128xf32>
    %191 = vector.multi_reduction <add>, %190, %cst_73 [0] : vector<16x128xf32> to vector<128xf32>
    %192 = vector.shape_cast %191 : vector<128xf32> to vector<1x128xf32>
    %193 = tpu.iota {dimensions = array<i32: 0>} : vector<2x128xi32>
    %c0_i32_74 = arith.constant 0 : i32
    %194 = vector.broadcast %c0_i32_74 : i32 to vector<2x128xi32>
    %195 = arith.cmpi eq, %193, %194 : vector<2x128xi32>
    %196 = vector.shape_cast %189 : vector<1x128xf32> to vector<1x128xf32>
    %197 = vector.broadcast %196 : vector<1x128xf32> to vector<2x128xf32>
    %198 = vector.shape_cast %192 : vector<1x128xf32> to vector<1x128xf32>
    %199 = vector.broadcast %198 : vector<1x128xf32> to vector<2x128xf32>
    %200 = arith.select %195, %197, %199 : vector<2x128xi1>, vector<2x128xf32>
    %201 = arith.truncf %200 : vector<2x128xf32> to vector<2x128xbf16>
    %c0_75 = arith.constant 0 : index
    %c0_76 = arith.constant 0 : index
    %202 = vector.load %arg17[%c0_75, %c0_76] : memref<128x128xbf16, #tpu.memory_space<vmem>>, vector<128x128xbf16>
    %cst_77 = arith.constant dense<0.000000e+00> : vector<2x128xf32>
    %203 = tpu.matmul %201, %202, %cst_77 {dimension_numbers = #tpu.dot_dimension_numbers<[1], [0], [0], [1], [0, 0, 1, 1], [], []>} : vector<2x128xbf16>, vector<128x128xbf16>, vector<2x128xf32> -> vector<2x128xf32>
    %cst_78 = arith.constant 0.001953125 : f32
    %204 = vector.broadcast %cst_78 : f32 to vector<2x128xf32>
    %205 = arith.mulf %203, %204 : vector<2x128xf32>
    %206 = vector.extract_strided_slice %205 {offsets = [0, 0], sizes = [1, 128], strides = [1, 1]} : vector<2x128xf32> to vector<1x128xf32>
    %207 = vector.extract_strided_slice %205 {offsets = [1, 0], sizes = [1, 128], strides = [1, 1]} : vector<2x128xf32> to vector<1x128xf32>
    %208 = arith.mulf %206, %206 : vector<1x128xf32>
    %209 = arith.subf %207, %208 : vector<1x128xf32>
    %cst_79 = arith.constant 0.000000e+00 : f32
    %210 = vector.broadcast %cst_79 : f32 to vector<1x128xf32>
    %211 = arith.maximumf %209, %210 : vector<1x128xf32>
    %212 = vector.broadcast %206 : vector<1x128xf32> to vector<16x128xf32>
    %213 = arith.subf %187, %212 : vector<16x128xf32>
    %cst_80 = arith.constant 9.99999974E-6 : f32
    %214 = vector.broadcast %cst_80 : f32 to vector<1x128xf32>
    %215 = arith.addf %211, %214 : vector<1x128xf32>
    %216 = math.rsqrt %215 : vector<1x128xf32>
    %217 = vector.broadcast %216 : vector<1x128xf32> to vector<16x128xf32>
    %218 = arith.mulf %213, %217 : vector<16x128xf32>
    %c0_81 = arith.constant 0 : index
    %c0_82 = arith.constant 0 : index
    %219 = vector.load %arg22[%c0_81, %c0_82] : memref<1x128xf32, #tpu.memory_space<vmem>>, vector<1x128xf32>
    %220 = vector.broadcast %219 : vector<1x128xf32> to vector<16x128xf32>
    %221 = arith.mulf %218, %220 : vector<16x128xf32>
    %c0_83 = arith.constant 0 : index
    %c0_84 = arith.constant 0 : index
    %222 = vector.load %arg27[%c0_83, %c0_84] : memref<1x128xf32, #tpu.memory_space<vmem>>, vector<1x128xf32>
    %223 = vector.broadcast %222 : vector<1x128xf32> to vector<16x128xf32>
    %224 = arith.addf %221, %223 : vector<16x128xf32>
    %cst_85 = arith.constant 0.000000e+00 : f32
    %225 = vector.broadcast %cst_85 : f32 to vector<16x128xf32>
    %226 = arith.maximumf %224, %225 : vector<16x128xf32>
    %227 = arith.truncf %226 : vector<16x128xf32> to vector<16x128xbf16>
    %c0_86 = arith.constant 0 : index
    %c0_87 = arith.constant 0 : index
    %228 = vector.load %arg6[%c0_86, %c0_87] : memref<128x512xbf16, #tpu.memory_space<vmem>>, vector<128x512xbf16>
    %cst_88 = arith.constant dense<0.000000e+00> : vector<16x512xf32>
    %229 = tpu.matmul %227, %228, %cst_88 {dimension_numbers = #tpu.dot_dimension_numbers<[1], [0], [0], [1], [0, 0, 1, 1], [], []>} : vector<16x128xbf16>, vector<128x512xbf16>, vector<16x512xf32> -> vector<16x512xf32>
    %230 = vector.extract_strided_slice %229 {offsets = [0, 0], sizes = [16, 128], strides = [1, 1]} : vector<16x512xf32> to vector<16x128xf32>
    %231 = vector.extract_strided_slice %229 {offsets = [0, 128], sizes = [16, 128], strides = [1, 1]} : vector<16x512xf32> to vector<16x128xf32>
    %232 = vector.extract_strided_slice %229 {offsets = [0, 256], sizes = [16, 128], strides = [1, 1]} : vector<16x512xf32> to vector<16x128xf32>
    %233 = vector.extract_strided_slice %229 {offsets = [0, 384], sizes = [16, 128], strides = [1, 1]} : vector<16x512xf32> to vector<16x128xf32>
    %234 = tpu.concatenate %230, %231, %232, %233 in 0 : vector<16x128xf32>, vector<16x128xf32>, vector<16x128xf32>, vector<16x128xf32> -> vector<64x128xf32>
    %235 = arith.truncf %234 : vector<64x128xf32> to vector<64x128xbf16>
    %c0_89 = arith.constant 0 : index
    %c0_90 = arith.constant 0 : index
    %236 = vector.load %arg12[%c0_89, %c0_90] : memref<32x64xbf16, #tpu.memory_space<vmem>>, vector<32x64xbf16>
    %cst_91 = arith.constant dense<0.000000e+00> : vector<32x128xf32>
    %237 = tpu.matmul %236, %235, %cst_91 {dimension_numbers = #tpu.dot_dimension_numbers<[1], [0], [0], [1], [0, 0, 1, 1], [], []>} : vector<32x64xbf16>, vector<64x128xbf16>, vector<32x128xf32> -> vector<32x128xf32>
    %cst_92 = arith.constant dense<0.000000e+00> : vector<128xf32>
    %238 = vector.multi_reduction <add>, %237, %cst_92 [0] : vector<32x128xf32> to vector<128xf32>
    %239 = vector.shape_cast %238 : vector<128xf32> to vector<1x128xf32>
    %240 = arith.mulf %237, %237 : vector<32x128xf32>
    %cst_93 = arith.constant dense<0.000000e+00> : vector<128xf32>
    %241 = vector.multi_reduction <add>, %240, %cst_93 [0] : vector<32x128xf32> to vector<128xf32>
    %242 = vector.shape_cast %241 : vector<128xf32> to vector<1x128xf32>
    %243 = tpu.iota {dimensions = array<i32: 0>} : vector<2x128xi32>
    %c0_i32_94 = arith.constant 0 : i32
    %244 = vector.broadcast %c0_i32_94 : i32 to vector<2x128xi32>
    %245 = arith.cmpi eq, %243, %244 : vector<2x128xi32>
    %246 = vector.shape_cast %239 : vector<1x128xf32> to vector<1x128xf32>
    %247 = vector.broadcast %246 : vector<1x128xf32> to vector<2x128xf32>
    %248 = vector.shape_cast %242 : vector<1x128xf32> to vector<1x128xf32>
    %249 = vector.broadcast %248 : vector<1x128xf32> to vector<2x128xf32>
    %250 = arith.select %245, %247, %249 : vector<2x128xi1>, vector<2x128xf32>
    %251 = arith.truncf %250 : vector<2x128xf32> to vector<2x128xbf16>
    %c0_95 = arith.constant 0 : index
    %c0_96 = arith.constant 0 : index
    %252 = vector.load %arg18[%c0_95, %c0_96] : memref<128x128xbf16, #tpu.memory_space<vmem>>, vector<128x128xbf16>
    %cst_97 = arith.constant dense<0.000000e+00> : vector<2x128xf32>
    %253 = tpu.matmul %251, %252, %cst_97 {dimension_numbers = #tpu.dot_dimension_numbers<[1], [0], [0], [1], [0, 0, 1, 1], [], []>} : vector<2x128xbf16>, vector<128x128xbf16>, vector<2x128xf32> -> vector<2x128xf32>
    %cst_98 = arith.constant 4.8828125E-4 : f32
    %254 = vector.broadcast %cst_98 : f32 to vector<2x128xf32>
    %255 = arith.mulf %253, %254 : vector<2x128xf32>
    %256 = vector.extract_strided_slice %255 {offsets = [0, 0], sizes = [1, 128], strides = [1, 1]} : vector<2x128xf32> to vector<1x128xf32>
    %257 = vector.extract_strided_slice %255 {offsets = [1, 0], sizes = [1, 128], strides = [1, 1]} : vector<2x128xf32> to vector<1x128xf32>
    %258 = arith.mulf %256, %256 : vector<1x128xf32>
    %259 = arith.subf %257, %258 : vector<1x128xf32>
    %cst_99 = arith.constant 0.000000e+00 : f32
    %260 = vector.broadcast %cst_99 : f32 to vector<1x128xf32>
    %261 = arith.maximumf %259, %260 : vector<1x128xf32>
    %262 = vector.broadcast %256 : vector<1x128xf32> to vector<32x128xf32>
    %263 = arith.subf %237, %262 : vector<32x128xf32>
    %cst_100 = arith.constant 9.99999974E-6 : f32
    %264 = vector.broadcast %cst_100 : f32 to vector<1x128xf32>
    %265 = arith.addf %261, %264 : vector<1x128xf32>
    %266 = math.rsqrt %265 : vector<1x128xf32>
    %267 = vector.broadcast %266 : vector<1x128xf32> to vector<32x128xf32>
    %268 = arith.mulf %263, %267 : vector<32x128xf32>
    %c0_101 = arith.constant 0 : index
    %c0_102 = arith.constant 0 : index
    %269 = vector.load %arg23[%c0_101, %c0_102] : memref<1x128xf32, #tpu.memory_space<vmem>>, vector<1x128xf32>
    %270 = vector.broadcast %269 : vector<1x128xf32> to vector<32x128xf32>
    %271 = arith.mulf %268, %270 : vector<32x128xf32>
    %c0_103 = arith.constant 0 : index
    %c0_104 = arith.constant 0 : index
    %272 = vector.load %arg28[%c0_103, %c0_104] : memref<1x128xf32, #tpu.memory_space<vmem>>, vector<1x128xf32>
    %273 = vector.broadcast %272 : vector<1x128xf32> to vector<32x128xf32>
    %274 = arith.addf %271, %273 : vector<32x128xf32>
    %cst_105 = arith.constant 0.000000e+00 : f32
    %275 = vector.broadcast %cst_105 : f32 to vector<32x128xf32>
    %276 = arith.maximumf %274, %275 : vector<32x128xf32>
    %277 = arith.truncf %276 : vector<32x128xf32> to vector<32x128xbf16>
    %c0_106 = arith.constant 0 : index
    %c0_107 = arith.constant 0 : index
    %278 = vector.load %arg7[%c0_106, %c0_107] : memref<128x512xbf16, #tpu.memory_space<vmem>>, vector<128x512xbf16>
    %cst_108 = arith.constant dense<0.000000e+00> : vector<32x512xf32>
    %279 = tpu.matmul %277, %278, %cst_108 {dimension_numbers = #tpu.dot_dimension_numbers<[1], [0], [0], [1], [0, 0, 1, 1], [], []>} : vector<32x128xbf16>, vector<128x512xbf16>, vector<32x512xf32> -> vector<32x512xf32>
    %280 = vector.extract_strided_slice %279 {offsets = [0, 0], sizes = [32, 128], strides = [1, 1]} : vector<32x512xf32> to vector<32x128xf32>
    %281 = vector.extract_strided_slice %279 {offsets = [0, 128], sizes = [32, 128], strides = [1, 1]} : vector<32x512xf32> to vector<32x128xf32>
    %282 = vector.extract_strided_slice %279 {offsets = [0, 256], sizes = [32, 128], strides = [1, 1]} : vector<32x512xf32> to vector<32x128xf32>
    %283 = vector.extract_strided_slice %279 {offsets = [0, 384], sizes = [32, 128], strides = [1, 1]} : vector<32x512xf32> to vector<32x128xf32>
    %284 = tpu.concatenate %280, %281, %282, %283 in 0 : vector<32x128xf32>, vector<32x128xf32>, vector<32x128xf32>, vector<32x128xf32> -> vector<128x128xf32>
    %285 = arith.truncf %284 : vector<128x128xf32> to vector<128x128xbf16>
    %c0_109 = arith.constant 0 : index
    %c0_110 = arith.constant 0 : index
    %286 = vector.load %arg13[%c0_109, %c0_110] : memref<64x128xbf16, #tpu.memory_space<vmem>>, vector<64x128xbf16>
    %cst_111 = arith.constant dense<0.000000e+00> : vector<64x128xf32>
    %287 = tpu.matmul %286, %285, %cst_111 {dimension_numbers = #tpu.dot_dimension_numbers<[1], [0], [0], [1], [0, 0, 1, 1], [], []>} : vector<64x128xbf16>, vector<128x128xbf16>, vector<64x128xf32> -> vector<64x128xf32>
    %288 = math.tanh %287 : vector<64x128xf32>
    %c0_112 = arith.constant 0 : index
    %c0_113 = arith.constant 0 : index
    %289 = vector.load %arg29[%c0_112, %c0_113] : memref<64x128xf32, #tpu.memory_space<vmem>>, vector<64x128xf32>
    tpu.vector_store %arg29[%c0_112, %c0_113], %288 {strides = array<i32>} : memref<64x128xf32, #tpu.memory_space<vmem>>, vector<64x128xf32>,
    return
  }
  func.func @transform_0(%arg0: i32) -> (i32, i32) {
    %c0_i32 = arith.constant 0 : i32
    %c0_i32_0 = arith.constant 0 : i32
    %c0_i32_1 = arith.constant 0 : i32
    return %c0_i32, %c0_i32_0 : i32, i32
  }
  func.func @transform_1(%arg0: i32) -> (i32, i32) {
    %c0_i32 = arith.constant 0 : i32
    %c0_i32_0 = arith.constant 0 : i32
    %c0_i32_1 = arith.constant 0 : i32
    return %c0_i32, %c0_i32_0 : i32, i32
  }
  func.func @transform_2(%arg0: i32) -> (i32, i32) {
    %c0_i32 = arith.constant 0 : i32
    %c0_i32_0 = arith.constant 0 : i32
    %c0_i32_1 = arith.constant 0 : i32
    return %c0_i32, %c0_i32_0 : i32, i32
  }
  func.func @transform_3(%arg0: i32) -> (i32, i32) {
    %c0_i32 = arith.constant 0 : i32
    %c0_i32_0 = arith.constant 0 : i32
    %c0_i32_1 = arith.constant 0 : i32
    return %c0_i32, %c0_i32_0 : i32, i32
  }
  func.func @transform_4(%arg0: i32) -> (i32, i32) {
    %c0_i32 = arith.constant 0 : i32
    %c0_i32_0 = arith.constant 0 : i32
    %c0_i32_1 = arith.constant 0 : i32
    return %c0_i32, %c0_i32_0 : i32, i32
  }
  func.func @transform_5(%arg0: i32) -> (i32, i32) {
    %c0_i32 = arith.constant 0 : i32
    %c0_i32_0 = arith.constant 0 : i32
    %c0_i32_1 = arith.constant 0 : i32
    return %c0_i32, %c0_i32_0 : i32, i32
  }
  func.func @transform_6(%arg0: i32) -> (i32, i32) {
    %c0_i32 = arith.constant 0 : i32
    %c0_i32_0 = arith.constant 0 : i32
    %c0_i32_1 = arith.constant 0 : i32
    return %c0_i32, %c0_i32_0 : i32, i32
  }
  func.func @transform_7(%arg0: i32) -> (i32, i32) {
    %c0_i32 = arith.constant 0 : i32
    %c0_i32_0 = arith.constant 0 : i32
    %c0_i32_1 = arith.constant 0 : i32
    return %c0_i32, %c0_i32_0 : i32, i32
  }
  func.func @transform_8(%arg0: i32) -> (i32, i32) {
    %c0_i32 = arith.constant 0 : i32
    %c0_i32_0 = arith.constant 0 : i32
    %c0_i32_1 = arith.constant 0 : i32
    return %c0_i32, %c0_i32_0 : i32, i32
  }
  func.func @transform_9(%arg0: i32) -> (i32, i32) {
    %c0_i32 = arith.constant 0 : i32
    %c0_i32_0 = arith.constant 0 : i32
    %c0_i32_1 = arith.constant 0 : i32
    return %c0_i32, %c0_i32_0 : i32, i32
  }
  func.func @transform_10(%arg0: i32) -> (i32, i32) {
    %c0_i32 = arith.constant 0 : i32
    %c0_i32_0 = arith.constant 0 : i32
    %c0_i32_1 = arith.constant 0 : i32
    return %c0_i32, %c0_i32_0 : i32, i32
  }
  func.func @transform_11(%arg0: i32) -> (i32, i32) {
    %c0_i32 = arith.constant 0 : i32
    %c0_i32_0 = arith.constant 0 : i32
    %c0_i32_1 = arith.constant 0 : i32
    return %c0_i32, %c0_i32_0 : i32, i32
  }
  func.func @transform_12(%arg0: i32) -> (i32, i32) {
    %c0_i32 = arith.constant 0 : i32
    %c0_i32_0 = arith.constant 0 : i32
    %c0_i32_1 = arith.constant 0 : i32
    return %c0_i32, %c0_i32_0 : i32, i32
  }
  func.func @transform_13(%arg0: i32) -> (i32, i32) {
    %c0_i32 = arith.constant 0 : i32
    %c0_i32_0 = arith.constant 0 : i32
    %c0_i32_1 = arith.constant 0 : i32
    return %c0_i32, %c0_i32_0 : i32, i32
  }
  func.func @transform_14(%arg0: i32) -> (i32, i32) {
    %c0_i32 = arith.constant 0 : i32
    %c0_i32_0 = arith.constant 0 : i32
    %c0_i32_1 = arith.constant 0 : i32
    return %c0_i32, %c0_i32_0 : i32, i32
  }
  func.func @transform_15(%arg0: i32) -> (i32, i32) {
    %c0_i32 = arith.constant 0 : i32
    %c0_i32_0 = arith.constant 0 : i32
    %c0_i32_1 = arith.constant 0 : i32
    return %c0_i32, %c0_i32_0 : i32, i32
  }
  func.func @transform_16(%arg0: i32) -> (i32, i32) {
    %c0_i32 = arith.constant 0 : i32
    %c0_i32_0 = arith.constant 0 : i32
    %c0_i32_1 = arith.constant 0 : i32
    return %c0_i32, %c0_i32_0 : i32, i32
  }
  func.func @transform_17(%arg0: i32) -> (i32, i32) {
    %c0_i32 = arith.constant 0 : i32
    %c0_i32_0 = arith.constant 0 : i32
    %c0_i32_1 = arith.constant 0 : i32
    return %c0_i32, %c0_i32_0 : i32, i32
  }
  func.func @transform_18(%arg0: i32) -> (i32, i32) {
    %c0_i32 = arith.constant 0 : i32
    %c0_i32_0 = arith.constant 0 : i32
    %c0_i32_1 = arith.constant 0 : i32
    return %c0_i32, %c0_i32_0 : i32, i32
  }
  func.func @transform_19(%arg0: i32) -> (i32, i32) {
    %c0_i32 = arith.constant 0 : i32
    %c0_i32_0 = arith.constant 0 : i32
    %c0_i32_1 = arith.constant 0 : i32
    return %c0_i32, %c0_i32_0 : i32, i32
  }
  func.func @transform_20(%arg0: i32) -> (i32, i32) {
    %c0_i32 = arith.constant 0 : i32
    %c0_i32_0 = arith.constant 0 : i32
    %c0_i32_1 = arith.constant 0 : i32
    return %c0_i32, %c0_i32_0 : i32, i32
  }
  func.func @transform_21(%arg0: i32) -> (i32, i32) {
    %c0_i32 = arith.constant 0 : i32
    %c0_i32_0 = arith.constant 0 : i32
    %c0_i32_1 = arith.constant 0 : i32
    return %c0_i32, %c0_i32_0 : i32, i32
  }
  func.func @transform_22(%arg0: i32) -> (i32, i32) {
    %c0_i32 = arith.constant 0 : i32
    %c0_i32_0 = arith.constant 0 : i32
    %c0_i32_1 = arith.constant 0 : i32
    return %c0_i32, %c0_i32_0 : i32, i32
  }
  func.func @transform_23(%arg0: i32) -> (i32, i32) {
    %c0_i32 = arith.constant 0 : i32
    %c0_i32_0 = arith.constant 0 : i32
    %c0_i32_1 = arith.constant 0 : i32
    return %c0_i32, %c0_i32_0 : i32, i32
  }
  func.func @transform_24(%arg0: i32) -> (i32, i32) {
    %c0_i32 = arith.constant 0 : i32
    %c0_i32_0 = arith.constant 0 : i32
    %c0_i32_1 = arith.constant 0 : i32
    return %c0_i32, %c0_i32_0 : i32, i32
  }
  func.func @transform_25(%arg0: i32) -> (i32, i32) {
    %c0_i32 = arith.constant 0 : i32
    %c0_i32_0 = arith.constant 0 : i32
    %c0_i32_1 = arith.constant 0 : i32
    return %c0_i32, %c0_i32_0 : i32, i32
  }
  func.func @transform_26(%arg0: i32) -> (i32, i32) {
    %c0_i32 = arith.constant 0 : i32
    %c0_i32_0 = arith.constant 0 : i32
    %c0_i32_1 = arith.constant 0 : i32
    return %c0_i32, %c0_i32_0 : i32, i32
  }
  func.func @transform_27(%arg0: i32) -> (i32, i32) {
    %c0_i32 = arith.constant 0 : i32
    %c0_i32_0 = arith.constant 0 : i32
    %c0_i32_1 = arith.constant 0 : i32
    return %c0_i32, %c0_i32_0 : i32, i32
  }
  func.func @transform_28(%arg0: i32) -> (i32, i32) {
    %c0_i32 = arith.constant 0 : i32
    %c0_i32_0 = arith.constant 0 : i32
    %c0_i32_1 = arith.constant 0 : i32
    return %c0_i32, %c0_i32_0 : i32, i32
  }
}

</mosaic_0001>

<llo_original>
// kernel: forward.1
$region0: #{forward.1}
  #allocation0 [shape = 'u32[]', space=smem, size = 0x4, offset = 0x4, fixed_abs, tag = 'smem constant byte address 0x4 - core index']
  #allocation1 [shape = 'u32[72,128]{1,0:T(1,128)}', space=vmem, size = 0x9000, scoped, tag = 'internal scratch']
  %s0 = inlined_call_operand.vmem [shape: f32[1,32], index: 0, kind: input, shape index: {}]
  %s1 = inlined_call_operand.hbm [shape: bf16[32,256], index: 1, kind: input, shape index: {}]
  %s2 = inlined_call_operand.hbm [shape: bf16[128,512], index: 2, kind: input, shape index: {}]
  %s3 = inlined_call_operand.hbm [shape: bf16[128,512], index: 3, kind: input, shape index: {}]
  %s4 = inlined_call_operand.hbm [shape: bf16[128,512], index: 4, kind: input, shape index: {}]
  %s5 = inlined_call_operand.hbm [shape: bf16[128,512], index: 5, kind: input, shape index: {}]
  %s6 = inlined_call_operand.hbm [shape: bf16[128,512], index: 6, kind: input, shape index: {}]
  %s7 = inlined_call_operand.hbm [shape: bf16[2,2], index: 7, kind: input, shape index: {}]
  %s8 = inlined_call_operand.vmem [shape: bf16[4,8], index: 8, kind: input, shape index: {}]
  %s9 = inlined_call_operand.vmem [shape: bf16[8,16], index: 9, kind: input, shape index: {}]
  %s10 = inlined_call_operand.vmem [shape: bf16[16,32], index: 10, kind: input, shape index: {}]
  %s11 = inlined_call_operand.hbm [shape: bf16[32,64], index: 11, kind: input, shape index: {}]
  %s12 = inlined_call_operand.hbm [shape: bf16[64,128], index: 12, kind: input, shape index: {}]
  %s13 = inlined_call_operand.hbm [shape: bf16[128,128], index: 13, kind: input, shape index: {}]
  %s14 = inlined_call_operand.hbm [shape: bf16[128,128], index: 14, kind: input, shape index: {}]
  %s15 = inlined_call_operand.hbm [shape: bf16[128,128], index: 15, kind: input, shape index: {}]
  %s16 = inlined_call_operand.hbm [shape: bf16[128,128], index: 16, kind: input, shape index: {}]
  %s17 = inlined_call_operand.hbm [shape: bf16[128,128], index: 17, kind: input, shape index: {}]
  %s18 = inlined_call_operand.vmem [shape: f32[1,128], index: 18, kind: input, shape index: {}]
  %s19 = inlined_call_operand.vmem [shape: f32[1,128], index: 19, kind: input, shape index: {}]
  %s20 = inlined_call_operand.vmem [shape: f32[1,128], index: 20, kind: input, shape index: {}]
  %s21 = inlined_call_operand.vmem [shape: f32[1,128], index: 21, kind: input, shape index: {}]
  %s22 = inlined_call_operand.vmem [shape: f32[1,128], index: 22, kind: input, shape index: {}]
  %s23 = inlined_call_operand.vmem [shape: f32[1,128], index: 23, kind: input, shape index: {}]
  %s24 = inlined_call_operand.vmem [shape: f32[1,128], index: 24, kind: input, shape index: {}]
  %s25 = inlined_call_operand.vmem [shape: f32[1,128], index: 25, kind: input, shape index: {}]
  %s26 = inlined_call_operand.vmem [shape: f32[1,128], index: 26, kind: input, shape index: {}]
  %s27 = inlined_call_operand.vmem [shape: f32[1,128], index: 27, kind: input, shape index: {}]
  %s28 = inlined_call_operand.vmem [shape: f32[64,128], index: 28, kind: output, shape index: {}]
  %s29 = sld [smem:[#allocation0]]
  $region178: #{forward.1} parent=0
    _
  %s31 = ssub.s32 1, %s29
  %s32 = scalar_select 0, %s31, %s29
  $region1: #{forward.1} parent=0
    #allocation2 [shape = 'u8[16384]{0}', space=vmem, size = 0x4000, scoped, tag = 'input window, operand 1, single buffered']
    #allocation3 [shape = 's32[1]{0}', space=sflag, size = 0x4, scoped, tag = 'scoped memory for forward.1']
    #allocation4 [shape = 'u8[131072]{0}', space=vmem, size = 0x20000, scoped, tag = 'input window, operand 2, single buffered']
    #allocation5 [shape = 's32[1]{0}', space=sflag, size = 0x4, scoped, tag = 'scoped memory for forward.1']
    #allocation6 [shape = 'u8[131072]{0}', space=vmem, size = 0x20000, scoped, tag = 'input window, operand 3, single buffered']
    #allocation7 [shape = 'u8[131072]{0}', space=vmem, size = 0x20000, scoped, tag = 'input window, operand 4, single buffered']
    #allocation8 [shape = 's32[1]{0}', space=sflag, size = 0x4, scoped, tag = 'scoped memory for forward.1']
    #allocation9 [shape = 'u8[131072]{0}', space=vmem, size = 0x20000, scoped, tag = 'input window, operand 5, single buffered']
    #allocation10 [shape = 'u8[131072]{0}', space=vmem, size = 0x20000, scoped, tag = 'input window, operand 6, single buffered']
    #allocation11 [shape = 's32[1]{0}', space=sflag, size = 0x4, scoped, tag = 'scoped memory for forward.1']
    #allocation12 [shape = 'u8[512]{0}', space=vmem, size = 0x400, scoped, tag = 'input window, operand 7, single buffered']
    #allocation13 [shape = 'u8[8192]{0}', space=vmem, size = 0x2000, scoped, tag = 'input window, operand 11, single buffered']
    #allocation14 [shape = 's32[1]{0}', space=sflag, size = 0x4, scoped, tag = 'scoped memory for forward.1']
    #allocation15 [shape = 'u8[16384]{0}', space=vmem, size = 0x4000, scoped, tag = 'input window, operand 12, single buffered']
    #allocation16 [shape = 'u8[32768]{0}', space=vmem, size = 0x8000, scoped, tag = 'input window, operand 13, single buffered']
    #allocation17 [shape = 's32[1]{0}', space=sflag, size = 0x4, scoped, tag = 'scoped memory for forward.1']
    #allocation18 [shape = 'u8[32768]{0}', space=vmem, size = 0x8000, scoped, tag = 'input window, operand 14, single buffered']
    #allocation19 [shape = 'u8[32768]{0}', space=vmem, size = 0x8000, scoped, tag = 'input window, operand 15, single buffered']
    #allocation20 [shape = 's32[1]{0}', space=sflag, size = 0x4, scoped, tag = 'scoped memory for forward.1']
    #allocation21 [shape = 'u8[32768]{0}', space=vmem, size = 0x8000, scoped, tag = 'input window, operand 16, single buffered']
    #allocation22 [shape = 'u8[32768]{0}', space=vmem, size = 0x8000, scoped, tag = 'input window, operand 17, single buffered']
    #allocation23 [shape = 's32[1]{0}', space=sflag, size = 0x4, scoped, tag = 'scoped memory for forward.1']
    %33 = vsyncpa [#allocation3], 0
    %34 = vsyncpa [#allocation5], 0
    %35 = vsyncpa [#allocation8], 0
    %36 = vsyncpa [#allocation11], 0
    %37 = vsyncpa [#allocation14], 0
    %38 = vsyncpa [#allocation17], 0
    %39 = vsyncpa [#allocation20], 0
    %40 = vsyncpa [#allocation23], 0
    // Predicated region
    $region2: #{forward.1} parent=1 // pred_check
      _
    $region3: #{forward.1} parent=1 // pred_check_branch
      %42 = sbr.rel (0) target = $region5
    $region4: #{forward.1} parent=1 // pred_region
      _
    $region5: #{forward.1} parent=1 // pred_fallthru
      _
    // Predicated region
    $region6: #{forward.1} parent=1 // pred_check
      _
    $region7: #{forward.1} parent=1 // pred_check_branch
      %44 = sbr.rel (0) target = $region9
    $region8: #{forward.1} parent=1 // pred_region
      %46 = vsyncadd [#allocation3], 0
      %s47 = sshll.u32 %s1, 4
      %s48 = int_to_ptr.hbm [resolvable:$true] %s47
      %s49 = sshll.u32 [#allocation2], 4
      %s50 = int_to_ptr.vmem [resolvable:$true] %s49
      %55 = dma.hbm_to_vmem [thread:$0]  %s48, 512, %s50, [#allocation3], 128, 128, 8
    $region9: #{forward.1} parent=1 // pred_fallthru
      _
    // Predicated region
    $region10: #{forward.1} parent=1 // pred_check
      _
    $region11: #{forward.1} parent=1 // pred_check_branch
      %57 = sbr.rel (0) target = $region13
    $region12: #{forward.1} parent=1 // pred_region
      %59 = vsyncadd [#allocation5], 0
      %s60 = sshll.u32 %s2, 4
      %s61 = int_to_ptr.hbm [resolvable:$true] %s60
      %s62 = sshll.u32 [#allocation4], 4
      %s63 = int_to_ptr.vmem [resolvable:$true] %s62
      %68 = dma.hbm_to_vmem [thread:$0]  %s61, 4096, %s63, [#allocation5], 256, 256, 16
    $region13: #{forward.1} parent=1 // pred_fallthru
      _
    // Predicated region
    $region14: #{forward.1} parent=1 // pred_check
      _
    $region15: #{forward.1} parent=1 // pred_check_branch
      %70 = sbr.rel (0) target = $region17
    $region16: #{forward.1} parent=1 // pred_region
      %72 = vsyncadd [#allocation5], 0
      %s73 = sshll.u32 %s3, 4
      %s74 = int_to_ptr.hbm [resolvable:$true] %s73
      %s75 = sshll.u32 [#allocation6], 4
      %s76 = int_to_ptr.vmem [resolvable:$true] %s75
      %81 = dma.hbm_to_vmem [thread:$0]  %s74, 4096, %s76, [#allocation5], 256, 256, 16
    $region17: #{forward.1} parent=1 // pred_fallthru
      _
    // Predicated region
    $region18: #{forward.1} parent=1 // pred_check
      _
    $region19: #{forward.1} parent=1 // pred_check_branch
      %83 = sbr.rel (0) target = $region21
    $region20: #{forward.1} parent=1 // pred_region
      %85 = vsyncadd [#allocation8], 0
      %s86 = sshll.u32 %s4, 4
      %s87 = int_to_ptr.hbm [resolvable:$true] %s86
      %s88 = sshll.u32 [#allocation7], 4
      %s89 = int_to_ptr.vmem [resolvable:$true] %s88
      %94 = dma.hbm_to_vmem [thread:$0]  %s87, 4096, %s89, [#allocation8], 256, 256, 16
    $region21: #{forward.1} parent=1 // pred_fallthru
      _
    // Predicated region
    $region22: #{forward.1} parent=1 // pred_check
      _
    $region23: #{forward.1} parent=1 // pred_check_branch
      %96 = sbr.rel (0) target = $region25
    $region24: #{forward.1} parent=1 // pred_region
      %98 = vsyncadd [#allocation8], 0
      %s99 = sshll.u32 %s5, 4
      %s100 = int_to_ptr.hbm [resolvable:$true] %s99
      %s101 = sshll.u32 [#allocation9], 4
      %s102 = int_to_ptr.vmem [resolvable:$true] %s101
      %107 = dma.hbm_to_vmem [thread:$0]  %s100, 4096, %s102, [#allocation8], 256, 256, 16
    $region25: #{forward.1} parent=1 // pred_fallthru
      _
    // Predicated region
    $region26: #{forward.1} parent=1 // pred_check
      _
    $region27: #{forward.1} parent=1 // pred_check_branch
      %109 = sbr.rel (0) target = $region29
    $region28: #{forward.1} parent=1 // pred_region
      %111 = vsyncadd [#allocation11], 0
      %s112 = sshll.u32 %s6, 4
      %s113 = int_to_ptr.hbm [resolvable:$true] %s112
      %s114 = sshll.u32 [#allocation10], 4
      %s115 = int_to_ptr.vmem [resolvable:$true] %s114
      %120 = dma.hbm_to_vmem [thread:$0]  %s113, 4096, %s115, [#allocation11], 256, 256, 16
    $region29: #{forward.1} parent=1 // pred_fallthru
      _
    // Predicated region
    $region30: #{forward.1} parent=1 // pred_check
      _
    $region31: #{forward.1} parent=1 // pred_check_branch
      %122 = sbr.rel (0) target = $region33
    $region32: #{forward.1} parent=1 // pred_region
      %124 = vsyncadd [#allocation11], 0
      %s126 = sshll.u32 %s7, 4
      %s127 = int_to_ptr.hbm [resolvable:$true] %s126
      %s128 = sshll.u32 [#allocation12], 4
      %s129 = int_to_ptr.vmem [resolvable:$true] %s128
      %131 = dma.hbm_to_vmem [thread:$0]  %s127, 16, %s129, [#allocation11]
    $region33: #{forward.1} parent=1 // pred_fallthru
      _
    // Predicated region
    $region34: #{forward.1} parent=1 // pred_check
      _
    $region35: #{forward.1} parent=1 // pred_check_branch
      %133 = sbr.rel (0) target = $region37
    $region36: #{forward.1} parent=1 // pred_region
      _
    $region37: #{forward.1} parent=1 // pred_fallthru
      _
    // Predicated region
    $region38: #{forward.1} parent=1 // pred_check
      _
    $region39: #{forward.1} parent=1 // pred_check_branch
      %135 = sbr.rel (0) target = $region41
    $region40: #{forward.1} parent=1 // pred_region
      _
    $region41: #{forward.1} parent=1 // pred_fallthru
      _
    // Predicated region
    $region42: #{forward.1} parent=1 // pred_check
      _
    $region43: #{forward.1} parent=1 // pred_check_branch
      %137 = sbr.rel (0) target = $region45
    $region44: #{forward.1} parent=1 // pred_region
      _
    $region45: #{forward.1} parent=1 // pred_fallthru
      _
    // Predicated region
    $region46: #{forward.1} parent=1 // pred_check
      _
    $region47: #{forward.1} parent=1 // pred_check_branch
      %139 = sbr.rel (0) target = $region49
    $region48: #{forward.1} parent=1 // pred_region
      %141 = vsyncadd [#allocation14], 0
      %s142 = sshll.u32 %s11, 4
      %s143 = int_to_ptr.hbm [resolvable:$true] %s142
      %s144 = sshll.u32 [#allocation13], 4
      %s145 = int_to_ptr.vmem [resolvable:$true] %s144
      %150 = dma.hbm_to_vmem [thread:$0]  %s143, 256, %s145, [#allocation14], 64, 64, 4
    $region49: #{forward.1} parent=1 // pred_fallthru
      _
    // Predicated region
    $region50: #{forward.1} parent=1 // pred_check
      _
    $region51: #{forward.1} parent=1 // pred_check_branch
      %152 = sbr.rel (0) target = $region53
    $region52: #{forward.1} parent=1 // pred_region
      %154 = vsyncadd [#allocation14], 0
      %s155 = sshll.u32 %s12, 4
      %s156 = int_to_ptr.hbm [resolvable:$true] %s155
      %s157 = sshll.u32 [#allocation15], 4
      %s158 = int_to_ptr.vmem [resolvable:$true] %s157
      %163 = dma.hbm_to_vmem [thread:$0]  %s156, 512, %s158, [#allocation14], 64, 64, 4
    $region53: #{forward.1} parent=1 // pred_fallthru
      _
    // Predicated region
    $region54: #{forward.1} parent=1 // pred_check
      _
    $region55: #{forward.1} parent=1 // pred_check_branch
      %165 = sbr.rel (0) target = $region57
    $region56: #{forward.1} parent=1 // pred_region
      %167 = vsyncadd [#allocation17], 0
      %s168 = sshll.u32 %s13, 4
      %s169 = int_to_ptr.hbm [resolvable:$true] %s168
      %s170 = sshll.u32 [#allocation16], 4
      %s171 = int_to_ptr.vmem [resolvable:$true] %s170
      %176 = dma.hbm_to_vmem [thread:$0]  %s169, 1024, %s171, [#allocation17], 64, 64, 4
    $region57: #{forward.1} parent=1 // pred_fallthru
      _
    // Predicated region
    $region58: #{forward.1} parent=1 // pred_check
      _
    $region59: #{forward.1} parent=1 // pred_check_branch
      %178 = sbr.rel (0) target = $region61
    $region60: #{forward.1} parent=1 // pred_region
      %180 = vsyncadd [#allocation17], 0
      %s181 = sshll.u32 %s14, 4
      %s182 = int_to_ptr.hbm [resolvable:$true] %s181
      %s183 = sshll.u32 [#allocation18], 4
      %s184 = int_to_ptr.vmem [resolvable:$true] %s183
      %189 = dma.hbm_to_vmem [thread:$0]  %s182, 1024, %s184, [#allocation17], 64, 64, 4
    $region61: #{forward.1} parent=1 // pred_fallthru
      _
    // Predicated region
    $region62: #{forward.1} parent=1 // pred_check
      _
    $region63: #{forward.1} parent=1 // pred_check_branch
      %191 = sbr.rel (0) target = $region65
    $region64: #{forward.1} parent=1 // pred_region
      %193 = vsyncadd [#allocation20], 0
      %s194 = sshll.u32 %s15, 4
      %s195 = int_to_ptr.hbm [resolvable:$true] %s194
      %s196 = sshll.u32 [#allocation19], 4
      %s197 = int_to_ptr.vmem [resolvable:$true] %s196
      %202 = dma.hbm_to_vmem [thread:$0]  %s195, 1024, %s197, [#allocation20], 64, 64, 4
    $region65: #{forward.1} parent=1 // pred_fallthru
      _
    // Predicated region
    $region66: #{forward.1} parent=1 // pred_check
      _
    $region67: #{forward.1} parent=1 // pred_check_branch
      %204 = sbr.rel (0) target = $region69
    $region68: #{forward.1} parent=1 // pred_region
      %206 = vsyncadd [#allocation20], 0
      %s207 = sshll.u32 %s16, 4
      %s208 = int_to_ptr.hbm [resolvable:$true] %s207
      %s209 = sshll.u32 [#allocation21], 4
      %s210 = int_to_ptr.vmem [resolvable:$true] %s209
      %215 = dma.hbm_to_vmem [thread:$0]  %s208, 1024, %s210, [#allocation20], 64, 64, 4
    $region69: #{forward.1} parent=1 // pred_fallthru
      _
    // Predicated region
    $region70: #{forward.1} parent=1 // pred_check
      _
    $region71: #{forward.1} parent=1 // pred_check_branch
      %217 = sbr.rel (0) target = $region73
    $region72: #{forward.1} parent=1 // pred_region
      %219 = vsyncadd [#allocation23], 0
      %s220 = sshll.u32 %s17, 4
      %s221 = int_to_ptr.hbm [resolvable:$true] %s220
      %s222 = sshll.u32 [#allocation22], 4
      %s223 = int_to_ptr.vmem [resolvable:$true] %s222
      %228 = dma.hbm_to_vmem [thread:$0]  %s221, 1024, %s223, [#allocation23], 64, 64, 4
    $region73: #{forward.1} parent=1 // pred_fallthru
      _
    // Predicated region
    $region74: #{forward.1} parent=1 // pred_check
      _
    $region75: #{forward.1} parent=1 // pred_check_branch
      %230 = sbr.rel (0) target = $region77
    $region76: #{forward.1} parent=1 // pred_region
      _
    $region77: #{forward.1} parent=1 // pred_fallthru
      _
    // Predicated region
    $region78: #{forward.1} parent=1 // pred_check
      _
    $region79: #{forward.1} parent=1 // pred_check_branch
      %232 = sbr.rel (0) target = $region81
    $region80: #{forward.1} parent=1 // pred_region
      _
    $region81: #{forward.1} parent=1 // pred_fallthru
      _
    // Predicated region
    $region82: #{forward.1} parent=1 // pred_check
      _
    $region83: #{forward.1} parent=1 // pred_check_branch
      %234 = sbr.rel (0) target = $region85
    $region84: #{forward.1} parent=1 // pred_region
      _
    $region85: #{forward.1} parent=1 // pred_fallthru
      _
    // Predicated region
    $region86: #{forward.1} parent=1 // pred_check
      _
    $region87: #{forward.1} parent=1 // pred_check_branch
      %236 = sbr.rel (0) target = $region89
    $region88: #{forward.1} parent=1 // pred_region
      _
    $region89: #{forward.1} parent=1 // pred_fallthru
      _
    // Predicated region
    $region90: #{forward.1} parent=1 // pred_check
      _
    $region91: #{forward.1} parent=1 // pred_check_branch
      %238 = sbr.rel (0) target = $region93
    $region92: #{forward.1} parent=1 // pred_region
      _
    $region93: #{forward.1} parent=1 // pred_fallthru
      _
    // Predicated region
    $region94: #{forward.1} parent=1 // pred_check
      _
    $region95: #{forward.1} parent=1 // pred_check_branch
      %240 = sbr.rel (0) target = $region97
    $region96: #{forward.1} parent=1 // pred_region
      _
    $region97: #{forward.1} parent=1 // pred_fallthru
      _
    // Predicated region
    $region98: #{forward.1} parent=1 // pred_check
      _
    $region99: #{forward.1} parent=1 // pred_check_branch
      %242 = sbr.rel (0) target = $region101
    $region100: #{forward.1} parent=1 // pred_region
      _
    $region101: #{forward.1} parent=1 // pred_fallthru
      _
    // Predicated region
    $region102: #{forward.1} parent=1 // pred_check
      _
    $region103: #{forward.1} parent=1 // pred_check_branch
      %244 = sbr.rel (0) target = $region105
    $region104: #{forward.1} parent=1 // pred_region
      _
    $region105: #{forward.1} parent=1 // pred_fallthru
      _
    // Predicated region
    $region106: #{forward.1} parent=1 // pred_check
      _
    $region107: #{forward.1} parent=1 // pred_check_branch
      %246 = sbr.rel (0) target = $region109
    $region108: #{forward.1} parent=1 // pred_region
      _
    $region109: #{forward.1} parent=1 // pred_fallthru
      _
    // Predicated region
    $region110: #{forward.1} parent=1 // pred_check
      _
    $region111: #{forward.1} parent=1 // pred_check_branch
      %248 = sbr.rel (0) target = $region113
    $region112: #{forward.1} parent=1 // pred_region
      _
    $region113: #{forward.1} parent=1 // pred_fallthru
      _
    // Predicated region
    $region114: #{forward.1} parent=1 // pred_check
      _
    $region115: #{forward.1} parent=1 // pred_check_branch
      %250 = sbr.rel (0) target = $region117
    $region116: #{forward.1} parent=1 // pred_region
      %252 = dma.done [#allocation3], 512
    $region117: #{forward.1} parent=1 // pred_fallthru
      _
    // Predicated region
    $region118: #{forward.1} parent=1 // pred_check
      _
    $region119: #{forward.1} parent=1 // pred_check_branch
      %254 = sbr.rel (0) target = $region121
    $region120: #{forward.1} parent=1 // pred_region
      %256 = dma.done [#allocation5], 4096
    $region121: #{forward.1} parent=1 // pred_fallthru
      _
    // Predicated region
    $region122: #{forward.1} parent=1 // pred_check
      _
    $region123: #{forward.1} parent=1 // pred_check_branch
      %258 = sbr.rel (0) target = $region125
    $region124: #{forward.1} parent=1 // pred_region
      %260 = dma.done [#allocation5], 4096
    $region125: #{forward.1} parent=1 // pred_fallthru
      _
    // Predicated region
    $region126: #{forward.1} parent=1 // pred_check
      _
    $region127: #{forward.1} parent=1 // pred_check_branch
      %262 = sbr.rel (0) target = $region129
    $region128: #{forward.1} parent=1 // pred_region
      %264 = dma.done [#allocation8], 4096
    $region129: #{forward.1} parent=1 // pred_fallthru
      _
    // Predicated region
    $region130: #{forward.1} parent=1 // pred_check
      _
    $region131: #{forward.1} parent=1 // pred_check_branch
      %266 = sbr.rel (0) target = $region133
    $region132: #{forward.1} parent=1 // pred_region
      %268 = dma.done [#allocation8], 4096
    $region133: #{forward.1} parent=1 // pred_fallthru
      _
    // Predicated region
    $region134: #{forward.1} parent=1 // pred_check
      _
    $region135: #{forward.1} parent=1 // pred_check_branch
      %270 = sbr.rel (0) target = $region137
    $region136: #{forward.1} parent=1 // pred_region
      %272 = dma.done [#allocation11], 4096
    $region137: #{forward.1} parent=1 // pred_fallthru
      _
    // Predicated region
    $region138: #{forward.1} parent=1 // pred_check
      _
    $region139: #{forward.1} parent=1 // pred_check_branch
      %274 = sbr.rel (0) target = $region141
    $region140: #{forward.1} parent=1 // pred_region
      %276 = dma.done [#allocation11], 16
    $region141: #{forward.1} parent=1 // pred_fallthru
      _
    // Predicated region
    $region142: #{forward.1} parent=1 // pred_check
      _
    $region143: #{forward.1} parent=1 // pred_check_branch
      %278 = sbr.rel (0) target = $region145
    $region144: #{forward.1} parent=1 // pred_region
      %280 = dma.done [#allocation14], 256
    $region145: #{forward.1} parent=1 // pred_fallthru
      _
    // Predicated region
    $region146: #{forward.1} parent=1 // pred_check
      _
    $region147: #{forward.1} parent=1 // pred_check_branch
      %282 = sbr.rel (0) target = $region149
    $region148: #{forward.1} parent=1 // pred_region
      %284 = dma.done [#allocation14], 512
    $region149: #{forward.1} parent=1 // pred_fallthru
      _
    // Predicated region
    $region150: #{forward.1} parent=1 // pred_check
      _
    $region151: #{forward.1} parent=1 // pred_check_branch
      %286 = sbr.rel (0) target = $region153
    $region152: #{forward.1} parent=1 // pred_region
      %288 = dma.done [#allocation17], 1024
    $region153: #{forward.1} parent=1 // pred_fallthru
      _
    // Predicated region
    $region154: #{forward.1} parent=1 // pred_check
      _
    $region155: #{forward.1} parent=1 // pred_check_branch
      %290 = sbr.rel (0) target = $region157
    $region156: #{forward.1} parent=1 // pred_region
      %292 = dma.done [#allocation17], 1024
    $region157: #{forward.1} parent=1 // pred_fallthru
      _
    // Predicated region
    $region158: #{forward.1} parent=1 // pred_check
      _
    $region159: #{forward.1} parent=1 // pred_check_branch
      %294 = sbr.rel (0) target = $region161
    $region160: #{forward.1} parent=1 // pred_region
      %296 = dma.done [#allocation20], 1024
    $region161: #{forward.1} parent=1 // pred_fallthru
      _
    // Predicated region
    $region162: #{forward.1} parent=1 // pred_check
      _
    $region163: #{forward.1} parent=1 // pred_check_branch
      %298 = sbr.rel (0) target = $region165
    $region164: #{forward.1} parent=1 // pred_region
      %300 = dma.done [#allocation20], 1024
    $region165: #{forward.1} parent=1 // pred_fallthru
      _
    // Predicated region
    $region166: #{forward.1} parent=1 // pred_check
      _
    $region167: #{forward.1} parent=1 // pred_check_branch
      %302 = sbr.rel (0) target = $region169
    $region168: #{forward.1} parent=1 // pred_region
      %304 = dma.done [#allocation23], 1024
    $region169: #{forward.1} parent=1 // pred_fallthru
      _
    %v306 = vld [vmem:[%s0] sm:$0x1]
    %v307 = vpack.c.bf16 %v306, %v306
    %v308 = vld [vmem:[#allocation2] sm:$0xff]
    %v309 = vld [vmem:[#allocation2 + $0x8] sm:$0xff]
    %v310 = vld [vmem:[#allocation2 + $0x10] sm:$0xff]
    %v311 = vld [vmem:[#allocation2 + $0x18] sm:$0xff]
    %v316 = vunpack.c.l.b16 %v308
    %v317 = vunpack.c.h.b16 %v308
    %v318 = vunpack.c.l.b16 %v309
    %v319 = vunpack.c.h.b16 %v309
    %v320 = vunpack.c.l.b16 %v310
    %v321 = vunpack.c.h.b16 %v310
    %v322 = vunpack.c.l.b16 %v311
    %v323 = vunpack.c.h.b16 %v311
    %v324 = vpack.c.b16 %v318, %v316
    %v325 = vpack.c.b16 %v319, %v317
    %v326 = vpack.c.b16 %v322, %v320
    %v327 = vpack.c.b16 %v323, %v321
    %vm332 = vcmask 261120
    %v334 = vsel %vm332, %v307, 0
    %336 = vmatpush.bf16.msra.mxu0 0
    %337 = vmatpush.bf16.msra.mxu0 0
    %338 = vmatpush.bf16.msra.mxu0 0
    %339 = vmatpush.bf16.msra.mxu0 0
    %340 = vmatpush.bf16.msra.mxu0 0
    %341 = vmatpush.bf16.msra.mxu0 0
    %342 = vmatpush.bf16.msra.mxu0 %v326
    %343 = vmatpush.bf16.msra.mxu0 %v324
    %344 = vmatmul.bf16.gmra.mxu0 %v334
    %v345 = vpop.f32.mrf.mxu0
    %v346 = vadd.f32 0.0, %v345
    %v347 = vpop.f32.mrf.mxu0
    %348 = vdwg.mxu0
    %349 = vmatpush.bf16.msra.mxu0 0
    %350 = vmatpush.bf16.msra.mxu0 0
    %351 = vmatpush.bf16.msra.mxu0 0
    %352 = vmatpush.bf16.msra.mxu0 0
    %353 = vmatpush.bf16.msra.mxu0 0
    %354 = vmatpush.bf16.msra.mxu0 0
    %355 = vmatpush.bf16.msra.mxu0 %v327
    %356 = vmatpush.bf16.msra.mxu0 %v325
    %357 = vmatmul.bf16.gmra.mxu0 %v334
    %v358 = vpop.f32.mrf.mxu0
    %v359 = vadd.f32 0.0, %v358
    %v360 = vpop.f32.mrf.mxu0
    %361 = vdwg.mxu0
    %v362 = vld [vmem:[#allocation12] sm:$0x1]
    %v363 = vpack.c.bf16 %v346, %v346
    %v364 = vpack.c.bf16 %v359, %v359
    %366 = vst [vmem:[#allocation1] ss:$9 sm:$0xff] %v362
    %v367 = vld [vmem:[#allocation1] sm:$0xff]
    %369 = vrot.lane.b32.xlu0 %v367, 127
    %v370 = vpop.permute.xlu0 %369
    %vm371 = vcmask 7168
    %v373 = vsel %vm371, %v370, 0
    %vm375 = vcmask 1040384
    %v376 = vsel 0, 4294967295, 65535
    %v377 = vsel %vm375, %v376, 0
    %v379 = vand.u32 %v364, %v377
    %381 = vmatpush.bf16.msra.mxu0 0
    %382 = vmatpush.bf16.msra.mxu0 0
    %383 = vmatpush.bf16.msra.mxu0 0
    %384 = vmatpush.bf16.msra.mxu0 0
    %385 = vmatpush.bf16.msra.mxu0 0
    %386 = vmatpush.bf16.msra.mxu0 0
    %387 = vmatpush.bf16.msra.mxu0 0
    %388 = vmatpush.bf16.msra.mxu0 %v379
    %389 = vmatmul.bf16.gmra.mxu0 %v373
    %v390 = vpop.f32.mrf.mxu0
    %v391 = vadd.f32 0.0, %v390
    %v392 = vpop.f32.mrf.mxu0
    %393 = vdwg.mxu0
    %v394 = vsel %vm371, %v362, 0
    %v397 = vand.u32 %v363, %v377
    %399 = vmatpush.bf16.msra.mxu0 0
    %400 = vmatpush.bf16.msra.mxu0 0
    %401 = vmatpush.bf16.msra.mxu0 0
    %402 = vmatpush.bf16.msra.mxu0 0
    %403 = vmatpush.bf16.msra.mxu0 0
    %404 = vmatpush.bf16.msra.mxu0 0
    %405 = vmatpush.bf16.msra.mxu0 0
    %406 = vmatpush.bf16.msra.mxu0 %v397
    %407 = vmatmul.bf16.gmra.mxu0 %v394
    %v408 = vpop.f32.mrf.mxu0
    %v409 = vadd.f32 %v391, %v408
    %v410 = vpop.f32.mrf.mxu0
    %411 = vdwg.mxu0
    %vm412 = vcmask 1041408
    %v413 = vsel %vm412, %v409, 0.0
    %v414 = vrot.slane %v413, 4
    %v415 = vadd.f32 %v413, %v414
    %v416 = vrot.slane %v415, 2
    %v417 = vadd.f32 %v415, %v416
    %v418 = vrot.slane %v417, 1
    %v419 = vadd.f32 %v417, %v418
    %v420 = vmul.f32 %v409, %v409
    %v421 = vsel %vm412, %v420, 0.0
    %v422 = vrot.slane %v421, 4
    %v423 = vadd.f32 %v421, %v422
    %v424 = vrot.slane %v423, 2
    %v425 = vadd.f32 %v423, %v424
    %v426 = vrot.slane %v425, 1
    %v427 = vadd.f32 %v425, %v426
    %v428 = vlaneseq
    %v429 = vshrl.u32 %v428, 7
    %vm430 = vcmp.eq.s32.totalorder %v429, 0
    %v431 = vsel %vm430, %v419, %v427
    %v432 = vpack.c.bf16 %v431, %v431
    %v433 = vld [vmem:[#allocation16] sm:$0xf]
    %v434 = vld [vmem:[#allocation16 + $0x4] sm:$0xf]
    %v435 = vld [vmem:[#allocation16 + $0x8] sm:$0xf]
    %v436 = vld [vmem:[#allocation16 + $0xc] sm:$0xf]
    %v437 = vld [vmem:[#allocation16 + $0x10] sm:$0xf]
    %v438 = vld [vmem:[#allocation16 + $0x14] sm:$0xf]
    %v439 = vld [vmem:[#allocation16 + $0x18] sm:$0xf]
    %v440 = vld [vmem:[#allocation16 + $0x1c] sm:$0xf]
    %v441 = vld [vmem:[#allocation16 + $0x20] sm:$0xf]
    %v442 = vld [vmem:[#allocation16 + $0x24] sm:$0xf]
    %v443 = vld [vmem:[#allocation16 + $0x28] sm:$0xf]
    %v444 = vld [vmem:[#allocation16 + $0x2c] sm:$0xf]
    %v445 = vld [vmem:[#allocation16 + $0x30] sm:$0xf]
    %v446 = vld [vmem:[#allocation16 + $0x34] sm:$0xf]
    %v447 = vld [vmem:[#allocation16 + $0x38] sm:$0xf]
    %v448 = vld [vmem:[#allocation16 + $0x3c] sm:$0xf]
    %v465 = vunpack.c.l.b16 %v433
    %v466 = vunpack.c.l.b16 %v434
    %v467 = vunpack.c.l.b16 %v435
    %v468 = vunpack.c.l.b16 %v436
    %v469 = vunpack.c.l.b16 %v437
    %v470 = vunpack.c.l.b16 %v438
    %v471 = vunpack.c.l.b16 %v439
    %v472 = vunpack.c.l.b16 %v440
    %v473 = vunpack.c.l.b16 %v441
    %v474 = vunpack.c.l.b16 %v442
    %v475 = vunpack.c.l.b16 %v443
    %v476 = vunpack.c.l.b16 %v444
    %v477 = vunpack.c.l.b16 %v445
    %v478 = vunpack.c.l.b16 %v446
    %v479 = vunpack.c.l.b16 %v447
    %v480 = vunpack.c.l.b16 %v448
    %v481 = vpack.c.b16 %v466, %v465
    %v482 = vpack.c.b16 %v468, %v467
    %v483 = vpack.c.b16 %v470, %v469
    %v484 = vpack.c.b16 %v472, %v471
    %v485 = vpack.c.b16 %v474, %v473
    %v486 = vpack.c.b16 %v476, %v475
    %v487 = vpack.c.b16 %v478, %v477
    %v488 = vpack.c.b16 %v480, %v479
    %497 = vmatpush.bf16.msra.mxu0 %v488
    %498 = vmatpush.bf16.msra.mxu0 %v487
    %499 = vmatpush.bf16.msra.mxu0 %v486
    %500 = vmatpush.bf16.msra.mxu0 %v485
    %501 = vmatpush.bf16.msra.mxu0 %v484
    %502 = vmatpush.bf16.msra.mxu0 %v483
    %503 = vmatpush.bf16.msra.mxu0 %v482
    %504 = vmatpush.bf16.msra.mxu0 %v481
    %505 = vmatmul.bf16.gmra.mxu0 %v432
    %v506 = vpop.f32.mrf.mxu0
    %v507 = vadd.f32 0.0, %v506
    %v508 = vpop.f32.mrf.mxu0
    %509 = vdwg.mxu0
    %v510 = vmul.f32 %v507, 0.125
    %v511 = vmul.f32 %v510, %v510
    %v513 = vrot.slane %v511, 7
    %v515 = vsub.f32 %v510, %v513
    %v516 = vmax.f32 %v515, 0.0
    %v517 = vperm.slane %v510, 0
    %v518 = vsub.f32 %v409, %v517
    %v519 = vadd.f32 %v516, 1e-05
    %v520 = vrsqrt.pop %v519
    %v521 = vmul.f32 %v520, %v519
    %v522 = vmul.f32 %v521, %v520
    %v523 = vmul.f32 0.5, %v522
    %v524 = vsub.f32 1.5, %v523
    %v525 = vmul.f32 %v520, %v524
    %vm526 = vweird.f32 %v519
    %vm527 = vweird.f32 %v520
    %vm528 = vmor %vm526, %vm527
    %v529 = vsel %vm528, %v520, %v525
    %v530 = vperm.slane %v529, 1
    %v531 = vmul.f32 %v518, %v530
    %v532 = vld [vmem:[%s18] sm:$0x1]
    %v534 = vperm.slane %v532, 0
    %v536 = vmul.f32 %v531, %v534
    %v537 = vld [vmem:[%s23] sm:$0x1]
    %v539 = vperm.slane %v537, 0
    %v541 = vadd.f32 %v536, %v539
    %v542 = vmax.f32 %v541, 0.0
    %v543 = vpack.c.bf16 %v542, %v542
    %v544 = vld [vmem:[#allocation4] sm:$0xff]
    %v545 = vld [vmem:[#allocation4 + $0x8] sm:$0xff]
    %v546 = vld [vmem:[#allocation4 + $0x10] sm:$0xff]
    %v547 = vld [vmem:[#allocation4 + $0x18] sm:$0xff]
    %v548 = vld [vmem:[#allocation4 + $0x20] sm:$0xff]
    %v549 = vld [vmem:[#allocation4 + $0x28] sm:$0xff]
    %v550 = vld [vmem:[#allocation4 + $0x30] sm:$0xff]
    %v551 = vld [vmem:[#allocation4 + $0x38] sm:$0xff]
    %v552 = vld [vmem:[#allocation4 + $0x40] sm:$0xff]
    %v553 = vld [vmem:[#allocation4 + $0x48] sm:$0xff]
    %v554 = vld [vmem:[#allocation4 + $0x50] sm:$0xff]
    %v555 = vld [vmem:[#allocation4 + $0x58] sm:$0xff]
    %v556 = vld [vmem:[#allocation4 + $0x60] sm:$0xff]
    %v557 = vld [vmem:[#allocation4 + $0x68] sm:$0xff]
    %v558 = vld [vmem:[#allocation4 + $0x70] sm:$0xff]
    %v559 = vld [vmem:[#allocation4 + $0x78] sm:$0xff]
    %v560 = vld [vmem:[#allocation4 + $0x80] sm:$0xff]
    %v561 = vld [vmem:[#allocation4 + $0x88] sm:$0xff]
    %v562 = vld [vmem:[#allocation4 + $0x90] sm:$0xff]
    %v563 = vld [vmem:[#allocation4 + $0x98] sm:$0xff]
    %v564 = vld [vmem:[#allocation4 + $0xa0] sm:$0xff]
    %v565 = vld [vmem:[#allocation4 + $0xa8] sm:$0xff]
    %v566 = vld [vmem:[#allocation4 + $0xb0] sm:$0xff]
    %v567 = vld [vmem:[#allocation4 + $0xb8] sm:$0xff]
    %v568 = vld [vmem:[#allocation4 + $0xc0] sm:$0xff]
    %v569 = vld [vmem:[#allocation4 + $0xc8] sm:$0xff]
    %v570 = vld [vmem:[#allocation4 + $0xd0] sm:$0xff]
    %v571 = vld [vmem:[#allocation4 + $0xd8] sm:$0xff]
    %v572 = vld [vmem:[#allocation4 + $0xe0] sm:$0xff]
    %v573 = vld [vmem:[#allocation4 + $0xe8] sm:$0xff]
    %v574 = vld [vmem:[#allocation4 + $0xf0] sm:$0xff]
    %v575 = vld [vmem:[#allocation4 + $0xf8] sm:$0xff]
    %v608 = vunpack.c.l.b16 %v544
    %v609 = vunpack.c.h.b16 %v544
    %v610 = vunpack.c.l.b16 %v545
    %v611 = vunpack.c.h.b16 %v545
    %v612 = vunpack.c.l.b16 %v546
    %v613 = vunpack.c.h.b16 %v546
    %v614 = vunpack.c.l.b16 %v547
    %v615 = vunpack.c.h.b16 %v547
    %v616 = vunpack.c.l.b16 %v548
    %v617 = vunpack.c.h.b16 %v548
    %v618 = vunpack.c.l.b16 %v549
    %v619 = vunpack.c.h.b16 %v549
    %v620 = vunpack.c.l.b16 %v550
    %v621 = vunpack.c.h.b16 %v550
    %v622 = vunpack.c.l.b16 %v551
    %v623 = vunpack.c.h.b16 %v551
    %v624 = vunpack.c.l.b16 %v552
    %v625 = vunpack.c.h.b16 %v552
    %v626 = vunpack.c.l.b16 %v553
    %v627 = vunpack.c.h.b16 %v553
    %v628 = vunpack.c.l.b16 %v554
    %v629 = vunpack.c.h.b16 %v554
    %v630 = vunpack.c.l.b16 %v555
    %v631 = vunpack.c.h.b16 %v555
    %v632 = vunpack.c.l.b16 %v556
    %v633 = vunpack.c.h.b16 %v556
    %v634 = vunpack.c.l.b16 %v557
    %v635 = vunpack.c.h.b16 %v557
    %v636 = vunpack.c.l.b16 %v558
    %v637 = vunpack.c.h.b16 %v558
    %v638 = vunpack.c.l.b16 %v559
    %v639 = vunpack.c.h.b16 %v559
    %v640 = vunpack.c.l.b16 %v560
    %v641 = vunpack.c.h.b16 %v560
    %v642 = vunpack.c.l.b16 %v561
    %v643 = vunpack.c.h.b16 %v561
    %v644 = vunpack.c.l.b16 %v562
    %v645 = vunpack.c.h.b16 %v562
    %v646 = vunpack.c.l.b16 %v563
    %v647 = vunpack.c.h.b16 %v563
    %v648 = vunpack.c.l.b16 %v564
    %v649 = vunpack.c.h.b16 %v564
    %v650 = vunpack.c.l.b16 %v565
    %v651 = vunpack.c.h.b16 %v565
    %v652 = vunpack.c.l.b16 %v566
    %v653 = vunpack.c.h.b16 %v566
    %v654 = vunpack.c.l.b16 %v567
    %v655 = vunpack.c.h.b16 %v567
    %v656 = vunpack.c.l.b16 %v568
    %v657 = vunpack.c.h.b16 %v568
    %v658 = vunpack.c.l.b16 %v569
    %v659 = vunpack.c.h.b16 %v569
    %v660 = vunpack.c.l.b16 %v570
    %v661 = vunpack.c.h.b16 %v570
    %v662 = vunpack.c.l.b16 %v571
    %v663 = vunpack.c.h.b16 %v571
    %v664 = vunpack.c.l.b16 %v572
    %v665 = vunpack.c.h.b16 %v572
    %v666 = vunpack.c.l.b16 %v573
    %v667 = vunpack.c.h.b16 %v573
    %v668 = vunpack.c.l.b16 %v574
    %v669 = vunpack.c.h.b16 %v574
    %v670 = vunpack.c.l.b16 %v575
    %v671 = vunpack.c.h.b16 %v575
    %v672 = vpack.c.b16 %v612, %v608
    %v673 = vpack.c.b16 %v613, %v609
    %v674 = vpack.c.b16 %v614, %v610
    %v675 = vpack.c.b16 %v615, %v611
    %v676 = vpack.c.b16 %v620, %v616
    %v677 = vpack.c.b16 %v621, %v617
    %v678 = vpack.c.b16 %v622, %v618
    %v679 = vpack.c.b16 %v623, %v619
    %v680 = vpack.c.b16 %v628, %v624
    %v681 = vpack.c.b16 %v629, %v625
    %v682 = vpack.c.b16 %v630, %v626
    %v683 = vpack.c.b16 %v631, %v627
    %v684 = vpack.c.b16 %v636, %v632
    %v685 = vpack.c.b16 %v637, %v633
    %v686 = vpack.c.b16 %v638, %v634
    %v687 = vpack.c.b16 %v639, %v635
    %v688 = vpack.c.b16 %v644, %v640
    %v689 = vpack.c.b16 %v645, %v641
    %v690 = vpack.c.b16 %v646, %v642
    %v691 = vpack.c.b16 %v647, %v643
    %v692 = vpack.c.b16 %v652, %v648
    %v693 = vpack.c.b16 %v653, %v649
    %v694 = vpack.c.b16 %v654, %v650
    %v695 = vpack.c.b16 %v655, %v651
    %v696 = vpack.c.b16 %v660, %v656
    %v697 = vpack.c.b16 %v661, %v657
    %v698 = vpack.c.b16 %v662, %v658
    %v699 = vpack.c.b16 %v663, %v659
    %v700 = vpack.c.b16 %v668, %v664
    %v701 = vpack.c.b16 %v669, %v665
    %v702 = vpack.c.b16 %v670, %v666
    %v703 = vpack.c.b16 %v671, %v667
    %736 = vmatpush.bf16.msra.mxu0 %v700
    %737 = vmatpush.bf16.msra.mxu0 %v696
    %738 = vmatpush.bf16.msra.mxu0 %v692
    %739 = vmatpush.bf16.msra.mxu0 %v688
    %740 = vmatpush.bf16.msra.mxu0 %v684
    %741 = vmatpush.bf16.msra.mxu0 %v680
    %742 = vmatpush.bf16.msra.mxu0 %v676
    %743 = vmatpush.bf16.msra.mxu0 %v672
    %744 = vmatmul.bf16.gmra.mxu0 %v543
    %v745 = vpop.f32.mrf.mxu0
    %v746 = vadd.f32 0.0, %v745
    %v747 = vpop.f32.mrf.mxu0
    %748 = vdwg.mxu0
    %749 = vmatpush.bf16.msra.mxu0 %v701
    %750 = vmatpush.bf16.msra.mxu0 %v697
    %751 = vmatpush.bf16.msra.mxu0 %v693
    %752 = vmatpush.bf16.msra.mxu0 %v689
    %753 = vmatpush.bf16.msra.mxu0 %v685
    %754 = vmatpush.bf16.msra.mxu0 %v681
    %755 = vmatpush.bf16.msra.mxu0 %v677
    %756 = vmatpush.bf16.msra.mxu0 %v673
    %757 = vmatmul.bf16.gmra.mxu0 %v543
    %v758 = vpop.f32.mrf.mxu0
    %v759 = vadd.f32 0.0, %v758
    %v760 = vpop.f32.mrf.mxu0
    %761 = vdwg.mxu0
    %762 = vmatpush.bf16.msra.mxu0 %v702
    %763 = vmatpush.bf16.msra.mxu0 %v698
    %764 = vmatpush.bf16.msra.mxu0 %v694
    %765 = vmatpush.bf16.msra.mxu0 %v690
    %766 = vmatpush.bf16.msra.mxu0 %v686
    %767 = vmatpush.bf16.msra.mxu0 %v682
    %768 = vmatpush.bf16.msra.mxu0 %v678
    %769 = vmatpush.bf16.msra.mxu0 %v674
    %770 = vmatmul.bf16.gmra.mxu0 %v543
    %v771 = vpop.f32.mrf.mxu0
    %v772 = vadd.f32 0.0, %v771
    %v773 = vpop.f32.mrf.mxu0
    %774 = vdwg.mxu0
    %775 = vmatpush.bf16.msra.mxu0 %v703
    %776 = vmatpush.bf16.msra.mxu0 %v699
    %777 = vmatpush.bf16.msra.mxu0 %v695
    %778 = vmatpush.bf16.msra.mxu0 %v691
    %779 = vmatpush.bf16.msra.mxu0 %v687
    %780 = vmatpush.bf16.msra.mxu0 %v683
    %781 = vmatpush.bf16.msra.mxu0 %v679
    %782 = vmatpush.bf16.msra.mxu0 %v675
    %783 = vmatmul.bf16.gmra.mxu0 %v543
    %v784 = vpop.f32.mrf.mxu0
    %v785 = vadd.f32 0.0, %v784
    %v786 = vpop.f32.mrf.mxu0
    %787 = vdwg.mxu0
    %v788 = vld [vmem:[%s8] sm:$0x3]
    %v789 = vpack.c.bf16 %v746, %v746
    %v790 = vpack.c.bf16 %v759, %v759
    %792 = vst [vmem:[#allocation1] ss:$4 sm:$0xff] %v788
    %v793 = vld.sshfl [vmem:[#allocation1] sm:$0xff pattern:$0x73625140]
    %795 = vrot.lane.b32.xlu0 %v793, 126
    %v796 = vpop.permute.xlu0 %795
    %vm797 = vcmask 15360
    %v799 = vsel %vm797, %v796, 0
    %v802 = vsel %vm375, %v790, 0
    %804 = vmatpush.bf16.msra.mxu0 0
    %805 = vmatpush.bf16.msra.mxu0 0
    %806 = vmatpush.bf16.msra.mxu0 0
    %807 = vmatpush.bf16.msra.mxu0 0
    %808 = vmatpush.bf16.msra.mxu0 0
    %809 = vmatpush.bf16.msra.mxu0 0
    %810 = vmatpush.bf16.msra.mxu0 0
    %811 = vmatpush.bf16.msra.mxu0 %v802
    %812 = vmatmul.bf16.gmra.mxu0 %v799
    %v813 = vpop.f32.mrf.mxu0
    %v814 = vadd.f32 0.0, %v813
    %v815 = vpop.f32.mrf.mxu0
    %816 = vdwg.mxu0
    %v817 = vsel %vm797, %v788, 0
    %v820 = vsel %vm375, %v789, 0
    %822 = vmatpush.bf16.msra.mxu0 0
    %823 = vmatpush.bf16.msra.mxu0 0
    %824 = vmatpush.bf16.msra.mxu0 0
    %825 = vmatpush.bf16.msra.mxu0 0
    %826 = vmatpush.bf16.msra.mxu0 0
    %827 = vmatpush.bf16.msra.mxu0 0
    %828 = vmatpush.bf16.msra.mxu0 0
    %829 = vmatpush.bf16.msra.mxu0 %v820
    %830 = vmatmul.bf16.gmra.mxu0 %v817
    %v831 = vpop.f32.mrf.mxu0
    %v832 = vadd.f32 %v814, %v831
    %v833 = vpop.f32.mrf.mxu0
    %834 = vdwg.mxu0
    %v835 = vpack.c.bf16 %v772, %v772
    %836 = vst [vmem:[#allocation1] ss:$4 sm:$0xff] %v788
    %v837 = vld.sshfl [vmem:[#allocation1] sm:$0xff pattern:$0x73625140]
    %839 = vrot.lane.b32.xlu0 %v837, 124
    %v840 = vpop.permute.xlu0 %839
    %v842 = vsel %vm797, %v840, 0
    %v845 = vsel %vm375, %v835, 0
    %847 = vmatpush.bf16.msra.mxu0 0
    %848 = vmatpush.bf16.msra.mxu0 0
    %849 = vmatpush.bf16.msra.mxu0 0
    %850 = vmatpush.bf16.msra.mxu0 0
    %851 = vmatpush.bf16.msra.mxu0 0
    %852 = vmatpush.bf16.msra.mxu0 0
    %853 = vmatpush.bf16.msra.mxu0 0
    %854 = vmatpush.bf16.msra.mxu0 %v845
    %855 = vmatmul.bf16.gmra.mxu0 %v842
    %v856 = vpop.f32.mrf.mxu0
    %v857 = vadd.f32 0.0, %v856
    %v858 = vpop.f32.mrf.mxu0
    %859 = vdwg.mxu0
    %v860 = vadd.f32 %v832, %v857
    %v861 = vpack.c.bf16 %v785, %v785
    %862 = vst [vmem:[#allocation1] ss:$4 sm:$0xff] %v788
    %v863 = vld.sshfl [vmem:[#allocation1] sm:$0xff pattern:$0x73625140]
    %865 = vrot.lane.b32.xlu0 %v863, 122
    %v866 = vpop.permute.xlu0 %865
    %v868 = vsel %vm797, %v866, 0
    %v871 = vsel %vm375, %v861, 0
    %873 = vmatpush.bf16.msra.mxu0 0
    %874 = vmatpush.bf16.msra.mxu0 0
    %875 = vmatpush.bf16.msra.mxu0 0
    %876 = vmatpush.bf16.msra.mxu0 0
    %877 = vmatpush.bf16.msra.mxu0 0
    %878 = vmatpush.bf16.msra.mxu0 0
    %879 = vmatpush.bf16.msra.mxu0 0
    %880 = vmatpush.bf16.msra.mxu0 %v871
    %881 = vmatmul.bf16.gmra.mxu0 %v868
    %v882 = vpop.f32.mrf.mxu0
    %v883 = vadd.f32 0.0, %v882
    %v884 = vpop.f32.mrf.mxu0
    %885 = vdwg.mxu0
    %v886 = vadd.f32 %v860, %v883
    %vm887 = vcmask 1043456
    %v888 = vsel %vm887, %v886, 0.0
    %v889 = vrot.slane %v888, 4
    %v890 = vadd.f32 %v888, %v889
    %v891 = vrot.slane %v890, 2
    %v892 = vadd.f32 %v890, %v891
    %v893 = vrot.slane %v892, 1
    %v894 = vadd.f32 %v892, %v893
    %v895 = vmul.f32 %v886, %v886
    %v896 = vsel %vm887, %v895, 0.0
    %v897 = vrot.slane %v896, 4
    %v898 = vadd.f32 %v896, %v897
    %v899 = vrot.slane %v898, 2
    %v900 = vadd.f32 %v898, %v899
    %v901 = vrot.slane %v900, 1
    %v902 = vadd.f32 %v900, %v901
    %v903 = vsel %vm430, %v894, %v902
    %v904 = vpack.c.bf16 %v903, %v903
    %v905 = vld [vmem:[#allocation18] sm:$0xf]
    %v906 = vld [vmem:[#allocation18 + $0x4] sm:$0xf]
    %v907 = vld [vmem:[#allocation18 + $0x8] sm:$0xf]
    %v908 = vld [vmem:[#allocation18 + $0xc] sm:$0xf]
    %v909 = vld [vmem:[#allocation18 + $0x10] sm:$0xf]
    %v910 = vld [vmem:[#allocation18 + $0x14] sm:$0xf]
    %v911 = vld [vmem:[#allocation18 + $0x18] sm:$0xf]
    %v912 = vld [vmem:[#allocation18 + $0x1c] sm:$0xf]
    %v913 = vld [vmem:[#allocation18 + $0x20] sm:$0xf]
    %v914 = vld [vmem:[#allocation18 + $0x24] sm:$0xf]
    %v915 = vld [vmem:[#allocation18 + $0x28] sm:$0xf]
    %v916 = vld [vmem:[#allocation18 + $0x2c] sm:$0xf]
    %v917 = vld [vmem:[#allocation18 + $0x30] sm:$0xf]
    %v918 = vld [vmem:[#allocation18 + $0x34] sm:$0xf]
    %v919 = vld [vmem:[#allocation18 + $0x38] sm:$0xf]
    %v920 = vld [vmem:[#allocation18 + $0x3c] sm:$0xf]
    %v937 = vunpack.c.l.b16 %v905
    %v938 = vunpack.c.l.b16 %v906
    %v939 = vunpack.c.l.b16 %v907
    %v940 = vunpack.c.l.b16 %v908
    %v941 = vunpack.c.l.b16 %v909
    %v942 = vunpack.c.l.b16 %v910
    %v943 = vunpack.c.l.b16 %v911
    %v944 = vunpack.c.l.b16 %v912
    %v945 = vunpack.c.l.b16 %v913
    %v946 = vunpack.c.l.b16 %v914
    %v947 = vunpack.c.l.b16 %v915
    %v948 = vunpack.c.l.b16 %v916
    %v949 = vunpack.c.l.b16 %v917
    %v950 = vunpack.c.l.b16 %v918
    %v951 = vunpack.c.l.b16 %v919
    %v952 = vunpack.c.l.b16 %v920
    %v953 = vpack.c.b16 %v938, %v937
    %v954 = vpack.c.b16 %v940, %v939
    %v955 = vpack.c.b16 %v942, %v941
    %v956 = vpack.c.b16 %v944, %v943
    %v957 = vpack.c.b16 %v946, %v945
    %v958 = vpack.c.b16 %v948, %v947
    %v959 = vpack.c.b16 %v950, %v949
    %v960 = vpack.c.b16 %v952, %v951
    %969 = vmatpush.bf16.msra.mxu0 %v960
    %970 = vmatpush.bf16.msra.mxu0 %v959
    %971 = vmatpush.bf16.msra.mxu0 %v958
    %972 = vmatpush.bf16.msra.mxu0 %v957
    %973 = vmatpush.bf16.msra.mxu0 %v956
    %974 = vmatpush.bf16.msra.mxu0 %v955
    %975 = vmatpush.bf16.msra.mxu0 %v954
    %976 = vmatpush.bf16.msra.mxu0 %v953
    %977 = vmatmul.bf16.gmra.mxu0 %v904
    %v978 = vpop.f32.mrf.mxu0
    %v979 = vadd.f32 0.0, %v978
    %v980 = vpop.f32.mrf.mxu0
    %981 = vdwg.mxu0
    %v982 = vmul.f32 %v979, 0.03125
    %v983 = vmul.f32 %v982, %v982
    %v985 = vrot.slane %v983, 7
    %v987 = vsub.f32 %v982, %v985
    %v988 = vmax.f32 %v987, 0.0
    %v989 = vperm.slane %v982, 0
    %v990 = vsub.f32 %v886, %v989
    %v991 = vadd.f32 %v988, 1e-05
    %v992 = vrsqrt.pop %v991
    %v993 = vmul.f32 %v992, %v991
    %v994 = vmul.f32 %v993, %v992
    %v995 = vmul.f32 0.5, %v994
    %v996 = vsub.f32 1.5, %v995
    %v997 = vmul.f32 %v992, %v996
    %vm998 = vweird.f32 %v991
    %vm999 = vweird.f32 %v992
    %vm1000 = vmor %vm998, %vm999
    %v1001 = vsel %vm1000, %v992, %v997
    %v1002 = vperm.slane %v1001, 1
    %v1003 = vmul.f32 %v990, %v1002
    %v1004 = vld [vmem:[%s19] sm:$0x1]
    %v1006 = vperm.slane %v1004, 0
    %v1008 = vmul.f32 %v1003, %v1006
    %v1009 = vld [vmem:[%s24] sm:$0x1]
    %v1011 = vperm.slane %v1009, 0
    %v1013 = vadd.f32 %v1008, %v1011
    %v1014 = vmax.f32 %v1013, 0.0
    %v1015 = vpack.c.bf16 %v1014, %v1014
    %v1016 = vld [vmem:[#allocation6] sm:$0xff]
    %v1017 = vld [vmem:[#allocation6 + $0x8] sm:$0xff]
    %v1018 = vld [vmem:[#allocation6 + $0x10] sm:$0xff]
    %v1019 = vld [vmem:[#allocation6 + $0x18] sm:$0xff]
    %v1020 = vld [vmem:[#allocation6 + $0x20] sm:$0xff]
    %v1021 = vld [vmem:[#allocation6 + $0x28] sm:$0xff]
    %v1022 = vld [vmem:[#allocation6 + $0x30] sm:$0xff]
    %v1023 = vld [vmem:[#allocation6 + $0x38] sm:$0xff]
    %v1024 = vld [vmem:[#allocation6 + $0x40] sm:$0xff]
    %v1025 = vld [vmem:[#allocation6 + $0x48] sm:$0xff]
    %v1026 = vld [vmem:[#allocation6 + $0x50] sm:$0xff]
    %v1027 = vld [vmem:[#allocation6 + $0x58] sm:$0xff]
    %v1028 = vld [vmem:[#allocation6 + $0x60] sm:$0xff]
    %v1029 = vld [vmem:[#allocation6 + $0x68] sm:$0xff]
    %v1030 = vld [vmem:[#allocation6 + $0x70] sm:$0xff]
    %v1031 = vld [vmem:[#allocation6 + $0x78] sm:$0xff]
    %v1032 = vld [vmem:[#allocation6 + $0x80] sm:$0xff]
    %v1033 = vld [vmem:[#allocation6 + $0x88] sm:$0xff]
    %v1034 = vld [vmem:[#allocation6 + $0x90] sm:$0xff]
    %v1035 = vld [vmem:[#allocation6 + $0x98] sm:$0xff]
    %v1036 = vld [vmem:[#allocation6 + $0xa0] sm:$0xff]
    %v1037 = vld [vmem:[#allocation6 + $0xa8] sm:$0xff]
    %v1038 = vld [vmem:[#allocation6 + $0xb0] sm:$0xff]
    %v1039 = vld [vmem:[#allocation6 + $0xb8] sm:$0xff]
    %v1040 = vld [vmem:[#allocation6 + $0xc0] sm:$0xff]
    %v1041 = vld [vmem:[#allocation6 + $0xc8] sm:$0xff]
    %v1042 = vld [vmem:[#allocation6 + $0xd0] sm:$0xff]
    %v1043 = vld [vmem:[#allocation6 + $0xd8] sm:$0xff]
    %v1044 = vld [vmem:[#allocation6 + $0xe0] sm:$0xff]
    %v1045 = vld [vmem:[#allocation6 + $0xe8] sm:$0xff]
    %v1046 = vld [vmem:[#allocation6 + $0xf0] sm:$0xff]
    %v1047 = vld [vmem:[#allocation6 + $0xf8] sm:$0xff]
    %v1080 = vunpack.c.l.b16 %v1016
    %v1081 = vunpack.c.h.b16 %v1016
    %v1082 = vunpack.c.l.b16 %v1017
    %v1083 = vunpack.c.h.b16 %v1017
    %v1084 = vunpack.c.l.b16 %v1018
    %v1085 = vunpack.c.h.b16 %v1018
    %v1086 = vunpack.c.l.b16 %v1019
    %v1087 = vunpack.c.h.b16 %v1019
    %v1088 = vunpack.c.l.b16 %v1020
    %v1089 = vunpack.c.h.b16 %v1020
    %v1090 = vunpack.c.l.b16 %v1021
    %v1091 = vunpack.c.h.b16 %v1021
    %v1092 = vunpack.c.l.b16 %v1022
    %v1093 = vunpack.c.h.b16 %v1022
    %v1094 = vunpack.c.l.b16 %v1023
    %v1095 = vunpack.c.h.b16 %v1023
    %v1096 = vunpack.c.l.b16 %v1024
    %v1097 = vunpack.c.h.b16 %v1024
    %v1098 = vunpack.c.l.b16 %v1025
    %v1099 = vunpack.c.h.b16 %v1025
    %v1100 = vunpack.c.l.b16 %v1026
    %v1101 = vunpack.c.h.b16 %v1026
    %v1102 = vunpack.c.l.b16 %v1027
    %v1103 = vunpack.c.h.b16 %v1027
    %v1104 = vunpack.c.l.b16 %v1028
    %v1105 = vunpack.c.h.b16 %v1028
    %v1106 = vunpack.c.l.b16 %v1029
    %v1107 = vunpack.c.h.b16 %v1029
    %v1108 = vunpack.c.l.b16 %v1030
    %v1109 = vunpack.c.h.b16 %v1030
    %v1110 = vunpack.c.l.b16 %v1031
    %v1111 = vunpack.c.h.b16 %v1031
    %v1112 = vunpack.c.l.b16 %v1032
    %v1113 = vunpack.c.h.b16 %v1032
    %v1114 = vunpack.c.l.b16 %v1033
    %v1115 = vunpack.c.h.b16 %v1033
    %v1116 = vunpack.c.l.b16 %v1034
    %v1117 = vunpack.c.h.b16 %v1034
    %v1118 = vunpack.c.l.b16 %v1035
    %v1119 = vunpack.c.h.b16 %v1035
    %v1120 = vunpack.c.l.b16 %v1036
    %v1121 = vunpack.c.h.b16 %v1036
    %v1122 = vunpack.c.l.b16 %v1037
    %v1123 = vunpack.c.h.b16 %v1037
    %v1124 = vunpack.c.l.b16 %v1038
    %v1125 = vunpack.c.h.b16 %v1038
    %v1126 = vunpack.c.l.b16 %v1039
    %v1127 = vunpack.c.h.b16 %v1039
    %v1128 = vunpack.c.l.b16 %v1040
    %v1129 = vunpack.c.h.b16 %v1040
    %v1130 = vunpack.c.l.b16 %v1041
    %v1131 = vunpack.c.h.b16 %v1041
    %v1132 = vunpack.c.l.b16 %v1042
    %v1133 = vunpack.c.h.b16 %v1042
    %v1134 = vunpack.c.l.b16 %v1043
    %v1135 = vunpack.c.h.b16 %v1043
    %v1136 = vunpack.c.l.b16 %v1044
    %v1137 = vunpack.c.h.b16 %v1044
    %v1138 = vunpack.c.l.b16 %v1045
    %v1139 = vunpack.c.h.b16 %v1045
    %v1140 = vunpack.c.l.b16 %v1046
    %v1141 = vunpack.c.h.b16 %v1046
    %v1142 = vunpack.c.l.b16 %v1047
    %v1143 = vunpack.c.h.b16 %v1047
    %v1144 = vpack.c.b16 %v1084, %v1080
    %v1145 = vpack.c.b16 %v1085, %v1081
    %v1146 = vpack.c.b16 %v1086, %v1082
    %v1147 = vpack.c.b16 %v1087, %v1083
    %v1148 = vpack.c.b16 %v1092, %v1088
    %v1149 = vpack.c.b16 %v1093, %v1089
    %v1150 = vpack.c.b16 %v1094, %v1090
    %v1151 = vpack.c.b16 %v1095, %v1091
    %v1152 = vpack.c.b16 %v1100, %v1096
    %v1153 = vpack.c.b16 %v1101, %v1097
    %v1154 = vpack.c.b16 %v1102, %v1098
    %v1155 = vpack.c.b16 %v1103, %v1099
    %v1156 = vpack.c.b16 %v1108, %v1104
    %v1157 = vpack.c.b16 %v1109, %v1105
    %v1158 = vpack.c.b16 %v1110, %v1106
    %v1159 = vpack.c.b16 %v1111, %v1107
    %v1160 = vpack.c.b16 %v1116, %v1112
    %v1161 = vpack.c.b16 %v1117, %v1113
    %v1162 = vpack.c.b16 %v1118, %v1114
    %v1163 = vpack.c.b16 %v1119, %v1115
    %v1164 = vpack.c.b16 %v1124, %v1120
    %v1165 = vpack.c.b16 %v1125, %v1121
    %v1166 = vpack.c.b16 %v1126, %v1122
    %v1167 = vpack.c.b16 %v1127, %v1123
    %v1168 = vpack.c.b16 %v1132, %v1128
    %v1169 = vpack.c.b16 %v1133, %v1129
    %v1170 = vpack.c.b16 %v1134, %v1130
    %v1171 = vpack.c.b16 %v1135, %v1131
    %v1172 = vpack.c.b16 %v1140, %v1136
    %v1173 = vpack.c.b16 %v1141, %v1137
    %v1174 = vpack.c.b16 %v1142, %v1138
    %v1175 = vpack.c.b16 %v1143, %v1139
    %1208 = vmatpush.bf16.msra.mxu0 %v1172
    %1209 = vmatpush.bf16.msra.mxu0 %v1168
    %1210 = vmatpush.bf16.msra.mxu0 %v1164
    %1211 = vmatpush.bf16.msra.mxu0 %v1160
    %1212 = vmatpush.bf16.msra.mxu0 %v1156
    %1213 = vmatpush.bf16.msra.mxu0 %v1152
    %1214 = vmatpush.bf16.msra.mxu0 %v1148
    %1215 = vmatpush.bf16.msra.mxu0 %v1144
    %1216 = vmatmul.bf16.gmra.mxu0 %v1015
    %v1217 = vpop.f32.mrf.mxu0
    %v1218 = vadd.f32 0.0, %v1217
    %v1219 = vpop.f32.mrf.mxu0
    %1220 = vdwg.mxu0
    %1221 = vmatpush.bf16.msra.mxu0 %v1173
    %1222 = vmatpush.bf16.msra.mxu0 %v1169
    %1223 = vmatpush.bf16.msra.mxu0 %v1165
    %1224 = vmatpush.bf16.msra.mxu0 %v1161
    %1225 = vmatpush.bf16.msra.mxu0 %v1157
    %1226 = vmatpush.bf16.msra.mxu0 %v1153
    %1227 = vmatpush.bf16.msra.mxu0 %v1149
    %1228 = vmatpush.bf16.msra.mxu0 %v1145
    %1229 = vmatmul.bf16.gmra.mxu0 %v1015
    %v1230 = vpop.f32.mrf.mxu0
    %v1231 = vadd.f32 0.0, %v1230
    %v1232 = vpop.f32.mrf.mxu0
    %1233 = vdwg.mxu0
    %1234 = vmatpush.bf16.msra.mxu0 %v1174
    %1235 = vmatpush.bf16.msra.mxu0 %v1170
    %1236 = vmatpush.bf16.msra.mxu0 %v1166
    %1237 = vmatpush.bf16.msra.mxu0 %v1162
    %1238 = vmatpush.bf16.msra.mxu0 %v1158
    %1239 = vmatpush.bf16.msra.mxu0 %v1154
    %1240 = vmatpush.bf16.msra.mxu0 %v1150
    %1241 = vmatpush.bf16.msra.mxu0 %v1146
    %1242 = vmatmul.bf16.gmra.mxu0 %v1015
    %v1243 = vpop.f32.mrf.mxu0
    %v1244 = vadd.f32 0.0, %v1243
    %v1245 = vpop.f32.mrf.mxu0
    %1246 = vdwg.mxu0
    %1247 = vmatpush.bf16.msra.mxu0 %v1175
    %1248 = vmatpush.bf16.msra.mxu0 %v1171
    %1249 = vmatpush.bf16.msra.mxu0 %v1167
    %1250 = vmatpush.bf16.msra.mxu0 %v1163
    %1251 = vmatpush.bf16.msra.mxu0 %v1159
    %1252 = vmatpush.bf16.msra.mxu0 %v1155
    %1253 = vmatpush.bf16.msra.mxu0 %v1151
    %1254 = vmatpush.bf16.msra.mxu0 %v1147
    %1255 = vmatmul.bf16.gmra.mxu0 %v1015
    %v1256 = vpop.f32.mrf.mxu0
    %v1257 = vadd.f32 0.0, %v1256
    %v1258 = vpop.f32.mrf.mxu0
    %1259 = vdwg.mxu0
    %v1260 = vld [vmem:[%s9] sm:$0xf]
    %v1261 = vpack.c.bf16 %v1218, %v1218
    %v1262 = vpack.c.bf16 %v1231, %v1231
    %v1264 = vunpack.c.l.b16 %v1260
    %v1265 = vpack.c.b16 %v1264, %v1264
    %1266 = vrot.lane.b32.xlu0 %v1265, 124
    %v1267 = vpop.permute.xlu0 %1266
    %vm1268 = vcmask 31744
    %v1270 = vsel %vm1268, %v1267, 0
    %v1273 = vsel %vm412, %v1262, 0
    %1275 = vmatpush.bf16.msra.mxu0 0
    %1276 = vmatpush.bf16.msra.mxu0 0
    %1277 = vmatpush.bf16.msra.mxu0 0
    %1278 = vmatpush.bf16.msra.mxu0 0
    %1279 = vmatpush.bf16.msra.mxu0 0
    %1280 = vmatpush.bf16.msra.mxu0 0
    %1281 = vmatpush.bf16.msra.mxu0 0
    %1282 = vmatpush.bf16.msra.mxu0 %v1273
    %1283 = vmatmul.bf16.gmra.mxu0 %v1270
    %v1284 = vpop.f32.mrf.mxu0
    %v1285 = vadd.f32 0.0, %v1284
    %v1286 = vpop.f32.mrf.mxu0
    %1287 = vdwg.mxu0
    %v1289 = vsel %vm1268, %v1260, 0
    %v1292 = vsel %vm412, %v1261, 0
    %1294 = vmatpush.bf16.msra.mxu0 0
    %1295 = vmatpush.bf16.msra.mxu0 0
    %1296 = vmatpush.bf16.msra.mxu0 0
    %1297 = vmatpush.bf16.msra.mxu0 0
    %1298 = vmatpush.bf16.msra.mxu0 0
    %1299 = vmatpush.bf16.msra.mxu0 0
    %1300 = vmatpush.bf16.msra.mxu0 0
    %1301 = vmatpush.bf16.msra.mxu0 %v1292
    %1302 = vmatmul.bf16.gmra.mxu0 %v1289
    %v1303 = vpop.f32.mrf.mxu0
    %v1304 = vadd.f32 %v1285, %v1303
    %v1305 = vpop.f32.mrf.mxu0
    %1306 = vdwg.mxu0
    %v1307 = vpack.c.bf16 %v1244, %v1244
    %1308 = vrot.lane.b32.xlu0 %v1265, 120
    %v1309 = vpop.permute.xlu0 %1308
    %v1311 = vsel %vm1268, %v1309, 0
    %v1314 = vsel %vm412, %v1307, 0
    %1316 = vmatpush.bf16.msra.mxu0 0
    %1317 = vmatpush.bf16.msra.mxu0 0
    %1318 = vmatpush.bf16.msra.mxu0 0
    %1319 = vmatpush.bf16.msra.mxu0 0
    %1320 = vmatpush.bf16.msra.mxu0 0
    %1321 = vmatpush.bf16.msra.mxu0 0
    %1322 = vmatpush.bf16.msra.mxu0 0
    %1323 = vmatpush.bf16.msra.mxu0 %v1314
    %1324 = vmatmul.bf16.gmra.mxu0 %v1311
    %v1325 = vpop.f32.mrf.mxu0
    %v1326 = vadd.f32 0.0, %v1325
    %v1327 = vpop.f32.mrf.mxu0
    %1328 = vdwg.mxu0
    %v1329 = vadd.f32 %v1304, %v1326
    %v1330 = vpack.c.bf16 %v1257, %v1257
    %1331 = vrot.lane.b32.xlu0 %v1265, 116
    %v1332 = vpop.permute.xlu0 %1331
    %v1334 = vsel %vm1268, %v1332, 0
    %v1337 = vsel %vm412, %v1330, 0
    %1339 = vmatpush.bf16.msra.mxu0 0
    %1340 = vmatpush.bf16.msra.mxu0 0
    %1341 = vmatpush.bf16.msra.mxu0 0
    %1342 = vmatpush.bf16.msra.mxu0 0
    %1343 = vmatpush.bf16.msra.mxu0 0
    %1344 = vmatpush.bf16.msra.mxu0 0
    %1345 = vmatpush.bf16.msra.mxu0 0
    %1346 = vmatpush.bf16.msra.mxu0 %v1337
    %1347 = vmatmul.bf16.gmra.mxu0 %v1334
    %v1348 = vpop.f32.mrf.mxu0
    %v1349 = vadd.f32 0.0, %v1348
    %v1350 = vpop.f32.mrf.mxu0
    %1351 = vdwg.mxu0
    %v1352 = vadd.f32 %v1329, %v1349
    %v1353 = vrot.slane %v1352, 4
    %v1354 = vadd.f32 %v1352, %v1353
    %v1355 = vrot.slane %v1354, 2
    %v1356 = vadd.f32 %v1354, %v1355
    %v1357 = vrot.slane %v1356, 1
    %v1358 = vadd.f32 %v1356, %v1357
    %v1359 = vmul.f32 %v1352, %v1352
    %v1360 = vrot.slane %v1359, 4
    %v1361 = vadd.f32 %v1359, %v1360
    %v1362 = vrot.slane %v1361, 2
    %v1363 = vadd.f32 %v1361, %v1362
    %v1364 = vrot.slane %v1363, 1
    %v1365 = vadd.f32 %v1363, %v1364
    %v1366 = vsel %vm430, %v1358, %v1365
    %v1367 = vpack.c.bf16 %v1366, %v1366
    %v1368 = vld [vmem:[#allocation19] sm:$0xf]
    %v1369 = vld [vmem:[#allocation19 + $0x4] sm:$0xf]
    %v1370 = vld [vmem:[#allocation19 + $0x8] sm:$0xf]
    %v1371 = vld [vmem:[#allocation19 + $0xc] sm:$0xf]
    %v1372 = vld [vmem:[#allocation19 + $0x10] sm:$0xf]
    %v1373 = vld [vmem:[#allocation19 + $0x14] sm:$0xf]
    %v1374 = vld [vmem:[#allocation19 + $0x18] sm:$0xf]
    %v1375 = vld [vmem:[#allocation19 + $0x1c] sm:$0xf]
    %v1376 = vld [vmem:[#allocation19 + $0x20] sm:$0xf]
    %v1377 = vld [vmem:[#allocation19 + $0x24] sm:$0xf]
    %v1378 = vld [vmem:[#allocation19 + $0x28] sm:$0xf]
    %v1379 = vld [vmem:[#allocation19 + $0x2c] sm:$0xf]
    %v1380 = vld [vmem:[#allocation19 + $0x30] sm:$0xf]
    %v1381 = vld [vmem:[#allocation19 + $0x34] sm:$0xf]
    %v1382 = vld [vmem:[#allocation19 + $0x38] sm:$0xf]
    %v1383 = vld [vmem:[#allocation19 + $0x3c] sm:$0xf]
    %v1400 = vunpack.c.l.b16 %v1368
    %v1401 = vunpack.c.l.b16 %v1369
    %v1402 = vunpack.c.l.b16 %v1370
    %v1403 = vunpack.c.l.b16 %v1371
    %v1404 = vunpack.c.l.b16 %v1372
    %v1405 = vunpack.c.l.b16 %v1373
    %v1406 = vunpack.c.l.b16 %v1374
    %v1407 = vunpack.c.l.b16 %v1375
    %v1408 = vunpack.c.l.b16 %v1376
    %v1409 = vunpack.c.l.b16 %v1377
    %v1410 = vunpack.c.l.b16 %v1378
    %v1411 = vunpack.c.l.b16 %v1379
    %v1412 = vunpack.c.l.b16 %v1380
    %v1413 = vunpack.c.l.b16 %v1381
    %v1414 = vunpack.c.l.b16 %v1382
    %v1415 = vunpack.c.l.b16 %v1383
    %v1416 = vpack.c.b16 %v1401, %v1400
    %v1417 = vpack.c.b16 %v1403, %v1402
    %v1418 = vpack.c.b16 %v1405, %v1404
    %v1419 = vpack.c.b16 %v1407, %v1406
    %v1420 = vpack.c.b16 %v1409, %v1408
    %v1421 = vpack.c.b16 %v1411, %v1410
    %v1422 = vpack.c.b16 %v1413, %v1412
    %v1423 = vpack.c.b16 %v1415, %v1414
    %1432 = vmatpush.bf16.msra.mxu0 %v1423
    %1433 = vmatpush.bf16.msra.mxu0 %v1422
    %1434 = vmatpush.bf16.msra.mxu0 %v1421
    %1435 = vmatpush.bf16.msra.mxu0 %v1420
    %1436 = vmatpush.bf16.msra.mxu0 %v1419
    %1437 = vmatpush.bf16.msra.mxu0 %v1418
    %1438 = vmatpush.bf16.msra.mxu0 %v1417
    %1439 = vmatpush.bf16.msra.mxu0 %v1416
    %1440 = vmatmul.bf16.gmra.mxu0 %v1367
    %v1441 = vpop.f32.mrf.mxu0
    %v1442 = vadd.f32 0.0, %v1441
    %v1443 = vpop.f32.mrf.mxu0
    %1444 = vdwg.mxu0
    %v1445 = vmul.f32 %v1442, 0.0078125
    %v1446 = vmul.f32 %v1445, %v1445
    %v1448 = vrot.slane %v1446, 7
    %v1450 = vsub.f32 %v1445, %v1448
    %v1451 = vmax.f32 %v1450, 0.0
    %v1452 = vperm.slane %v1445, 0
    %v1453 = vsub.f32 %v1352, %v1452
    %v1454 = vadd.f32 %v1451, 1e-05
    %v1455 = vrsqrt.pop %v1454
    %v1456 = vmul.f32 %v1455, %v1454
    %v1457 = vmul.f32 %v1456, %v1455
    %v1458 = vmul.f32 0.5, %v1457
    %v1459 = vsub.f32 1.5, %v1458
    %v1460 = vmul.f32 %v1455, %v1459
    %vm1461 = vweird.f32 %v1454
    %vm1462 = vweird.f32 %v1455
    %vm1463 = vmor %vm1461, %vm1462
    %v1464 = vsel %vm1463, %v1455, %v1460
    %v1465 = vperm.slane %v1464, 1
    %v1466 = vmul.f32 %v1453, %v1465
    %v1467 = vld [vmem:[%s20] sm:$0x1]
    %v1469 = vperm.slane %v1467, 0
    %v1471 = vmul.f32 %v1466, %v1469
    %v1472 = vld [vmem:[%s25] sm:$0x1]
    %v1474 = vperm.slane %v1472, 0
    %v1476 = vadd.f32 %v1471, %v1474
    %v1477 = vmax.f32 %v1476, 0.0
    %v1478 = vpack.c.bf16 %v1477, %v1477
    %v1479 = vld [vmem:[#allocation7] sm:$0xff]
    %v1480 = vld [vmem:[#allocation7 + $0x8] sm:$0xff]
    %v1481 = vld [vmem:[#allocation7 + $0x10] sm:$0xff]
    %v1482 = vld [vmem:[#allocation7 + $0x18] sm:$0xff]
    %v1483 = vld [vmem:[#allocation7 + $0x20] sm:$0xff]
    %v1484 = vld [vmem:[#allocation7 + $0x28] sm:$0xff]
    %v1485 = vld [vmem:[#allocation7 + $0x30] sm:$0xff]
    %v1486 = vld [vmem:[#allocation7 + $0x38] sm:$0xff]
    %v1487 = vld [vmem:[#allocation7 + $0x40] sm:$0xff]
    %v1488 = vld [vmem:[#allocation7 + $0x48] sm:$0xff]
    %v1489 = vld [vmem:[#allocation7 + $0x50] sm:$0xff]
    %v1490 = vld [vmem:[#allocation7 + $0x58] sm:$0xff]
    %v1491 = vld [vmem:[#allocation7 + $0x60] sm:$0xff]
    %v1492 = vld [vmem:[#allocation7 + $0x68] sm:$0xff]
    %v1493 = vld [vmem:[#allocation7 + $0x70] sm:$0xff]
    %v1494 = vld [vmem:[#allocation7 + $0x78] sm:$0xff]
    %v1495 = vld [vmem:[#allocation7 + $0x80] sm:$0xff]
    %v1496 = vld [vmem:[#allocation7 + $0x88] sm:$0xff]
    %v1497 = vld [vmem:[#allocation7 + $0x90] sm:$0xff]
    %v1498 = vld [vmem:[#allocation7 + $0x98] sm:$0xff]
    %v1499 = vld [vmem:[#allocation7 + $0xa0] sm:$0xff]
    %v1500 = vld [vmem:[#allocation7 + $0xa8] sm:$0xff]
    %v1501 = vld [vmem:[#allocation7 + $0xb0] sm:$0xff]
    %v1502 = vld [vmem:[#allocation7 + $0xb8] sm:$0xff]
    %v1503 = vld [vmem:[#allocation7 + $0xc0] sm:$0xff]
    %v1504 = vld [vmem:[#allocation7 + $0xc8] sm:$0xff]
    %v1505 = vld [vmem:[#allocation7 + $0xd0] sm:$0xff]
    %v1506 = vld [vmem:[#allocation7 + $0xd8] sm:$0xff]
    %v1507 = vld [vmem:[#allocation7 + $0xe0] sm:$0xff]
    %v1508 = vld [vmem:[#allocation7 + $0xe8] sm:$0xff]
    %v1509 = vld [vmem:[#allocation7 + $0xf0] sm:$0xff]
    %v1510 = vld [vmem:[#allocation7 + $0xf8] sm:$0xff]
    %v1543 = vunpack.c.l.b16 %v1479
    %v1544 = vunpack.c.h.b16 %v1479
    %v1545 = vunpack.c.l.b16 %v1480
    %v1546 = vunpack.c.h.b16 %v1480
    %v1547 = vunpack.c.l.b16 %v1481
    %v1548 = vunpack.c.h.b16 %v1481
    %v1549 = vunpack.c.l.b16 %v1482
    %v1550 = vunpack.c.h.b16 %v1482
    %v1551 = vunpack.c.l.b16 %v1483
    %v1552 = vunpack.c.h.b16 %v1483
    %v1553 = vunpack.c.l.b16 %v1484
    %v1554 = vunpack.c.h.b16 %v1484
    %v1555 = vunpack.c.l.b16 %v1485
    %v1556 = vunpack.c.h.b16 %v1485
    %v1557 = vunpack.c.l.b16 %v1486
    %v1558 = vunpack.c.h.b16 %v1486
    %v1559 = vunpack.c.l.b16 %v1487
    %v1560 = vunpack.c.h.b16 %v1487
    %v1561 = vunpack.c.l.b16 %v1488
    %v1562 = vunpack.c.h.b16 %v1488
    %v1563 = vunpack.c.l.b16 %v1489
    %v1564 = vunpack.c.h.b16 %v1489
    %v1565 = vunpack.c.l.b16 %v1490
    %v1566 = vunpack.c.h.b16 %v1490
    %v1567 = vunpack.c.l.b16 %v1491
    %v1568 = vunpack.c.h.b16 %v1491
    %v1569 = vunpack.c.l.b16 %v1492
    %v1570 = vunpack.c.h.b16 %v1492
    %v1571 = vunpack.c.l.b16 %v1493
    %v1572 = vunpack.c.h.b16 %v1493
    %v1573 = vunpack.c.l.b16 %v1494
    %v1574 = vunpack.c.h.b16 %v1494
    %v1575 = vunpack.c.l.b16 %v1495
    %v1576 = vunpack.c.h.b16 %v1495
    %v1577 = vunpack.c.l.b16 %v1496
    %v1578 = vunpack.c.h.b16 %v1496
    %v1579 = vunpack.c.l.b16 %v1497
    %v1580 = vunpack.c.h.b16 %v1497
    %v1581 = vunpack.c.l.b16 %v1498
    %v1582 = vunpack.c.h.b16 %v1498
    %v1583 = vunpack.c.l.b16 %v1499
    %v1584 = vunpack.c.h.b16 %v1499
    %v1585 = vunpack.c.l.b16 %v1500
    %v1586 = vunpack.c.h.b16 %v1500
    %v1587 = vunpack.c.l.b16 %v1501
    %v1588 = vunpack.c.h.b16 %v1501
    %v1589 = vunpack.c.l.b16 %v1502
    %v1590 = vunpack.c.h.b16 %v1502
    %v1591 = vunpack.c.l.b16 %v1503
    %v1592 = vunpack.c.h.b16 %v1503
    %v1593 = vunpack.c.l.b16 %v1504
    %v1594 = vunpack.c.h.b16 %v1504
    %v1595 = vunpack.c.l.b16 %v1505
    %v1596 = vunpack.c.h.b16 %v1505
    %v1597 = vunpack.c.l.b16 %v1506
    %v1598 = vunpack.c.h.b16 %v1506
    %v1599 = vunpack.c.l.b16 %v1507
    %v1600 = vunpack.c.h.b16 %v1507
    %v1601 = vunpack.c.l.b16 %v1508
    %v1602 = vunpack.c.h.b16 %v1508
    %v1603 = vunpack.c.l.b16 %v1509
    %v1604 = vunpack.c.h.b16 %v1509
    %v1605 = vunpack.c.l.b16 %v1510
    %v1606 = vunpack.c.h.b16 %v1510
    %v1607 = vpack.c.b16 %v1547, %v1543
    %v1608 = vpack.c.b16 %v1548, %v1544
    %v1609 = vpack.c.b16 %v1549, %v1545
    %v1610 = vpack.c.b16 %v1550, %v1546
    %v1611 = vpack.c.b16 %v1555, %v1551
    %v1612 = vpack.c.b16 %v1556, %v1552
    %v1613 = vpack.c.b16 %v1557, %v1553
    %v1614 = vpack.c.b16 %v1558, %v1554
    %v1615 = vpack.c.b16 %v1563, %v1559
    %v1616 = vpack.c.b16 %v1564, %v1560
    %v1617 = vpack.c.b16 %v1565, %v1561
    %v1618 = vpack.c.b16 %v1566, %v1562
    %v1619 = vpack.c.b16 %v1571, %v1567
    %v1620 = vpack.c.b16 %v1572, %v1568
    %v1621 = vpack.c.b16 %v1573, %v1569
    %v1622 = vpack.c.b16 %v1574, %v1570
    %v1623 = vpack.c.b16 %v1579, %v1575
    %v1624 = vpack.c.b16 %v1580, %v1576
    %v1625 = vpack.c.b16 %v1581, %v1577
    %v1626 = vpack.c.b16 %v1582, %v1578
    %v1627 = vpack.c.b16 %v1587, %v1583
    %v1628 = vpack.c.b16 %v1588, %v1584
    %v1629 = vpack.c.b16 %v1589, %v1585
    %v1630 = vpack.c.b16 %v1590, %v1586
    %v1631 = vpack.c.b16 %v1595, %v1591
    %v1632 = vpack.c.b16 %v1596, %v1592
    %v1633 = vpack.c.b16 %v1597, %v1593
    %v1634 = vpack.c.b16 %v1598, %v1594
    %v1635 = vpack.c.b16 %v1603, %v1599
    %v1636 = vpack.c.b16 %v1604, %v1600
    %v1637 = vpack.c.b16 %v1605, %v1601
    %v1638 = vpack.c.b16 %v1606, %v1602
    %1671 = vmatpush.bf16.msra.mxu0 %v1635
    %1672 = vmatpush.bf16.msra.mxu0 %v1631
    %1673 = vmatpush.bf16.msra.mxu0 %v1627
    %1674 = vmatpush.bf16.msra.mxu0 %v1623
    %1675 = vmatpush.bf16.msra.mxu0 %v1619
    %1676 = vmatpush.bf16.msra.mxu0 %v1615
    %1677 = vmatpush.bf16.msra.mxu0 %v1611
    %1678 = vmatpush.bf16.msra.mxu0 %v1607
    %1679 = vmatmul.bf16.gmra.mxu0 %v1478
    %v1680 = vpop.f32.mrf.mxu0
    %v1681 = vadd.f32 0.0, %v1680
    %v1682 = vpop.f32.mrf.mxu0
    %1683 = vdwg.mxu0
    %1684 = vmatpush.bf16.msra.mxu0 %v1636
    %1685 = vmatpush.bf16.msra.mxu0 %v1632
    %1686 = vmatpush.bf16.msra.mxu0 %v1628
    %1687 = vmatpush.bf16.msra.mxu0 %v1624
    %1688 = vmatpush.bf16.msra.mxu0 %v1620
    %1689 = vmatpush.bf16.msra.mxu0 %v1616
    %1690 = vmatpush.bf16.msra.mxu0 %v1612
    %1691 = vmatpush.bf16.msra.mxu0 %v1608
    %1692 = vmatmul.bf16.gmra.mxu0 %v1478
    %v1693 = vpop.f32.mrf.mxu0
    %v1694 = vadd.f32 0.0, %v1693
    %v1695 = vpop.f32.mrf.mxu0
    %1696 = vdwg.mxu0
    %1697 = vmatpush.bf16.msra.mxu0 %v1637
    %1698 = vmatpush.bf16.msra.mxu0 %v1633
    %1699 = vmatpush.bf16.msra.mxu0 %v1629
    %1700 = vmatpush.bf16.msra.mxu0 %v1625
    %1701 = vmatpush.bf16.msra.mxu0 %v1621
    %1702 = vmatpush.bf16.msra.mxu0 %v1617
    %1703 = vmatpush.bf16.msra.mxu0 %v1613
    %1704 = vmatpush.bf16.msra.mxu0 %v1609
    %1705 = vmatmul.bf16.gmra.mxu0 %v1478
    %v1706 = vpop.f32.mrf.mxu0
    %v1707 = vadd.f32 0.0, %v1706
    %v1708 = vpop.f32.mrf.mxu0
    %1709 = vdwg.mxu0
    %1710 = vmatpush.bf16.msra.mxu0 %v1638
    %1711 = vmatpush.bf16.msra.mxu0 %v1634
    %1712 = vmatpush.bf16.msra.mxu0 %v1630
    %1713 = vmatpush.bf16.msra.mxu0 %v1626
    %1714 = vmatpush.bf16.msra.mxu0 %v1622
    %1715 = vmatpush.bf16.msra.mxu0 %v1618
    %1716 = vmatpush.bf16.msra.mxu0 %v1614
    %1717 = vmatpush.bf16.msra.mxu0 %v1610
    %1718 = vmatmul.bf16.gmra.mxu0 %v1478
    %v1719 = vpop.f32.mrf.mxu0
    %v1720 = vadd.f32 0.0, %v1719
    %v1721 = vpop.f32.mrf.mxu0
    %1722 = vdwg.mxu0
    %v1723 = vpack.c.bf16 %v1694, %v1681
    %v1724 = vpack.c.bf16 %v1720, %v1707
    %v1725 = vld [vmem:[%s10] sm:$0xf]
    %v1726 = vld [vmem:[%s10 + $0x4] sm:$0xf]
    %v1729 = vunpack.c.l.b16 %v1725
    %v1730 = vunpack.c.l.b16 %v1726
    %v1731 = vpack.c.b16 %v1730, %v1729
    %v1733 = vsel %vm332, %v1731, 0
    %1735 = vmatpush.bf16.msra.mxu0 0
    %1736 = vmatpush.bf16.msra.mxu0 0
    %1737 = vmatpush.bf16.msra.mxu0 0
    %1738 = vmatpush.bf16.msra.mxu0 0
    %1739 = vmatpush.bf16.msra.mxu0 0
    %1740 = vmatpush.bf16.msra.mxu0 0
    %1741 = vmatpush.bf16.msra.mxu0 %v1724
    %1742 = vmatpush.bf16.msra.mxu0 %v1723
    %1743 = vmatmul.bf16.gmra.mxu0 %v1733
    %v1744 = vpop.f32.mrf.mxu0
    %v1745 = vadd.f32 0.0, %v1744
    %v1746 = vpop.f32.mrf.mxu0
    %v1747 = vadd.f32 0.0, %v1746
    %1748 = vdwg.mxu0
    %v1749 = vadd.f32 %v1745, %v1747
    %v1750 = vrot.slane %v1749, 4
    %v1751 = vadd.f32 %v1749, %v1750
    %v1752 = vrot.slane %v1751, 2
    %v1753 = vadd.f32 %v1751, %v1752
    %v1754 = vrot.slane %v1753, 1
    %v1755 = vadd.f32 %v1753, %v1754
    %v1756 = vmul.f32 %v1745, %v1745
    %v1757 = vmul.f32 %v1747, %v1747
    %v1758 = vadd.f32 %v1756, %v1757
    %v1759 = vrot.slane %v1758, 4
    %v1760 = vadd.f32 %v1758, %v1759
    %v1761 = vrot.slane %v1760, 2
    %v1762 = vadd.f32 %v1760, %v1761
    %v1763 = vrot.slane %v1762, 1
    %v1764 = vadd.f32 %v1762, %v1763
    %v1765 = vsel %vm430, %v1755, %v1764
    %v1766 = vpack.c.bf16 %v1765, %v1765
    %v1767 = vld [vmem:[#allocation21] sm:$0xf]
    %v1768 = vld [vmem:[#allocation21 + $0x4] sm:$0xf]
    %v1769 = vld [vmem:[#allocation21 + $0x8] sm:$0xf]
    %v1770 = vld [vmem:[#allocation21 + $0xc] sm:$0xf]
    %v1771 = vld [vmem:[#allocation21 + $0x10] sm:$0xf]
    %v1772 = vld [vmem:[#allocation21 + $0x14] sm:$0xf]
    %v1773 = vld [vmem:[#allocation21 + $0x18] sm:$0xf]
    %v1774 = vld [vmem:[#allocation21 + $0x1c] sm:$0xf]
    %v1775 = vld [vmem:[#allocation21 + $0x20] sm:$0xf]
    %v1776 = vld [vmem:[#allocation21 + $0x24] sm:$0xf]
    %v1777 = vld [vmem:[#allocation21 + $0x28] sm:$0xf]
    %v1778 = vld [vmem:[#allocation21 + $0x2c] sm:$0xf]
    %v1779 = vld [vmem:[#allocation21 + $0x30] sm:$0xf]
    %v1780 = vld [vmem:[#allocation21 + $0x34] sm:$0xf]
    %v1781 = vld [vmem:[#allocation21 + $0x38] sm:$0xf]
    %v1782 = vld [vmem:[#allocation21 + $0x3c] sm:$0xf]
    %v1799 = vunpack.c.l.b16 %v1767
    %v1800 = vunpack.c.l.b16 %v1768
    %v1801 = vunpack.c.l.b16 %v1769
    %v1802 = vunpack.c.l.b16 %v1770
    %v1803 = vunpack.c.l.b16 %v1771
    %v1804 = vunpack.c.l.b16 %v1772
    %v1805 = vunpack.c.l.b16 %v1773
    %v1806 = vunpack.c.l.b16 %v1774
    %v1807 = vunpack.c.l.b16 %v1775
    %v1808 = vunpack.c.l.b16 %v1776
    %v1809 = vunpack.c.l.b16 %v1777
    %v1810 = vunpack.c.l.b16 %v1778
    %v1811 = vunpack.c.l.b16 %v1779
    %v1812 = vunpack.c.l.b16 %v1780
    %v1813 = vunpack.c.l.b16 %v1781
    %v1814 = vunpack.c.l.b16 %v1782
    %v1815 = vpack.c.b16 %v1800, %v1799
    %v1816 = vpack.c.b16 %v1802, %v1801
    %v1817 = vpack.c.b16 %v1804, %v1803
    %v1818 = vpack.c.b16 %v1806, %v1805
    %v1819 = vpack.c.b16 %v1808, %v1807
    %v1820 = vpack.c.b16 %v1810, %v1809
    %v1821 = vpack.c.b16 %v1812, %v1811
    %v1822 = vpack.c.b16 %v1814, %v1813
    %1831 = vmatpush.bf16.msra.mxu0 %v1822
    %1832 = vmatpush.bf16.msra.mxu0 %v1821
    %1833 = vmatpush.bf16.msra.mxu0 %v1820
    %1834 = vmatpush.bf16.msra.mxu0 %v1819
    %1835 = vmatpush.bf16.msra.mxu0 %v1818
    %1836 = vmatpush.bf16.msra.mxu0 %v1817
    %1837 = vmatpush.bf16.msra.mxu0 %v1816
    %1838 = vmatpush.bf16.msra.mxu0 %v1815
    %1839 = vmatmul.bf16.gmra.mxu0 %v1766
    %v1840 = vpop.f32.mrf.mxu0
    %v1841 = vadd.f32 0.0, %v1840
    %v1842 = vpop.f32.mrf.mxu0
    %1843 = vdwg.mxu0
    %v1844 = vmul.f32 %v1841, 0.001953125
    %v1845 = vmul.f32 %v1844, %v1844
    %v1847 = vrot.slane %v1845, 7
    %v1849 = vsub.f32 %v1844, %v1847
    %v1850 = vmax.f32 %v1849, 0.0
    %v1851 = vperm.slane %v1844, 0
    %v1852 = vsub.f32 %v1745, %v1851
    %v1853 = vsub.f32 %v1747, %v1851
    %v1854 = vadd.f32 %v1850, 1e-05
    %v1855 = vrsqrt.pop %v1854
    %v1856 = vmul.f32 %v1855, %v1854
    %v1857 = vmul.f32 %v1856, %v1855
    %v1858 = vmul.f32 0.5, %v1857
    %v1859 = vsub.f32 1.5, %v1858
    %v1860 = vmul.f32 %v1855, %v1859
    %vm1861 = vweird.f32 %v1854
    %vm1862 = vweird.f32 %v1855
    %vm1863 = vmor %vm1861, %vm1862
    %v1864 = vsel %vm1863, %v1855, %v1860
    %v1865 = vperm.slane %v1864, 1
    %v1866 = vmul.f32 %v1852, %v1865
    %v1867 = vmul.f32 %v1853, %v1865
    %v1868 = vld [vmem:[%s21] sm:$0x1]
    %v1870 = vperm.slane %v1868, 0
    %v1872 = vmul.f32 %v1866, %v1870
    %v1873 = vmul.f32 %v1867, %v1870
    %v1874 = vld [vmem:[%s26] sm:$0x1]
    %v1876 = vperm.slane %v1874, 0
    %v1878 = vadd.f32 %v1872, %v1876
    %v1879 = vadd.f32 %v1873, %v1876
    %v1880 = vmax.f32 %v1878, 0.0
    %v1881 = vmax.f32 %v1879, 0.0
    %v1882 = vpack.c.bf16 %v1881, %v1880
    %v1883 = vld [vmem:[#allocation9] sm:$0xff]
    %v1884 = vld [vmem:[#allocation9 + $0x8] sm:$0xff]
    %v1885 = vld [vmem:[#allocation9 + $0x10] sm:$0xff]
    %v1886 = vld [vmem:[#allocation9 + $0x18] sm:$0xff]
    %v1887 = vld [vmem:[#allocation9 + $0x20] sm:$0xff]
    %v1888 = vld [vmem:[#allocation9 + $0x28] sm:$0xff]
    %v1889 = vld [vmem:[#allocation9 + $0x30] sm:$0xff]
    %v1890 = vld [vmem:[#allocation9 + $0x38] sm:$0xff]
    %v1891 = vld [vmem:[#allocation9 + $0x40] sm:$0xff]
    %v1892 = vld [vmem:[#allocation9 + $0x48] sm:$0xff]
    %v1893 = vld [vmem:[#allocation9 + $0x50] sm:$0xff]
    %v1894 = vld [vmem:[#allocation9 + $0x58] sm:$0xff]
    %v1895 = vld [vmem:[#allocation9 + $0x60] sm:$0xff]
    %v1896 = vld [vmem:[#allocation9 + $0x68] sm:$0xff]
    %v1897 = vld [vmem:[#allocation9 + $0x70] sm:$0xff]
    %v1898 = vld [vmem:[#allocation9 + $0x78] sm:$0xff]
    %v1899 = vld [vmem:[#allocation9 + $0x80] sm:$0xff]
    %v1900 = vld [vmem:[#allocation9 + $0x88] sm:$0xff]
    %v1901 = vld [vmem:[#allocation9 + $0x90] sm:$0xff]
    %v1902 = vld [vmem:[#allocation9 + $0x98] sm:$0xff]
    %v1903 = vld [vmem:[#allocation9 + $0xa0] sm:$0xff]
    %v1904 = vld [vmem:[#allocation9 + $0xa8] sm:$0xff]
    %v1905 = vld [vmem:[#allocation9 + $0xb0] sm:$0xff]
    %v1906 = vld [vmem:[#allocation9 + $0xb8] sm:$0xff]
    %v1907 = vld [vmem:[#allocation9 + $0xc0] sm:$0xff]
    %v1908 = vld [vmem:[#allocation9 + $0xc8] sm:$0xff]
    %v1909 = vld [vmem:[#allocation9 + $0xd0] sm:$0xff]
    %v1910 = vld [vmem:[#allocation9 + $0xd8] sm:$0xff]
    %v1911 = vld [vmem:[#allocation9 + $0xe0] sm:$0xff]
    %v1912 = vld [vmem:[#allocation9 + $0xe8] sm:$0xff]
    %v1913 = vld [vmem:[#allocation9 + $0xf0] sm:$0xff]
    %v1914 = vld [vmem:[#allocation9 + $0xf8] sm:$0xff]
    %v1947 = vunpack.c.l.b16 %v1883
    %v1948 = vunpack.c.h.b16 %v1883
    %v1949 = vunpack.c.l.b16 %v1884
    %v1950 = vunpack.c.h.b16 %v1884
    %v1951 = vunpack.c.l.b16 %v1885
    %v1952 = vunpack.c.h.b16 %v1885
    %v1953 = vunpack.c.l.b16 %v1886
    %v1954 = vunpack.c.h.b16 %v1886
    %v1955 = vunpack.c.l.b16 %v1887
    %v1956 = vunpack.c.h.b16 %v1887
    %v1957 = vunpack.c.l.b16 %v1888
    %v1958 = vunpack.c.h.b16 %v1888
    %v1959 = vunpack.c.l.b16 %v1889
    %v1960 = vunpack.c.h.b16 %v1889
    %v1961 = vunpack.c.l.b16 %v1890
    %v1962 = vunpack.c.h.b16 %v1890
    %v1963 = vunpack.c.l.b16 %v1891
    %v1964 = vunpack.c.h.b16 %v1891
    %v1965 = vunpack.c.l.b16 %v1892
    %v1966 = vunpack.c.h.b16 %v1892
    %v1967 = vunpack.c.l.b16 %v1893
    %v1968 = vunpack.c.h.b16 %v1893
    %v1969 = vunpack.c.l.b16 %v1894
    %v1970 = vunpack.c.h.b16 %v1894
    %v1971 = vunpack.c.l.b16 %v1895
    %v1972 = vunpack.c.h.b16 %v1895
    %v1973 = vunpack.c.l.b16 %v1896
    %v1974 = vunpack.c.h.b16 %v1896
    %v1975 = vunpack.c.l.b16 %v1897
    %v1976 = vunpack.c.h.b16 %v1897
    %v1977 = vunpack.c.l.b16 %v1898
    %v1978 = vunpack.c.h.b16 %v1898
    %v1979 = vunpack.c.l.b16 %v1899
    %v1980 = vunpack.c.h.b16 %v1899
    %v1981 = vunpack.c.l.b16 %v1900
    %v1982 = vunpack.c.h.b16 %v1900
    %v1983 = vunpack.c.l.b16 %v1901
    %v1984 = vunpack.c.h.b16 %v1901
    %v1985 = vunpack.c.l.b16 %v1902
    %v1986 = vunpack.c.h.b16 %v1902
    %v1987 = vunpack.c.l.b16 %v1903
    %v1988 = vunpack.c.h.b16 %v1903
    %v1989 = vunpack.c.l.b16 %v1904
    %v1990 = vunpack.c.h.b16 %v1904
    %v1991 = vunpack.c.l.b16 %v1905
    %v1992 = vunpack.c.h.b16 %v1905
    %v1993 = vunpack.c.l.b16 %v1906
    %v1994 = vunpack.c.h.b16 %v1906
    %v1995 = vunpack.c.l.b16 %v1907
    %v1996 = vunpack.c.h.b16 %v1907
    %v1997 = vunpack.c.l.b16 %v1908
    %v1998 = vunpack.c.h.b16 %v1908
    %v1999 = vunpack.c.l.b16 %v1909
    %v2000 = vunpack.c.h.b16 %v1909
    %v2001 = vunpack.c.l.b16 %v1910
    %v2002 = vunpack.c.h.b16 %v1910
    %v2003 = vunpack.c.l.b16 %v1911
    %v2004 = vunpack.c.h.b16 %v1911
    %v2005 = vunpack.c.l.b16 %v1912
    %v2006 = vunpack.c.h.b16 %v1912
    %v2007 = vunpack.c.l.b16 %v1913
    %v2008 = vunpack.c.h.b16 %v1913
    %v2009 = vunpack.c.l.b16 %v1914
    %v2010 = vunpack.c.h.b16 %v1914
    %v2011 = vpack.c.b16 %v1951, %v1947
    %v2012 = vpack.c.b16 %v1952, %v1948
    %v2013 = vpack.c.b16 %v1953, %v1949
    %v2014 = vpack.c.b16 %v1954, %v1950
    %v2015 = vpack.c.b16 %v1959, %v1955
    %v2016 = vpack.c.b16 %v1960, %v1956
    %v2017 = vpack.c.b16 %v1961, %v1957
    %v2018 = vpack.c.b16 %v1962, %v1958
    %v2019 = vpack.c.b16 %v1967, %v1963
    %v2020 = vpack.c.b16 %v1968, %v1964
    %v2021 = vpack.c.b16 %v1969, %v1965
    %v2022 = vpack.c.b16 %v1970, %v1966
    %v2023 = vpack.c.b16 %v1975, %v1971
    %v2024 = vpack.c.b16 %v1976, %v1972
    %v2025 = vpack.c.b16 %v1977, %v1973
    %v2026 = vpack.c.b16 %v1978, %v1974
    %v2027 = vpack.c.b16 %v1983, %v1979
    %v2028 = vpack.c.b16 %v1984, %v1980
    %v2029 = vpack.c.b16 %v1985, %v1981
    %v2030 = vpack.c.b16 %v1986, %v1982
    %v2031 = vpack.c.b16 %v1991, %v1987
    %v2032 = vpack.c.b16 %v1992, %v1988
    %v2033 = vpack.c.b16 %v1993, %v1989
    %v2034 = vpack.c.b16 %v1994, %v1990
    %v2035 = vpack.c.b16 %v1999, %v1995
    %v2036 = vpack.c.b16 %v2000, %v1996
    %v2037 = vpack.c.b16 %v2001, %v1997
    %v2038 = vpack.c.b16 %v2002, %v1998
    %v2039 = vpack.c.b16 %v2007, %v2003
    %v2040 = vpack.c.b16 %v2008, %v2004
    %v2041 = vpack.c.b16 %v2009, %v2005
    %v2042 = vpack.c.b16 %v2010, %v2006
    %2075 = vmatpush.bf16.msra.mxu0 %v2039
    %2076 = vmatpush.bf16.msra.mxu0 %v2035
    %2077 = vmatpush.bf16.msra.mxu0 %v2031
    %2078 = vmatpush.bf16.msra.mxu0 %v2027
    %2079 = vmatpush.bf16.msra.mxu0 %v2023
    %2080 = vmatpush.bf16.msra.mxu0 %v2019
    %2081 = vmatpush.bf16.msra.mxu0 %v2015
    %2082 = vmatpush.bf16.msra.mxu0 %v2011
    %2083 = vmatmul.bf16.gmra.mxu0 %v1882
    %v2084 = vpop.f32.mrf.mxu0
    %v2085 = vadd.f32 0.0, %v2084
    %v2086 = vpop.f32.mrf.mxu0
    %v2087 = vadd.f32 0.0, %v2086
    %2088 = vdwg.mxu0
    %2089 = vmatpush.bf16.msra.mxu0 %v2040
    %2090 = vmatpush.bf16.msra.mxu0 %v2036
    %2091 = vmatpush.bf16.msra.mxu0 %v2032
    %2092 = vmatpush.bf16.msra.mxu0 %v2028
    %2093 = vmatpush.bf16.msra.mxu0 %v2024
    %2094 = vmatpush.bf16.msra.mxu0 %v2020
    %2095 = vmatpush.bf16.msra.mxu0 %v2016
    %2096 = vmatpush.bf16.msra.mxu0 %v2012
    %2097 = vmatmul.bf16.gmra.mxu0 %v1882
    %v2098 = vpop.f32.mrf.mxu0
    %v2099 = vadd.f32 0.0, %v2098
    %v2100 = vpop.f32.mrf.mxu0
    %v2101 = vadd.f32 0.0, %v2100
    %2102 = vdwg.mxu0
    %2103 = vmatpush.bf16.msra.mxu0 %v2041
    %2104 = vmatpush.bf16.msra.mxu0 %v2037
    %2105 = vmatpush.bf16.msra.mxu0 %v2033
    %2106 = vmatpush.bf16.msra.mxu0 %v2029
    %2107 = vmatpush.bf16.msra.mxu0 %v2025
    %2108 = vmatpush.bf16.msra.mxu0 %v2021
    %2109 = vmatpush.bf16.msra.mxu0 %v2017
    %2110 = vmatpush.bf16.msra.mxu0 %v2013
    %2111 = vmatmul.bf16.gmra.mxu0 %v1882
    %v2112 = vpop.f32.mrf.mxu0
    %v2113 = vadd.f32 0.0, %v2112
    %v2114 = vpop.f32.mrf.mxu0
    %v2115 = vadd.f32 0.0, %v2114
    %2116 = vdwg.mxu0
    %2117 = vmatpush.bf16.msra.mxu0 %v2042
    %2118 = vmatpush.bf16.msra.mxu0 %v2038
    %2119 = vmatpush.bf16.msra.mxu0 %v2034
    %2120 = vmatpush.bf16.msra.mxu0 %v2030
    %2121 = vmatpush.bf16.msra.mxu0 %v2026
    %2122 = vmatpush.bf16.msra.mxu0 %v2022
    %2123 = vmatpush.bf16.msra.mxu0 %v2018
    %2124 = vmatpush.bf16.msra.mxu0 %v2014
    %2125 = vmatmul.bf16.gmra.mxu0 %v1882
    %v2126 = vpop.f32.mrf.mxu0
    %v2127 = vadd.f32 0.0, %v2126
    %v2128 = vpop.f32.mrf.mxu0
    %v2129 = vadd.f32 0.0, %v2128
    %2130 = vdwg.mxu0
    %v2131 = vpack.c.bf16 %v2087, %v2085
    %v2132 = vpack.c.bf16 %v2101, %v2099
    %v2133 = vpack.c.bf16 %v2115, %v2113
    %v2134 = vpack.c.bf16 %v2129, %v2127
    %v2135 = vld [vmem:[#allocation13] sm:$0xf]
    %v2136 = vld [vmem:[#allocation13 + $0x4] sm:$0xf]
    %v2137 = vld [vmem:[#allocation13 + $0x8] sm:$0xf]
    %v2138 = vld [vmem:[#allocation13 + $0xc] sm:$0xf]
    %v2143 = vunpack.c.l.b16 %v2135
    %v2144 = vunpack.c.l.b16 %v2136
    %v2145 = vunpack.c.l.b16 %v2137
    %v2146 = vunpack.c.l.b16 %v2138
    %v2147 = vpack.c.b16 %v2144, %v2143
    %v2148 = vpack.c.b16 %v2146, %v2145
    %vm2149 = vcmask 523264
    %v2151 = vsel %vm2149, %v2147, 0
    %v2154 = vsel %vm2149, %v2148, 0
    %2156 = vmatpush.bf16.msra.mxu0 0
    %2157 = vmatpush.bf16.msra.mxu0 0
    %2158 = vmatpush.bf16.msra.mxu0 0
    %2159 = vmatpush.bf16.msra.mxu0 0
    %2160 = vmatpush.bf16.msra.mxu0 %v2134
    %2161 = vmatpush.bf16.msra.mxu0 %v2133
    %2162 = vmatpush.bf16.msra.mxu0 %v2132
    %2163 = vmatpush.bf16.msra.mxu0 %v2131
    %2164 = vmatmul.bf16.gmra.mxu0 %v2151
    %v2165 = vpop.f32.mrf.mxu0
    %v2166 = vadd.f32 0.0, %v2165
    %v2167 = vpop.f32.mrf.mxu0
    %v2168 = vadd.f32 0.0, %v2167
    %2169 = vmatmul.bf16.gmra.mxu0 %v2154
    %v2170 = vpop.f32.mrf.mxu0
    %v2171 = vadd.f32 0.0, %v2170
    %v2172 = vpop.f32.mrf.mxu0
    %v2173 = vadd.f32 0.0, %v2172
    %2174 = vdwg.mxu0
    %v2175 = vadd.f32 %v2166, %v2168
    %v2176 = vadd.f32 %v2175, %v2171
    %v2177 = vadd.f32 %v2176, %v2173
    %v2178 = vrot.slane %v2177, 4
    %v2179 = vadd.f32 %v2177, %v2178
    %v2180 = vrot.slane %v2179, 2
    %v2181 = vadd.f32 %v2179, %v2180
    %v2182 = vrot.slane %v2181, 1
    %v2183 = vadd.f32 %v2181, %v2182
    %v2184 = vmul.f32 %v2166, %v2166
    %v2185 = vmul.f32 %v2168, %v2168
    %v2186 = vmul.f32 %v2171, %v2171
    %v2187 = vmul.f32 %v2173, %v2173
    %v2188 = vadd.f32 %v2184, %v2185
    %v2189 = vadd.f32 %v2188, %v2186
    %v2190 = vadd.f32 %v2189, %v2187
    %v2191 = vrot.slane %v2190, 4
    %v2192 = vadd.f32 %v2190, %v2191
    %v2193 = vrot.slane %v2192, 2
    %v2194 = vadd.f32 %v2192, %v2193
    %v2195 = vrot.slane %v2194, 1
    %v2196 = vadd.f32 %v2194, %v2195
    %v2197 = vsel %vm430, %v2183, %v2196
    %v2198 = vpack.c.bf16 %v2197, %v2197
    %v2199 = vld [vmem:[#allocation22] sm:$0xf]
    %v2200 = vld [vmem:[#allocation22 + $0x4] sm:$0xf]
    %v2201 = vld [vmem:[#allocation22 + $0x8] sm:$0xf]
    %v2202 = vld [vmem:[#allocation22 + $0xc] sm:$0xf]
    %v2203 = vld [vmem:[#allocation22 + $0x10] sm:$0xf]
    %v2204 = vld [vmem:[#allocation22 + $0x14] sm:$0xf]
    %v2205 = vld [vmem:[#allocation22 + $0x18] sm:$0xf]
    %v2206 = vld [vmem:[#allocation22 + $0x1c] sm:$0xf]
    %v2207 = vld [vmem:[#allocation22 + $0x20] sm:$0xf]
    %v2208 = vld [vmem:[#allocation22 + $0x24] sm:$0xf]
    %v2209 = vld [vmem:[#allocation22 + $0x28] sm:$0xf]
    %v2210 = vld [vmem:[#allocation22 + $0x2c] sm:$0xf]
    %v2211 = vld [vmem:[#allocation22 + $0x30] sm:$0xf]
    %v2212 = vld [vmem:[#allocation22 + $0x34] sm:$0xf]
    %v2213 = vld [vmem:[#allocation22 + $0x38] sm:$0xf]
    %v2214 = vld [vmem:[#allocation22 + $0x3c] sm:$0xf]
    %v2231 = vunpack.c.l.b16 %v2199
    %v2232 = vunpack.c.l.b16 %v2200
    %v2233 = vunpack.c.l.b16 %v2201
    %v2234 = vunpack.c.l.b16 %v2202
    %v2235 = vunpack.c.l.b16 %v2203
    %v2236 = vunpack.c.l.b16 %v2204
    %v2237 = vunpack.c.l.b16 %v2205
    %v2238 = vunpack.c.l.b16 %v2206
    %v2239 = vunpack.c.l.b16 %v2207
    %v2240 = vunpack.c.l.b16 %v2208
    %v2241 = vunpack.c.l.b16 %v2209
    %v2242 = vunpack.c.l.b16 %v2210
    %v2243 = vunpack.c.l.b16 %v2211
    %v2244 = vunpack.c.l.b16 %v2212
    %v2245 = vunpack.c.l.b16 %v2213
    %v2246 = vunpack.c.l.b16 %v2214
    %v2247 = vpack.c.b16 %v2232, %v2231
    %v2248 = vpack.c.b16 %v2234, %v2233
    %v2249 = vpack.c.b16 %v2236, %v2235
    %v2250 = vpack.c.b16 %v2238, %v2237
    %v2251 = vpack.c.b16 %v2240, %v2239
    %v2252 = vpack.c.b16 %v2242, %v2241
    %v2253 = vpack.c.b16 %v2244, %v2243
    %v2254 = vpack.c.b16 %v2246, %v2245
    %2263 = vmatpush.bf16.msra.mxu0 %v2254
    %2264 = vmatpush.bf16.msra.mxu0 %v2253
    %2265 = vmatpush.bf16.msra.mxu0 %v2252
    %2266 = vmatpush.bf16.msra.mxu0 %v2251
    %2267 = vmatpush.bf16.msra.mxu0 %v2250
    %2268 = vmatpush.bf16.msra.mxu0 %v2249
    %2269 = vmatpush.bf16.msra.mxu0 %v2248
    %2270 = vmatpush.bf16.msra.mxu0 %v2247
    %2271 = vmatmul.bf16.gmra.mxu0 %v2198
    %v2272 = vpop.f32.mrf.mxu0
    %v2273 = vadd.f32 0.0, %v2272
    %v2274 = vpop.f32.mrf.mxu0
    %2275 = vdwg.mxu0
    %v2276 = vmul.f32 %v2273, 0.00048828125
    %v2277 = vmul.f32 %v2276, %v2276
    %v2279 = vrot.slane %v2277, 7
    %v2281 = vsub.f32 %v2276, %v2279
    %v2282 = vmax.f32 %v2281, 0.0
    %v2283 = vperm.slane %v2276, 0
    %v2284 = vsub.f32 %v2166, %v2283
    %v2285 = vsub.f32 %v2168, %v2283
    %v2286 = vsub.f32 %v2171, %v2283
    %v2287 = vsub.f32 %v2173, %v2283
    %v2288 = vadd.f32 %v2282, 1e-05
    %v2289 = vrsqrt.pop %v2288
    %v2290 = vmul.f32 %v2289, %v2288
    %v2291 = vmul.f32 %v2290, %v2289
    %v2292 = vmul.f32 0.5, %v2291
    %v2293 = vsub.f32 1.5, %v2292
    %v2294 = vmul.f32 %v2289, %v2293
    %vm2295 = vweird.f32 %v2288
    %vm2296 = vweird.f32 %v2289
    %vm2297 = vmor %vm2295, %vm2296
    %v2298 = vsel %vm2297, %v2289, %v2294
    %v2299 = vperm.slane %v2298, 1
    %v2300 = vmul.f32 %v2284, %v2299
    %v2301 = vmul.f32 %v2285, %v2299
    %v2302 = vmul.f32 %v2286, %v2299
    %v2303 = vmul.f32 %v2287, %v2299
    %v2304 = vld [vmem:[%s22] sm:$0x1]
    %v2306 = vperm.slane %v2304, 0
    %v2308 = vmul.f32 %v2300, %v2306
    %v2309 = vmul.f32 %v2301, %v2306
    %v2310 = vmul.f32 %v2302, %v2306
    %v2311 = vmul.f32 %v2303, %v2306
    %v2312 = vld [vmem:[%s27] sm:$0x1]
    %v2314 = vperm.slane %v2312, 0
    %v2316 = vadd.f32 %v2308, %v2314
    %v2317 = vadd.f32 %v2309, %v2314
    %v2318 = vadd.f32 %v2310, %v2314
    %v2319 = vadd.f32 %v2311, %v2314
    %v2320 = vmax.f32 %v2316, 0.0
    %v2321 = vmax.f32 %v2317, 0.0
    %v2322 = vmax.f32 %v2318, 0.0
    %v2323 = vmax.f32 %v2319, 0.0
    %v2324 = vpack.c.bf16 %v2321, %v2320
    %v2325 = vpack.c.bf16 %v2323, %v2322
    %v2326 = vld [vmem:[#allocation10] sm:$0xff]
    %v2327 = vld [vmem:[#allocation10 + $0x8] sm:$0xff]
    %v2328 = vld [vmem:[#allocation10 + $0x10] sm:$0xff]
    %v2329 = vld [vmem:[#allocation10 + $0x18] sm:$0xff]
    %v2330 = vld [vmem:[#allocation10 + $0x20] sm:$0xff]
    %v2331 = vld [vmem:[#allocation10 + $0x28] sm:$0xff]
    %v2332 = vld [vmem:[#allocation10 + $0x30] sm:$0xff]
    %v2333 = vld [vmem:[#allocation10 + $0x38] sm:$0xff]
    %v2334 = vld [vmem:[#allocation10 + $0x40] sm:$0xff]
    %v2335 = vld [vmem:[#allocation10 + $0x48] sm:$0xff]
    %v2336 = vld [vmem:[#allocation10 + $0x50] sm:$0xff]
    %v2337 = vld [vmem:[#allocation10 + $0x58] sm:$0xff]
    %v2338 = vld [vmem:[#allocation10 + $0x60] sm:$0xff]
    %v2339 = vld [vmem:[#allocation10 + $0x68] sm:$0xff]
    %v2340 = vld [vmem:[#allocation10 + $0x70] sm:$0xff]
    %v2341 = vld [vmem:[#allocation10 + $0x78] sm:$0xff]
    %v2342 = vld [vmem:[#allocation10 + $0x80] sm:$0xff]
    %v2343 = vld [vmem:[#allocation10 + $0x88] sm:$0xff]
    %v2344 = vld [vmem:[#allocation10 + $0x90] sm:$0xff]
    %v2345 = vld [vmem:[#allocation10 + $0x98] sm:$0xff]
    %v2346 = vld [vmem:[#allocation10 + $0xa0] sm:$0xff]
    %v2347 = vld [vmem:[#allocation10 + $0xa8] sm:$0xff]
    %v2348 = vld [vmem:[#allocation10 + $0xb0] sm:$0xff]
    %v2349 = vld [vmem:[#allocation10 + $0xb8] sm:$0xff]
    %v2350 = vld [vmem:[#allocation10 + $0xc0] sm:$0xff]
    %v2351 = vld [vmem:[#allocation10 + $0xc8] sm:$0xff]
    %v2352 = vld [vmem:[#allocation10 + $0xd0] sm:$0xff]
    %v2353 = vld [vmem:[#allocation10 + $0xd8] sm:$0xff]
    %v2354 = vld [vmem:[#allocation10 + $0xe0] sm:$0xff]
    %v2355 = vld [vmem:[#allocation10 + $0xe8] sm:$0xff]
    %v2356 = vld [vmem:[#allocation10 + $0xf0] sm:$0xff]
    %v2357 = vld [vmem:[#allocation10 + $0xf8] sm:$0xff]
    %v2390 = vunpack.c.l.b16 %v2326
    %v2391 = vunpack.c.h.b16 %v2326
    %v2392 = vunpack.c.l.b16 %v2327
    %v2393 = vunpack.c.h.b16 %v2327
    %v2394 = vunpack.c.l.b16 %v2328
    %v2395 = vunpack.c.h.b16 %v2328
    %v2396 = vunpack.c.l.b16 %v2329
    %v2397 = vunpack.c.h.b16 %v2329
    %v2398 = vunpack.c.l.b16 %v2330
    %v2399 = vunpack.c.h.b16 %v2330
    %v2400 = vunpack.c.l.b16 %v2331
    %v2401 = vunpack.c.h.b16 %v2331
    %v2402 = vunpack.c.l.b16 %v2332
    %v2403 = vunpack.c.h.b16 %v2332
    %v2404 = vunpack.c.l.b16 %v2333
    %v2405 = vunpack.c.h.b16 %v2333
    %v2406 = vunpack.c.l.b16 %v2334
    %v2407 = vunpack.c.h.b16 %v2334
    %v2408 = vunpack.c.l.b16 %v2335
    %v2409 = vunpack.c.h.b16 %v2335
    %v2410 = vunpack.c.l.b16 %v2336
    %v2411 = vunpack.c.h.b16 %v2336
    %v2412 = vunpack.c.l.b16 %v2337
    %v2413 = vunpack.c.h.b16 %v2337
    %v2414 = vunpack.c.l.b16 %v2338
    %v2415 = vunpack.c.h.b16 %v2338
    %v2416 = vunpack.c.l.b16 %v2339
    %v2417 = vunpack.c.h.b16 %v2339
    %v2418 = vunpack.c.l.b16 %v2340
    %v2419 = vunpack.c.h.b16 %v2340
    %v2420 = vunpack.c.l.b16 %v2341
    %v2421 = vunpack.c.h.b16 %v2341
    %v2422 = vunpack.c.l.b16 %v2342
    %v2423 = vunpack.c.h.b16 %v2342
    %v2424 = vunpack.c.l.b16 %v2343
    %v2425 = vunpack.c.h.b16 %v2343
    %v2426 = vunpack.c.l.b16 %v2344
    %v2427 = vunpack.c.h.b16 %v2344
    %v2428 = vunpack.c.l.b16 %v2345
    %v2429 = vunpack.c.h.b16 %v2345
    %v2430 = vunpack.c.l.b16 %v2346
    %v2431 = vunpack.c.h.b16 %v2346
    %v2432 = vunpack.c.l.b16 %v2347
    %v2433 = vunpack.c.h.b16 %v2347
    %v2434 = vunpack.c.l.b16 %v2348
    %v2435 = vunpack.c.h.b16 %v2348
    %v2436 = vunpack.c.l.b16 %v2349
    %v2437 = vunpack.c.h.b16 %v2349
    %v2438 = vunpack.c.l.b16 %v2350
    %v2439 = vunpack.c.h.b16 %v2350
    %v2440 = vunpack.c.l.b16 %v2351
    %v2441 = vunpack.c.h.b16 %v2351
    %v2442 = vunpack.c.l.b16 %v2352
    %v2443 = vunpack.c.h.b16 %v2352
    %v2444 = vunpack.c.l.b16 %v2353
    %v2445 = vunpack.c.h.b16 %v2353
    %v2446 = vunpack.c.l.b16 %v2354
    %v2447 = vunpack.c.h.b16 %v2354
    %v2448 = vunpack.c.l.b16 %v2355
    %v2449 = vunpack.c.h.b16 %v2355
    %v2450 = vunpack.c.l.b16 %v2356
    %v2451 = vunpack.c.h.b16 %v2356
    %v2452 = vunpack.c.l.b16 %v2357
    %v2453 = vunpack.c.h.b16 %v2357
    %v2454 = vpack.c.b16 %v2394, %v2390
    %v2455 = vpack.c.b16 %v2395, %v2391
    %v2456 = vpack.c.b16 %v2396, %v2392
    %v2457 = vpack.c.b16 %v2397, %v2393
    %v2458 = vpack.c.b16 %v2402, %v2398
    %v2459 = vpack.c.b16 %v2403, %v2399
    %v2460 = vpack.c.b16 %v2404, %v2400
    %v2461 = vpack.c.b16 %v2405, %v2401
    %v2462 = vpack.c.b16 %v2410, %v2406
    %v2463 = vpack.c.b16 %v2411, %v2407
    %v2464 = vpack.c.b16 %v2412, %v2408
    %v2465 = vpack.c.b16 %v2413, %v2409
    %v2466 = vpack.c.b16 %v2418, %v2414
    %v2467 = vpack.c.b16 %v2419, %v2415
    %v2468 = vpack.c.b16 %v2420, %v2416
    %v2469 = vpack.c.b16 %v2421, %v2417
    %v2470 = vpack.c.b16 %v2426, %v2422
    %v2471 = vpack.c.b16 %v2427, %v2423
    %v2472 = vpack.c.b16 %v2428, %v2424
    %v2473 = vpack.c.b16 %v2429, %v2425
    %v2474 = vpack.c.b16 %v2434, %v2430
    %v2475 = vpack.c.b16 %v2435, %v2431
    %v2476 = vpack.c.b16 %v2436, %v2432
    %v2477 = vpack.c.b16 %v2437, %v2433
    %v2478 = vpack.c.b16 %v2442, %v2438
    %v2479 = vpack.c.b16 %v2443, %v2439
    %v2480 = vpack.c.b16 %v2444, %v2440
    %v2481 = vpack.c.b16 %v2445, %v2441
    %v2482 = vpack.c.b16 %v2450, %v2446
    %v2483 = vpack.c.b16 %v2451, %v2447
    %v2484 = vpack.c.b16 %v2452, %v2448
    %v2485 = vpack.c.b16 %v2453, %v2449
    %2518 = vmatpush.bf16.msra.mxu0 %v2482
    %2519 = vmatpush.bf16.msra.mxu0 %v2478
    %2520 = vmatpush.bf16.msra.mxu0 %v2474
    %2521 = vmatpush.bf16.msra.mxu0 %v2470
    %2522 = vmatpush.bf16.msra.mxu0 %v2466
    %2523 = vmatpush.bf16.msra.mxu0 %v2462
    %2524 = vmatpush.bf16.msra.mxu0 %v2458
    %2525 = vmatpush.bf16.msra.mxu0 %v2454
    %2526 = vmatmul.bf16.gmra.mxu0 %v2324
    %v2527 = vpop.f32.mrf.mxu0
    %v2528 = vadd.f32 0.0, %v2527
    %v2529 = vpop.f32.mrf.mxu0
    %v2530 = vadd.f32 0.0, %v2529
    %2531 = vmatmul.bf16.gmra.mxu0 %v2325
    %v2532 = vpop.f32.mrf.mxu0
    %v2533 = vadd.f32 0.0, %v2532
    %v2534 = vpop.f32.mrf.mxu0
    %v2535 = vadd.f32 0.0, %v2534
    %2536 = vdwg.mxu0
    %2537 = vmatpush.bf16.msra.mxu0 %v2483
    %2538 = vmatpush.bf16.msra.mxu0 %v2479
    %2539 = vmatpush.bf16.msra.mxu0 %v2475
    %2540 = vmatpush.bf16.msra.mxu0 %v2471
    %2541 = vmatpush.bf16.msra.mxu0 %v2467
    %2542 = vmatpush.bf16.msra.mxu0 %v2463
    %2543 = vmatpush.bf16.msra.mxu0 %v2459
    %2544 = vmatpush.bf16.msra.mxu0 %v2455
    %2545 = vmatmul.bf16.gmra.mxu0 %v2324
    %v2546 = vpop.f32.mrf.mxu0
    %v2547 = vadd.f32 0.0, %v2546
    %v2548 = vpop.f32.mrf.mxu0
    %v2549 = vadd.f32 0.0, %v2548
    %2550 = vmatmul.bf16.gmra.mxu0 %v2325
    %v2551 = vpop.f32.mrf.mxu0
    %v2552 = vadd.f32 0.0, %v2551
    %v2553 = vpop.f32.mrf.mxu0
    %v2554 = vadd.f32 0.0, %v2553
    %2555 = vdwg.mxu0
    %2556 = vmatpush.bf16.msra.mxu0 %v2484
    %2557 = vmatpush.bf16.msra.mxu0 %v2480
    %2558 = vmatpush.bf16.msra.mxu0 %v2476
    %2559 = vmatpush.bf16.msra.mxu0 %v2472
    %2560 = vmatpush.bf16.msra.mxu0 %v2468
    %2561 = vmatpush.bf16.msra.mxu0 %v2464
    %2562 = vmatpush.bf16.msra.mxu0 %v2460
    %2563 = vmatpush.bf16.msra.mxu0 %v2456
    %2564 = vmatmul.bf16.gmra.mxu0 %v2324
    %v2565 = vpop.f32.mrf.mxu0
    %v2566 = vadd.f32 0.0, %v2565
    %v2567 = vpop.f32.mrf.mxu0
    %v2568 = vadd.f32 0.0, %v2567
    %2569 = vmatmul.bf16.gmra.mxu0 %v2325
    %v2570 = vpop.f32.mrf.mxu0
    %v2571 = vadd.f32 0.0, %v2570
    %v2572 = vpop.f32.mrf.mxu0
    %v2573 = vadd.f32 0.0, %v2572
    %2574 = vdwg.mxu0
    %2575 = vmatpush.bf16.msra.mxu0 %v2485
    %2576 = vmatpush.bf16.msra.mxu0 %v2481
    %2577 = vmatpush.bf16.msra.mxu0 %v2477
    %2578 = vmatpush.bf16.msra.mxu0 %v2473
    %2579 = vmatpush.bf16.msra.mxu0 %v2469
    %2580 = vmatpush.bf16.msra.mxu0 %v2465
    %2581 = vmatpush.bf16.msra.mxu0 %v2461
    %2582 = vmatpush.bf16.msra.mxu0 %v2457
    %2583 = vmatmul.bf16.gmra.mxu0 %v2324
    %v2584 = vpop.f32.mrf.mxu0
    %v2585 = vadd.f32 0.0, %v2584
    %v2586 = vpop.f32.mrf.mxu0
    %v2587 = vadd.f32 0.0, %v2586
    %2588 = vmatmul.bf16.gmra.mxu0 %v2325
    %v2589 = vpop.f32.mrf.mxu0
    %v2590 = vadd.f32 0.0, %v2589
    %v2591 = vpop.f32.mrf.mxu0
    %v2592 = vadd.f32 0.0, %v2591
    %2593 = vdwg.mxu0
    %v2594 = vpack.c.bf16 %v2530, %v2528
    %v2595 = vpack.c.bf16 %v2535, %v2533
    %v2596 = vpack.c.bf16 %v2549, %v2547
    %v2597 = vpack.c.bf16 %v2554, %v2552
    %v2598 = vpack.c.bf16 %v2568, %v2566
    %v2599 = vpack.c.bf16 %v2573, %v2571
    %v2600 = vpack.c.bf16 %v2587, %v2585
    %v2601 = vpack.c.bf16 %v2592, %v2590
    %v2602 = vld [vmem:[#allocation15] sm:$0xf]
    %v2603 = vld [vmem:[#allocation15 + $0x4] sm:$0xf]
    %v2604 = vld [vmem:[#allocation15 + $0x8] sm:$0xf]
    %v2605 = vld [vmem:[#allocation15 + $0xc] sm:$0xf]
    %v2606 = vld [vmem:[#allocation15 + $0x10] sm:$0xf]
    %v2607 = vld [vmem:[#allocation15 + $0x14] sm:$0xf]
    %v2608 = vld [vmem:[#allocation15 + $0x18] sm:$0xf]
    %v2609 = vld [vmem:[#allocation15 + $0x1c] sm:$0xf]
    %v2618 = vunpack.c.l.b16 %v2602
    %v2619 = vunpack.c.l.b16 %v2603
    %v2620 = vunpack.c.l.b16 %v2604
    %v2621 = vunpack.c.l.b16 %v2605
    %v2622 = vunpack.c.l.b16 %v2606
    %v2623 = vunpack.c.l.b16 %v2607
    %v2624 = vunpack.c.l.b16 %v2608
    %v2625 = vunpack.c.l.b16 %v2609
    %v2626 = vpack.c.b16 %v2619, %v2618
    %v2627 = vpack.c.b16 %v2621, %v2620
    %v2628 = vpack.c.b16 %v2623, %v2622
    %v2629 = vpack.c.b16 %v2625, %v2624
    %2634 = vmatpush.bf16.msra.mxu0 %v2601
    %2635 = vmatpush.bf16.msra.mxu0 %v2600
    %2636 = vmatpush.bf16.msra.mxu0 %v2599
    %2637 = vmatpush.bf16.msra.mxu0 %v2598
    %2638 = vmatpush.bf16.msra.mxu0 %v2597
    %2639 = vmatpush.bf16.msra.mxu0 %v2596
    %2640 = vmatpush.bf16.msra.mxu0 %v2595
    %2641 = vmatpush.bf16.msra.mxu0 %v2594
    %2642 = vmatmul.bf16.gmra.mxu0 %v2626
    %v2643 = vpop.f32.mrf.mxu0
    %v2644 = vadd.f32 0.0, %v2643
    %v2645 = vpop.f32.mrf.mxu0
    %v2646 = vadd.f32 0.0, %v2645
    %2647 = vmatmul.bf16.gmra.mxu0 %v2627
    %v2648 = vpop.f32.mrf.mxu0
    %v2649 = vadd.f32 0.0, %v2648
    %v2650 = vpop.f32.mrf.mxu0
    %v2651 = vadd.f32 0.0, %v2650
    %2652 = vmatmul.bf16.gmra.mxu0 %v2628
    %v2653 = vpop.f32.mrf.mxu0
    %v2654 = vadd.f32 0.0, %v2653
    %v2655 = vpop.f32.mrf.mxu0
    %v2656 = vadd.f32 0.0, %v2655
    %2657 = vmatmul.bf16.gmra.mxu0 %v2629
    %v2658 = vpop.f32.mrf.mxu0
    %v2659 = vadd.f32 0.0, %v2658
    %v2660 = vpop.f32.mrf.mxu0
    %v2661 = vadd.f32 0.0, %v2660
    %2662 = vdwg.mxu0
    %v2663 = vtanh.pop %v2644
    %v2664 = vtanh.pop %v2646
    %v2665 = vtanh.pop %v2649
    %v2666 = vtanh.pop %v2651
    %v2667 = vtanh.pop %v2654
    %v2668 = vtanh.pop %v2656
    %v2669 = vtanh.pop %v2659
    %v2670 = vtanh.pop %v2661
    %2671 = vst [vmem:[%s28] sm:$0xff] %v2663
    %2672 = vst [vmem:[%s28 + $0x8] sm:$0xff] %v2664
    %2673 = vst [vmem:[%s28 + $0x10] sm:$0xff] %v2665
    %2674 = vst [vmem:[%s28 + $0x18] sm:$0xff] %v2666
    %2675 = vst [vmem:[%s28 + $0x20] sm:$0xff] %v2667
    %2676 = vst [vmem:[%s28 + $0x28] sm:$0xff] %v2668
    %2677 = vst [vmem:[%s28 + $0x30] sm:$0xff] %v2669
    %2678 = vst [vmem:[%s28 + $0x38] sm:$0xff] %v2670
    // Predicated region
    $region170: #{forward.1} parent=1 // pred_check
      _
    $region171: #{forward.1} parent=1 // pred_check_branch
      %2680 = sbr.rel (0) target = $region173
    $region172: #{forward.1} parent=1 // pred_region
      _
    $region173: #{forward.1} parent=1 // pred_fallthru
      _
    // Predicated region
    $region174: #{forward.1} parent=1 // pred_check
      _
    $region175: #{forward.1} parent=1 // pred_check_branch
      %2682 = sbr.rel (0) target = $region177
    $region176: #{forward.1} parent=1 // pred_region
      _
    $region177: #{forward.1} parent=1 // pred_fallthru
      _
    %2683 = vsyncpa [#allocation3], 1
    %2684 = vsyncpa [#allocation5], 1
    %2685 = vsyncpa [#allocation8], 1
    %2686 = vsyncpa [#allocation11], 1
    %2687 = vsyncpa [#allocation14], 1
    %2688 = vsyncpa [#allocation17], 1
    %2689 = vsyncpa [#allocation20], 1
    %2690 = vsyncpa [#allocation23], 1

</llo_original>
